<compile_context>
chip_gen: v5e
topology: v5e:2x2
jax: 0.10.0
libtpu: 0.0.40
codegen_flags: <defaults>
</compile_context>

<pallas_src>
import functools

import jax
import jax.numpy as jnp
from jax.experimental import pallas as pl
from jax.experimental.pallas import tpu as pltpu


# ------------------------------ fused kernel -------------------------------

def _net_kernel(x_ref, wb1_ref, wb2_ref, wfc1_ref, wfc23_ref, bias_ref,
                o_ref, s1_ref, p1_ref,
                *, r_a1, r_lm1, r_a2, r_lm2):
    f32 = jnp.float32
    bp = o_ref.shape[0]

    # ---- conv1 + bias + ReLU: 5 banded matmuls over row (height) shifts ----
    # x rows = b*32 + h, lanes = w*4 + c ; out lanes = ow*8 + oc (256 wide)
    acc1 = jnp.zeros((r_a1, 256), f32)
    for kh in range(5):
        acc1 = acc1 + jnp.dot(x_ref[pl.ds(kh, r_a1), :], wb1_ref[kh],
                              preferred_element_type=f32)
    s1_ref[...] = jnp.maximum(acc1 + bias_ref[0:1, :], 0.0)

    # ---- pool1 (2x2, stride 2): row-pair max + lane-pair max --------------
    # valid pooled values end up at rows b*32 + 2*ph, lanes 16*pw + oc
    rm1 = jnp.maximum(s1_ref[pl.ds(0, r_lm1), :], s1_ref[pl.ds(1, r_lm1), :])
    p1_ref[...] = jnp.maximum(rm1, pltpu.roll(rm1, 256 - 8, axis=1))

    # ---- conv2 + bias + ReLU: banded matmuls, row shift folded to 2*kh ----
    # valid out at rows b*32 + 2*oh2, lanes 16*ow2 + oc2 (256 wide)
    acc2 = jnp.zeros((r_a2, 256), f32)
    for kh in range(5):
        acc2 = acc2 + jnp.dot(p1_ref[pl.ds(2 * kh, r_a2), :], wb2_ref[kh],
                              preferred_element_type=f32)
    a2 = jnp.maximum(acc2 + bias_ref[1:2, :], 0.0)

    # ---- pool2 from the live value (no scratch round-trip) ----------------
    # valid at rows b*32 + 4*h, lanes 32*w + c
    rm2 = jnp.maximum(a2[0:r_lm2, :], a2[2:2 + r_lm2, :])
    p2 = jnp.maximum(rm2, pltpu.roll(rm2, 256 - 16, axis=1))      # (r_lm2, 256)

    # ---- flatten gather: in-kernel iota selection (no HBM sel operand) ----
    # sel_h[b, r] = 1 iff r == b*32 + 4*h; padded batch rows (b >= B) select
    # nothing and therefore stay exactly zero.
    r_idx = jax.lax.broadcasted_iota(jnp.int32, (bp, r_lm2), 1)
    b_idx = jax.lax.broadcasted_iota(jnp.int32, (bp, r_lm2), 0)
    groups = []
    for h in range(5):
        sel_h = (r_idx == b_idx * 32 + 4 * h).astype(f32)         # (bp, r_lm2)
        groups.append(jnp.dot(sel_h, p2, preferred_element_type=f32))
    flat = jnp.concatenate(groups, axis=1)                        # (bp, 1280)

    # ---- fc1 (single long-K GEMM), fc2 + ReLU, fc3 (no ReLU) --------------
    z = jnp.maximum(jnp.dot(flat, wfc1_ref[...], preferred_element_type=f32)
                    + bias_ref[2:3, 0:128], 0.0)
    z = jnp.maximum(jnp.dot(z, wfc23_ref[0], preferred_element_type=f32)
                    + bias_ref[3:4, 0:128], 0.0)
    o_ref[...] = (jnp.dot(z, wfc23_ref[1], preferred_element_type=f32)
                  + bias_ref[4:5, 0:128])


# ------------------------ one-time parameter packing ------------------------

def _conv_band_matrices(w, c_in_p, oc_p, w_grid):
    """w: (OC, C, 5, 5) -> (5, w_grid*c_in_p, w_grid*oc_p) banded GEMM weights.

    band[kh, wi*c_in_p + c, wo*oc_p + oc] = w[oc, c, kh, kw]  iff  wi == wo + kw.
    Rows with c >= C and columns with oc >= OC stay zero (this neutralizes the
    pool-roll wraparound and channel-padding garbage lanes — keep them zero).
    """
    oc, c_in, kh_sz, kw_sz = w.shape
    bands = []
    for kh in range(kh_sz):
        m = jnp.zeros((w_grid * c_in_p, w_grid * oc_p), jnp.float32)
        for kw in range(kw_sz):
            blk = jnp.zeros((c_in_p, oc_p), jnp.float32)
            blk = blk.at[:c_in, :oc].set(w[:, :, kh, kw].T)
            m = m + jnp.kron(jnp.eye(w_grid, k=-kw, dtype=jnp.float32), blk)
        bands.append(m)
    return jnp.stack(bands)


def pack_params(params):
    """Pack PyTorch-layout weights into MXU-friendly operands.

    Call ONCE at model-load time; the packed arrays are reused by every
    net_forward call (removes ~100 tiny XLA glue ops from the hot path).
    """
    wb1 = _conv_band_matrices(params["conv1_w"], 4, 8, 32)        # (5, 128, 256)
    wb2 = _conv_band_matrices(params["conv2_w"], 16, 16, 16)      # (5, 256, 256)

    # fc1 weights: permute columns from PyTorch (c,h,w) flatten order to the
    # pool2 lane layout (lane = 32*w + c), split per h, pad, flatten K to 1280.
    t = params["fc1_w"].reshape(120, 16, 5, 5)                    # (j, c, h, w)
    t = jnp.transpose(t, (2, 3, 1, 0))                            # (h, w, c, j)
    t = jnp.pad(t, ((0, 0), (0, 0), (0, 16), (0, 8))).reshape(5, 160, 128)
    wfc1 = jnp.pad(t, ((0, 0), (0, 96), (0, 0))).reshape(1280, 128)

    wfc23 = jnp.stack([
        jnp.pad(params["fc2_w"].T, ((0, 8), (0, 44))),            # (128, 128)
        jnp.pad(params["fc3_w"].T, ((0, 44), (0, 118))),          # (128, 128)
    ])                                                            # (2, 128, 128)

    bias = jnp.zeros((8, 256), jnp.float32)
    bias = bias.at[0].set(jnp.tile(jnp.pad(params["conv1_b"], (0, 2)), 32))
    bias = bias.at[1].set(jnp.tile(params["conv2_b"], 16))
    bias = bias.at[2, :128].set(jnp.pad(params["fc1_b"], (0, 8)))
    bias = bias.at[3, :128].set(jnp.pad(params["fc2_b"], (0, 44)))
    bias = bias.at[4, :128].set(jnp.pad(params["fc3_b"], (0, 118)))

    # NOTE: on v6e/v7x these could be stored as bf16 (halves weight DMA and
    # matches the MXU), but bf16 exceeds this test's 2e-3 tolerance budget,
    # so f32 is kept here.
    return {"wb1": wb1, "wb2": wb2, "wfc1": wfc1, "wfc23": wfc23, "bias": bias}


def _pack_input(x_nchw, c_in_p=4):
    b = x_nchw.shape[0]
    x = jnp.transpose(x_nchw, (0, 2, 3, 1))                              # NHWC
    x = jnp.pad(x, ((0, 0), (0, 0), (0, 0), (0, c_in_p - x.shape[3])))   # C 3->4
    x = x.reshape(b * 32, 32 * c_in_p)                                   # (B*32, 128)
    return jnp.pad(x, ((0, 32), (0, 0)))                                 # zero pad rows


@jax.jit
def net_forward(x_nchw, packed):
    B, C, H, W = x_nchw.shape
    assert (C, H, W) == (3, 32, 32), "CIFAR-10 geometry required by fc1 (16*5*5)"
    Bp = ((B + 7) // 8) * 8
    R_x, R_a1, R_lm1, R_a2, R_lm2 = (B * 32 + 32, B * 32 + 24, B * 32 + 16,
                                     B * 32 + 8, B * 32)

    x2d = _pack_input(x_nchw)
    kernel = functools.partial(_net_kernel, r_a1=R_a1, r_lm1=R_lm1,
                               r_a2=R_a2, r_lm2=R_lm2)

    flops = 2 * (R_a1 * 640 * 256 + R_a2 * 1280 * 256
                 + 5 * Bp * R_lm2 * 256 + Bp * 1280 * 128 + 2 * Bp * 128 * 128)
    bytes_accessed = 4 * (R_x * 128 + 5 * 128 * 256 + 5 * 256 * 256
                          + 1280 * 128 + 2 * 128 * 128 + 8 * 256 + Bp * 128)

    # NOTE: for large batches, tile the row (M) dimension over a grid marked
    # "parallel" (shards across v7x's 2 TensorCores) and size the M-tile so
    # scratches + buffered weights stay under ~32 MiB of scoped VMEM.
    out = pl.pallas_call(
        kernel,
        out_shape=jax.ShapeDtypeStruct((Bp, 128), jnp.float32),
        grid=(1,),
        in_specs=[
            pl.BlockSpec((R_x, 128), lambda i: (0, 0)),          # packed image
            pl.BlockSpec((5, 128, 256), lambda i: (0, 0, 0)),    # conv1 bands
            pl.BlockSpec((5, 256, 256), lambda i: (0, 0, 0)),    # conv2 bands
            pl.BlockSpec((1280, 128), lambda i: (0, 0)),         # fc1 (flattened K)
            pl.BlockSpec((2, 128, 128), lambda i: (0, 0, 0)),    # fc2 / fc3
            pl.BlockSpec((8, 256), lambda i: (0, 0)),            # packed biases
        ],
        out_specs=pl.BlockSpec((Bp, 128), lambda i: (0, 0)),
        scratch_shapes=[
            pltpu.VMEM((R_a1, 256), jnp.float32),                # conv1 activations
            pltpu.VMEM((R_lm1, 256), jnp.float32),               # pool1 result
        ],
        compiler_params=pltpu.CompilerParams(dimension_semantics=("arbitrary",)),
        cost_estimate=pl.CostEstimate(flops=flops, transcendentals=0,
                                      bytes_accessed=bytes_accessed),
    )(x2d, packed["wb1"], packed["wb2"], packed["wfc1"], packed["wfc23"],
      packed["bias"])
    return out[:B, :10]


# ------------------------------ reference (pure JAX) ------------------------

def _reference_forward(x, p):
    dn = ("NCHW", "OIHW", "NCHW")
    y = jax.lax.conv_general_dilated(x, p["conv1_w"], (1, 1), "VALID",
                                     dimension_numbers=dn)
    y = jax.nn.relu(y + p["conv1_b"][None, :, None, None])
    y = jax.lax.reduce_window(y, -jnp.inf, jax.lax.max, (1, 1, 2, 2),
                              (1, 1, 2, 2), "VALID")
    y = jax.lax.conv_general_dilated(y, p["conv2_w"], (1, 1), "VALID",
                                     dimension_numbers=dn)
    y = jax.nn.relu(y + p["conv2_b"][None, :, None, None])
    y = jax.lax.reduce_window(y, -jnp.inf, jax.lax.max, (1, 1, 2, 2),
                              (1, 1, 2, 2), "VALID")
    y = y.reshape(y.shape[0], -1)
    y = jax.nn.relu(y @ p["fc1_w"].T + p["fc1_b"])
    y = jax.nn.relu(y @ p["fc2_w"].T + p["fc2_b"])
    return y @ p["fc3_w"].T + p["fc3_b"]


def init_params(key):
    """Deterministic synthetic parameters with PyTorch-convention shapes."""
    ks = jax.random.split(key, 10)
    def normal(k, shape, scale):
        return scale * jax.random.normal(k, shape, dtype=jnp.float32)
    return {
        "conv1_w": normal(ks[0], (6, 3, 5, 5), 0.1),
        "conv1_b": normal(ks[1], (6,), 0.1),
        "conv2_w": normal(ks[2], (16, 6, 5, 5), 0.1),
        "conv2_b": normal(ks[3], (16,), 0.1),
        "fc1_w": normal(ks[4], (120, 400), 0.05),
        "fc1_b": normal(ks[5], (120,), 0.05),
        "fc2_w": normal(ks[6], (84, 120), 0.05),
        "fc2_b": normal(ks[7], (84,), 0.05),
        "fc3_w": normal(ks[8], (10, 84), 0.05),
        "fc3_b": normal(ks[9], (10,), 0.05),
    }


if __name__ == "__main__":
    key = jax.random.PRNGKey(0)
    k_x, k_p = jax.random.split(key)
    # CIFAR-10 geometry is required by fc1 (16*5*5): 3x32x32, small batch of 2.
    x = jax.random.normal(k_x, (2, 3, 32, 32), dtype=jnp.float32)
    params = init_params(k_p)

    packed = pack_params(params)            # one-time, out of the per-call path

    out = jax.block_until_ready(net_forward(x, packed))
    assert out.shape == (2, 10)

    ref = jax.block_until_ready(_reference_forward(x, params))
    assert jnp.allclose(out, ref, atol=2e-3, rtol=2e-3), \
        float(jnp.max(jnp.abs(out - ref)))

    print("KERNEL_OK")
</pallas_src>

<mosaic_0001>
module attributes {stable_mosaic.version = 11 : i64} {
  func.func @_net_kernel(%arg0: i32, %arg1: memref<96x128xf32, #tpu.memory_space<vmem>>, %arg2: memref<5x128x256xf32, #tpu.memory_space<vmem>>, %arg3: memref<5x256x256xf32, #tpu.memory_space<vmem>>, %arg4: memref<1280x128xf32, #tpu.memory_space<vmem>>, %arg5: memref<2x128x128xf32, #tpu.memory_space<vmem>>, %arg6: memref<8x256xf32, #tpu.memory_space<vmem>>, %arg7: memref<8x128xf32, #tpu.memory_space<vmem>>, %arg8: memref<88x256xf32, #tpu.memory_space<vmem>>, %arg9: memref<80x256xf32, #tpu.memory_space<vmem>>) attributes {dimension_semantics = [#tpu.dimension_semantics<arbitrary>], iteration_bounds = array<i64: 1>, scalar_prefetch = 0 : i64, scratch_operands = 2 : i64, tpu.core_type = #tpu.core_type<tc>, window_params = [{pipeline_mode = #tpu.pipeline_mode<synchronous>, transform_indices = @transform_0, window_bounds = array<i64: 96, 128>}, {pipeline_mode = #tpu.pipeline_mode<synchronous>, transform_indices = @transform_1, window_bounds = array<i64: 5, 128, 256>}, {pipeline_mode = #tpu.pipeline_mode<synchronous>, transform_indices = @transform_2, window_bounds = array<i64: 5, 256, 256>}, {pipeline_mode = #tpu.pipeline_mode<synchronous>, transform_indices = @transform_3, window_bounds = array<i64: 1280, 128>}, {pipeline_mode = #tpu.pipeline_mode<synchronous>, transform_indices = @transform_4, window_bounds = array<i64: 2, 128, 128>}, {pipeline_mode = #tpu.pipeline_mode<synchronous>, transform_indices = @transform_5, window_bounds = array<i64: 8, 256>}, {pipeline_mode = #tpu.pipeline_mode<synchronous>, transform_indices = @transform_6, window_bounds = array<i64: 8, 128>}]} {
    %cst = arith.constant 0.000000e+00 : f32
    %0 = vector.broadcast %cst : f32 to vector<88x256xf32>
    %c0 = arith.constant 0 : index
    %c0_0 = arith.constant 0 : index
    %1 = vector.load %arg1[%c0, %c0_0] : memref<96x128xf32, #tpu.memory_space<vmem>>, vector<88x128xf32>
    %c0_1 = arith.constant 0 : index
    %c0_2 = arith.constant 0 : index
    %c0_3 = arith.constant 0 : index
    %2 = vector.load %arg2[%c0_1, %c0_2, %c0_3] : memref<5x128x256xf32, #tpu.memory_space<vmem>>, vector<1x128x256xf32>
    %3 = vector.shape_cast %2 : vector<1x128x256xf32> to vector<128x256xf32>
    %cst_4 = arith.constant dense<0.000000e+00> : vector<88x256xf32>
    %4 = tpu.matmul %1, %3, %cst_4 {dimension_numbers = #tpu.dot_dimension_numbers<[1], [0], [0], [1], [0, 0, 1, 1], [], []>} : vector<88x128xf32>, vector<128x256xf32>, vector<88x256xf32> -> vector<88x256xf32>
    %5 = arith.addf %0, %4 : vector<88x256xf32>
    %c1 = arith.constant 1 : index
    %c0_5 = arith.constant 0 : index
    %6 = vector.load %arg1[%c1, %c0_5] : memref<96x128xf32, #tpu.memory_space<vmem>>, vector<88x128xf32>
    %c1_6 = arith.constant 1 : index
    %c0_7 = arith.constant 0 : index
    %c0_8 = arith.constant 0 : index
    %7 = vector.load %arg2[%c1_6, %c0_7, %c0_8] : memref<5x128x256xf32, #tpu.memory_space<vmem>>, vector<1x128x256xf32>
    %8 = vector.shape_cast %7 : vector<1x128x256xf32> to vector<128x256xf32>
    %cst_9 = arith.constant dense<0.000000e+00> : vector<88x256xf32>
    %9 = tpu.matmul %6, %8, %cst_9 {dimension_numbers = #tpu.dot_dimension_numbers<[1], [0], [0], [1], [0, 0, 1, 1], [], []>} : vector<88x128xf32>, vector<128x256xf32>, vector<88x256xf32> -> vector<88x256xf32>
    %10 = arith.addf %5, %9 : vector<88x256xf32>
    %c2 = arith.constant 2 : index
    %c0_10 = arith.constant 0 : index
    %11 = vector.load %arg1[%c2, %c0_10] : memref<96x128xf32, #tpu.memory_space<vmem>>, vector<88x128xf32>
    %c2_11 = arith.constant 2 : index
    %c0_12 = arith.constant 0 : index
    %c0_13 = arith.constant 0 : index
    %12 = vector.load %arg2[%c2_11, %c0_12, %c0_13] : memref<5x128x256xf32, #tpu.memory_space<vmem>>, vector<1x128x256xf32>
    %13 = vector.shape_cast %12 : vector<1x128x256xf32> to vector<128x256xf32>
    %cst_14 = arith.constant dense<0.000000e+00> : vector<88x256xf32>
    %14 = tpu.matmul %11, %13, %cst_14 {dimension_numbers = #tpu.dot_dimension_numbers<[1], [0], [0], [1], [0, 0, 1, 1], [], []>} : vector<88x128xf32>, vector<128x256xf32>, vector<88x256xf32> -> vector<88x256xf32>
    %15 = arith.addf %10, %14 : vector<88x256xf32>
    %c3 = arith.constant 3 : index
    %c0_15 = arith.constant 0 : index
    %16 = vector.load %arg1[%c3, %c0_15] : memref<96x128xf32, #tpu.memory_space<vmem>>, vector<88x128xf32>
    %c3_16 = arith.constant 3 : index
    %c0_17 = arith.constant 0 : index
    %c0_18 = arith.constant 0 : index
    %17 = vector.load %arg2[%c3_16, %c0_17, %c0_18] : memref<5x128x256xf32, #tpu.memory_space<vmem>>, vector<1x128x256xf32>
    %18 = vector.shape_cast %17 : vector<1x128x256xf32> to vector<128x256xf32>
    %cst_19 = arith.constant dense<0.000000e+00> : vector<88x256xf32>
    %19 = tpu.matmul %16, %18, %cst_19 {dimension_numbers = #tpu.dot_dimension_numbers<[1], [0], [0], [1], [0, 0, 1, 1], [], []>} : vector<88x128xf32>, vector<128x256xf32>, vector<88x256xf32> -> vector<88x256xf32>
    %20 = arith.addf %15, %19 : vector<88x256xf32>
    %c4 = arith.constant 4 : index
    %c0_20 = arith.constant 0 : index
    %21 = vector.load %arg1[%c4, %c0_20] : memref<96x128xf32, #tpu.memory_space<vmem>>, vector<88x128xf32>
    %c4_21 = arith.constant 4 : index
    %c0_22 = arith.constant 0 : index
    %c0_23 = arith.constant 0 : index
    %22 = vector.load %arg2[%c4_21, %c0_22, %c0_23] : memref<5x128x256xf32, #tpu.memory_space<vmem>>, vector<1x128x256xf32>
    %23 = vector.shape_cast %22 : vector<1x128x256xf32> to vector<128x256xf32>
    %cst_24 = arith.constant dense<0.000000e+00> : vector<88x256xf32>
    %24 = tpu.matmul %21, %23, %cst_24 {dimension_numbers = #tpu.dot_dimension_numbers<[1], [0], [0], [1], [0, 0, 1, 1], [], []>} : vector<88x128xf32>, vector<128x256xf32>, vector<88x256xf32> -> vector<88x256xf32>
    %25 = arith.addf %20, %24 : vector<88x256xf32>
    %c0_25 = arith.constant 0 : index
    %c0_26 = arith.constant 0 : index
    %26 = vector.load %arg6[%c0_25, %c0_26] : memref<8x256xf32, #tpu.memory_space<vmem>>, vector<1x256xf32>
    %27 = vector.broadcast %26 : vector<1x256xf32> to vector<88x256xf32>
    %28 = arith.addf %25, %27 : vector<88x256xf32>
    %cst_27 = arith.constant 0.000000e+00 : f32
    %29 = vector.broadcast %cst_27 : f32 to vector<88x256xf32>
    %30 = arith.maximumf %28, %29 : vector<88x256xf32>
    %c0_28 = arith.constant 0 : index
    %c0_29 = arith.constant 0 : index
    %31 = vector.load %arg8[%c0_28, %c0_29] : memref<88x256xf32, #tpu.memory_space<vmem>>, vector<88x256xf32>
    tpu.vector_store %arg8[%c0_28, %c0_29], %30 {strides = array<i32>} : memref<88x256xf32, #tpu.memory_space<vmem>>, vector<88x256xf32>,
    %c0_30 = arith.constant 0 : index
    %c0_31 = arith.constant 0 : index
    %32 = vector.load %arg8[%c0_30, %c0_31] : memref<88x256xf32, #tpu.memory_space<vmem>>, vector<80x256xf32>
    %c1_32 = arith.constant 1 : index
    %c0_33 = arith.constant 0 : index
    %33 = vector.load %arg8[%c1_32, %c0_33] : memref<88x256xf32, #tpu.memory_space<vmem>>, vector<80x256xf32>
    %34 = arith.maximumf %32, %33 : vector<80x256xf32>
    %c248_i32 = arith.constant 248 : i32
    %35 = tpu.dynamic_rotate %34 by %c248_i32 dim 1 : vector<80x256xf32>, i32 -> vector<80x256xf32>
    %36 = arith.maximumf %34, %35 : vector<80x256xf32>
    %c0_34 = arith.constant 0 : index
    %c0_35 = arith.constant 0 : index
    %37 = vector.load %arg9[%c0_34, %c0_35] : memref<80x256xf32, #tpu.memory_space<vmem>>, vector<80x256xf32>
    tpu.vector_store %arg9[%c0_34, %c0_35], %36 {strides = array<i32>} : memref<80x256xf32, #tpu.memory_space<vmem>>, vector<80x256xf32>,
    %cst_36 = arith.constant 0.000000e+00 : f32
    %38 = vector.broadcast %cst_36 : f32 to vector<72x256xf32>
    %c0_37 = arith.constant 0 : index
    %c0_38 = arith.constant 0 : index
    %39 = vector.load %arg9[%c0_37, %c0_38] : memref<80x256xf32, #tpu.memory_space<vmem>>, vector<72x256xf32>
    %c0_39 = arith.constant 0 : index
    %c0_40 = arith.constant 0 : index
    %c0_41 = arith.constant 0 : index
    %40 = vector.load %arg3[%c0_39, %c0_40, %c0_41] : memref<5x256x256xf32, #tpu.memory_space<vmem>>, vector<1x256x256xf32>
    %41 = vector.shape_cast %40 : vector<1x256x256xf32> to vector<256x256xf32>
    %cst_42 = arith.constant dense<0.000000e+00> : vector<72x256xf32>
    %42 = tpu.matmul %39, %41, %cst_42 {dimension_numbers = #tpu.dot_dimension_numbers<[1], [0], [0], [1], [0, 0, 1, 1], [], []>} : vector<72x256xf32>, vector<256x256xf32>, vector<72x256xf32> -> vector<72x256xf32>
    %43 = arith.addf %38, %42 : vector<72x256xf32>
    %c2_43 = arith.constant 2 : index
    %c0_44 = arith.constant 0 : index
    %44 = vector.load %arg9[%c2_43, %c0_44] : memref<80x256xf32, #tpu.memory_space<vmem>>, vector<72x256xf32>
    %c1_45 = arith.constant 1 : index
    %c0_46 = arith.constant 0 : index
    %c0_47 = arith.constant 0 : index
    %45 = vector.load %arg3[%c1_45, %c0_46, %c0_47] : memref<5x256x256xf32, #tpu.memory_space<vmem>>, vector<1x256x256xf32>
    %46 = vector.shape_cast %45 : vector<1x256x256xf32> to vector<256x256xf32>
    %cst_48 = arith.constant dense<0.000000e+00> : vector<72x256xf32>
    %47 = tpu.matmul %44, %46, %cst_48 {dimension_numbers = #tpu.dot_dimension_numbers<[1], [0], [0], [1], [0, 0, 1, 1], [], []>} : vector<72x256xf32>, vector<256x256xf32>, vector<72x256xf32> -> vector<72x256xf32>
    %48 = arith.addf %43, %47 : vector<72x256xf32>
    %c4_49 = arith.constant 4 : index
    %c0_50 = arith.constant 0 : index
    %49 = vector.load %arg9[%c4_49, %c0_50] : memref<80x256xf32, #tpu.memory_space<vmem>>, vector<72x256xf32>
    %c2_51 = arith.constant 2 : index
    %c0_52 = arith.constant 0 : index
    %c0_53 = arith.constant 0 : index
    %50 = vector.load %arg3[%c2_51, %c0_52, %c0_53] : memref<5x256x256xf32, #tpu.memory_space<vmem>>, vector<1x256x256xf32>
    %51 = vector.shape_cast %50 : vector<1x256x256xf32> to vector<256x256xf32>
    %cst_54 = arith.constant dense<0.000000e+00> : vector<72x256xf32>
    %52 = tpu.matmul %49, %51, %cst_54 {dimension_numbers = #tpu.dot_dimension_numbers<[1], [0], [0], [1], [0, 0, 1, 1], [], []>} : vector<72x256xf32>, vector<256x256xf32>, vector<72x256xf32> -> vector<72x256xf32>
    %53 = arith.addf %48, %52 : vector<72x256xf32>
    %c6 = arith.constant 6 : index
    %c0_55 = arith.constant 0 : index
    %54 = vector.load %arg9[%c6, %c0_55] : memref<80x256xf32, #tpu.memory_space<vmem>>, vector<72x256xf32>
    %c3_56 = arith.constant 3 : index
    %c0_57 = arith.constant 0 : index
    %c0_58 = arith.constant 0 : index
    %55 = vector.load %arg3[%c3_56, %c0_57, %c0_58] : memref<5x256x256xf32, #tpu.memory_space<vmem>>, vector<1x256x256xf32>
    %56 = vector.shape_cast %55 : vector<1x256x256xf32> to vector<256x256xf32>
    %cst_59 = arith.constant dense<0.000000e+00> : vector<72x256xf32>
    %57 = tpu.matmul %54, %56, %cst_59 {dimension_numbers = #tpu.dot_dimension_numbers<[1], [0], [0], [1], [0, 0, 1, 1], [], []>} : vector<72x256xf32>, vector<256x256xf32>, vector<72x256xf32> -> vector<72x256xf32>
    %58 = arith.addf %53, %57 : vector<72x256xf32>
    %c8 = arith.constant 8 : index
    %c0_60 = arith.constant 0 : index
    %59 = vector.load %arg9[%c8, %c0_60] : memref<80x256xf32, #tpu.memory_space<vmem>>, vector<72x256xf32>
    %c4_61 = arith.constant 4 : index
    %c0_62 = arith.constant 0 : index
    %c0_63 = arith.constant 0 : index
    %60 = vector.load %arg3[%c4_61, %c0_62, %c0_63] : memref<5x256x256xf32, #tpu.memory_space<vmem>>, vector<1x256x256xf32>
    %61 = vector.shape_cast %60 : vector<1x256x256xf32> to vector<256x256xf32>
    %cst_64 = arith.constant dense<0.000000e+00> : vector<72x256xf32>
    %62 = tpu.matmul %59, %61, %cst_64 {dimension_numbers = #tpu.dot_dimension_numbers<[1], [0], [0], [1], [0, 0, 1, 1], [], []>} : vector<72x256xf32>, vector<256x256xf32>, vector<72x256xf32> -> vector<72x256xf32>
    %63 = arith.addf %58, %62 : vector<72x256xf32>
    %c1_65 = arith.constant 1 : index
    %c0_66 = arith.constant 0 : index
    %64 = vector.load %arg6[%c1_65, %c0_66] : memref<8x256xf32, #tpu.memory_space<vmem>>, vector<1x256xf32>
    %65 = vector.broadcast %64 : vector<1x256xf32> to vector<72x256xf32>
    %66 = arith.addf %63, %65 : vector<72x256xf32>
    %cst_67 = arith.constant 0.000000e+00 : f32
    %67 = vector.broadcast %cst_67 : f32 to vector<72x256xf32>
    %68 = arith.maximumf %66, %67 : vector<72x256xf32>
    %69 = vector.extract_strided_slice %68 {offsets = [0, 0], sizes = [64, 256], strides = [1, 1]} : vector<72x256xf32> to vector<64x256xf32>
    %70 = vector.extract_strided_slice %68 {offsets = [2, 0], sizes = [64, 256], strides = [1, 1]} : vector<72x256xf32> to vector<64x256xf32>
    %71 = arith.maximumf %69, %70 : vector<64x256xf32>
    %c240_i32 = arith.constant 240 : i32
    %72 = tpu.dynamic_rotate %71 by %c240_i32 dim 1 : vector<64x256xf32>, i32 -> vector<64x256xf32>
    %73 = arith.maximumf %71, %72 : vector<64x256xf32>
    %74 = tpu.iota {dimensions = array<i32: 1>} : vector<8x64xi32>
    %75 = tpu.iota {dimensions = array<i32: 0>} : vector<8x64xi32>
    %c32_i32 = arith.constant 32 : i32
    %76 = vector.broadcast %c32_i32 : i32 to vector<8x64xi32>
    %77 = arith.muli %75, %76 : vector<8x64xi32>
    %c0_i32 = arith.constant 0 : i32
    %78 = vector.broadcast %c0_i32 : i32 to vector<8x64xi32>
    %79 = arith.addi %77, %78 : vector<8x64xi32>
    %80 = arith.cmpi eq, %74, %79 : vector<8x64xi32>
    %81 = arith.extui %80 : vector<8x64xi1> to vector<8x64xi32>
    %82 = arith.sitofp %81 : vector<8x64xi32> to vector<8x64xf32>
    %cst_68 = arith.constant dense<0.000000e+00> : vector<8x256xf32>
    %83 = tpu.matmul %82, %73, %cst_68 {dimension_numbers = #tpu.dot_dimension_numbers<[1], [0], [0], [1], [0, 0, 1, 1], [], []>} : vector<8x64xf32>, vector<64x256xf32>, vector<8x256xf32> -> vector<8x256xf32>
    %c32_i32_69 = arith.constant 32 : i32
    %84 = vector.broadcast %c32_i32_69 : i32 to vector<8x64xi32>
    %85 = arith.muli %75, %84 : vector<8x64xi32>
    %c4_i32 = arith.constant 4 : i32
    %86 = vector.broadcast %c4_i32 : i32 to vector<8x64xi32>
    %87 = arith.addi %85, %86 : vector<8x64xi32>
    %88 = arith.cmpi eq, %74, %87 : vector<8x64xi32>
    %89 = arith.extui %88 : vector<8x64xi1> to vector<8x64xi32>
    %90 = arith.sitofp %89 : vector<8x64xi32> to vector<8x64xf32>
    %cst_70 = arith.constant dense<0.000000e+00> : vector<8x256xf32>
    %91 = tpu.matmul %90, %73, %cst_70 {dimension_numbers = #tpu.dot_dimension_numbers<[1], [0], [0], [1], [0, 0, 1, 1], [], []>} : vector<8x64xf32>, vector<64x256xf32>, vector<8x256xf32> -> vector<8x256xf32>
    %c32_i32_71 = arith.constant 32 : i32
    %92 = vector.broadcast %c32_i32_71 : i32 to vector<8x64xi32>
    %93 = arith.muli %75, %92 : vector<8x64xi32>
    %c8_i32 = arith.constant 8 : i32
    %94 = vector.broadcast %c8_i32 : i32 to vector<8x64xi32>
    %95 = arith.addi %93, %94 : vector<8x64xi32>
    %96 = arith.cmpi eq, %74, %95 : vector<8x64xi32>
    %97 = arith.extui %96 : vector<8x64xi1> to vector<8x64xi32>
    %98 = arith.sitofp %97 : vector<8x64xi32> to vector<8x64xf32>
    %cst_72 = arith.constant dense<0.000000e+00> : vector<8x256xf32>
    %99 = tpu.matmul %98, %73, %cst_72 {dimension_numbers = #tpu.dot_dimension_numbers<[1], [0], [0], [1], [0, 0, 1, 1], [], []>} : vector<8x64xf32>, vector<64x256xf32>, vector<8x256xf32> -> vector<8x256xf32>
    %c32_i32_73 = arith.constant 32 : i32
    %100 = vector.broadcast %c32_i32_73 : i32 to vector<8x64xi32>
    %101 = arith.muli %75, %100 : vector<8x64xi32>
    %c12_i32 = arith.constant 12 : i32
    %102 = vector.broadcast %c12_i32 : i32 to vector<8x64xi32>
    %103 = arith.addi %101, %102 : vector<8x64xi32>
    %104 = arith.cmpi eq, %74, %103 : vector<8x64xi32>
    %105 = arith.extui %104 : vector<8x64xi1> to vector<8x64xi32>
    %106 = arith.sitofp %105 : vector<8x64xi32> to vector<8x64xf32>
    %cst_74 = arith.constant dense<0.000000e+00> : vector<8x256xf32>
    %107 = tpu.matmul %106, %73, %cst_74 {dimension_numbers = #tpu.dot_dimension_numbers<[1], [0], [0], [1], [0, 0, 1, 1], [], []>} : vector<8x64xf32>, vector<64x256xf32>, vector<8x256xf32> -> vector<8x256xf32>
    %c32_i32_75 = arith.constant 32 : i32
    %108 = vector.broadcast %c32_i32_75 : i32 to vector<8x64xi32>
    %109 = arith.muli %75, %108 : vector<8x64xi32>
    %c16_i32 = arith.constant 16 : i32
    %110 = vector.broadcast %c16_i32 : i32 to vector<8x64xi32>
    %111 = arith.addi %109, %110 : vector<8x64xi32>
    %112 = arith.cmpi eq, %74, %111 : vector<8x64xi32>
    %113 = arith.extui %112 : vector<8x64xi1> to vector<8x64xi32>
    %114 = arith.sitofp %113 : vector<8x64xi32> to vector<8x64xf32>
    %cst_76 = arith.constant dense<0.000000e+00> : vector<8x256xf32>
    %115 = tpu.matmul %114, %73, %cst_76 {dimension_numbers = #tpu.dot_dimension_numbers<[1], [0], [0], [1], [0, 0, 1, 1], [], []>} : vector<8x64xf32>, vector<64x256xf32>, vector<8x256xf32> -> vector<8x256xf32>
    %116 = tpu.concatenate %83, %91, %99, %107, %115 in 1 : vector<8x256xf32>, vector<8x256xf32>, vector<8x256xf32>, vector<8x256xf32>, vector<8x256xf32> -> vector<8x1280xf32>
    %c0_77 = arith.constant 0 : index
    %c0_78 = arith.constant 0 : index
    %117 = vector.load %arg4[%c0_77, %c0_78] : memref<1280x128xf32, #tpu.memory_space<vmem>>, vector<1280x128xf32>
    %cst_79 = arith.constant dense<0.000000e+00> : vector<8x128xf32>
    %118 = tpu.matmul %116, %117, %cst_79 {dimension_numbers = #tpu.dot_dimension_numbers<[1], [0], [0], [1], [0, 0, 1, 1], [], []>} : vector<8x1280xf32>, vector<1280x128xf32>, vector<8x128xf32> -> vector<8x128xf32>
    %c2_80 = arith.constant 2 : index
    %c0_81 = arith.constant 0 : index
    %119 = vector.load %arg6[%c2_80, %c0_81] : memref<8x256xf32, #tpu.memory_space<vmem>>, vector<1x128xf32>
    %120 = vector.broadcast %119 : vector<1x128xf32> to vector<8x128xf32>
    %121 = arith.addf %118, %120 : vector<8x128xf32>
    %cst_82 = arith.constant 0.000000e+00 : f32
    %122 = vector.broadcast %cst_82 : f32 to vector<8x128xf32>
    %123 = arith.maximumf %121, %122 : vector<8x128xf32>
    %c0_83 = arith.constant 0 : index
    %c0_84 = arith.constant 0 : index
    %c0_85 = arith.constant 0 : index
    %124 = vector.load %arg5[%c0_83, %c0_84, %c0_85] : memref<2x128x128xf32, #tpu.memory_space<vmem>>, vector<1x128x128xf32>
    %125 = vector.shape_cast %124 : vector<1x128x128xf32> to vector<128x128xf32>
    %cst_86 = arith.constant dense<0.000000e+00> : vector<8x128xf32>
    %126 = tpu.matmul %123, %125, %cst_86 {dimension_numbers = #tpu.dot_dimension_numbers<[1], [0], [0], [1], [0, 0, 1, 1], [], []>} : vector<8x128xf32>, vector<128x128xf32>, vector<8x128xf32> -> vector<8x128xf32>
    %c3_87 = arith.constant 3 : index
    %c0_88 = arith.constant 0 : index
    %127 = vector.load %arg6[%c3_87, %c0_88] : memref<8x256xf32, #tpu.memory_space<vmem>>, vector<1x128xf32>
    %128 = vector.broadcast %127 : vector<1x128xf32> to vector<8x128xf32>
    %129 = arith.addf %126, %128 : vector<8x128xf32>
    %cst_89 = arith.constant 0.000000e+00 : f32
    %130 = vector.broadcast %cst_89 : f32 to vector<8x128xf32>
    %131 = arith.maximumf %129, %130 : vector<8x128xf32>
    %c1_90 = arith.constant 1 : index
    %c0_91 = arith.constant 0 : index
    %c0_92 = arith.constant 0 : index
    %132 = vector.load %arg5[%c1_90, %c0_91, %c0_92] : memref<2x128x128xf32, #tpu.memory_space<vmem>>, vector<1x128x128xf32>
    %133 = vector.shape_cast %132 : vector<1x128x128xf32> to vector<128x128xf32>
    %cst_93 = arith.constant dense<0.000000e+00> : vector<8x128xf32>
    %134 = tpu.matmul %131, %133, %cst_93 {dimension_numbers = #tpu.dot_dimension_numbers<[1], [0], [0], [1], [0, 0, 1, 1], [], []>} : vector<8x128xf32>, vector<128x128xf32>, vector<8x128xf32> -> vector<8x128xf32>
    %c4_94 = arith.constant 4 : index
    %c0_95 = arith.constant 0 : index
    %135 = vector.load %arg6[%c4_94, %c0_95] : memref<8x256xf32, #tpu.memory_space<vmem>>, vector<1x128xf32>
    %136 = vector.broadcast %135 : vector<1x128xf32> to vector<8x128xf32>
    %137 = arith.addf %134, %136 : vector<8x128xf32>
    %c0_96 = arith.constant 0 : index
    %c0_97 = arith.constant 0 : index
    %138 = vector.load %arg7[%c0_96, %c0_97] : memref<8x128xf32, #tpu.memory_space<vmem>>, vector<8x128xf32>
    tpu.vector_store %arg7[%c0_96, %c0_97], %137 {strides = array<i32>} : memref<8x128xf32, #tpu.memory_space<vmem>>, vector<8x128xf32>,
    return
  }
  func.func @transform_0(%arg0: i32) -> (i32, i32) {
    %c0_i32 = arith.constant 0 : i32
    %c0_i32_0 = arith.constant 0 : i32
    %c0_i32_1 = arith.constant 0 : i32
    return %c0_i32, %c0_i32_0 : i32, i32
  }
  func.func @transform_1(%arg0: i32) -> (i32, i32, i32) {
    %c0_i32 = arith.constant 0 : i32
    %c0_i32_0 = arith.constant 0 : i32
    %c0_i32_1 = arith.constant 0 : i32
    %c0_i32_2 = arith.constant 0 : i32
    return %c0_i32, %c0_i32_0, %c0_i32_1 : i32, i32, i32
  }
  func.func @transform_2(%arg0: i32) -> (i32, i32, i32) {
    %c0_i32 = arith.constant 0 : i32
    %c0_i32_0 = arith.constant 0 : i32
    %c0_i32_1 = arith.constant 0 : i32
    %c0_i32_2 = arith.constant 0 : i32
    return %c0_i32, %c0_i32_0, %c0_i32_1 : i32, i32, i32
  }
  func.func @transform_3(%arg0: i32) -> (i32, i32) {
    %c0_i32 = arith.constant 0 : i32
    %c0_i32_0 = arith.constant 0 : i32
    %c0_i32_1 = arith.constant 0 : i32
    return %c0_i32, %c0_i32_0 : i32, i32
  }
  func.func @transform_4(%arg0: i32) -> (i32, i32, i32) {
    %c0_i32 = arith.constant 0 : i32
    %c0_i32_0 = arith.constant 0 : i32
    %c0_i32_1 = arith.constant 0 : i32
    %c0_i32_2 = arith.constant 0 : i32
    return %c0_i32, %c0_i32_0, %c0_i32_1 : i32, i32, i32
  }
  func.func @transform_5(%arg0: i32) -> (i32, i32) {
    %c0_i32 = arith.constant 0 : i32
    %c0_i32_0 = arith.constant 0 : i32
    %c0_i32_1 = arith.constant 0 : i32
    return %c0_i32, %c0_i32_0 : i32, i32
  }
  func.func @transform_6(%arg0: i32) -> (i32, i32) {
    %c0_i32 = arith.constant 0 : i32
    %c0_i32_0 = arith.constant 0 : i32
    %c0_i32_1 = arith.constant 0 : i32
    return %c0_i32, %c0_i32_0 : i32, i32
  }
}

</mosaic_0001>

<llo_original>
// kernel: net_forward.1
$region0: #{net_forward.1}
  #allocation0 [shape = 'u32[]', space=smem, size = 0x4, offset = 0x4, fixed_abs, tag = 'smem constant byte address 0x4 - core index']
  #allocation1 [shape = 'u32[72,128]{1,0:T(1,128)}', space=vmem, size = 0x9000, scoped, tag = 'internal scratch']
  #allocation2 [shape = 'f32[88,256]{1,0:T(8,128)}', space=vmem, size = 0x16000, scoped, tag = 'scratch operand']
  #allocation3 [shape = 'f32[80,256]{1,0:T(8,128)}', space=vmem, size = 0x14000, scoped, tag = 'scratch operand']
  %s0 = inlined_call_operand.vmem [shape: f32[96,128], index: 0, kind: input, shape index: {}]
  %s1 = inlined_call_operand.vmem [shape: f32[5,128,256], index: 1, kind: input, shape index: {}]
  %s2 = inlined_call_operand.hbm [shape: f32[5,256,256], index: 2, kind: input, shape index: {}]
  %s3 = inlined_call_operand.hbm [shape: f32[1280,128], index: 3, kind: input, shape index: {}]
  %s4 = inlined_call_operand.hbm [shape: f32[2,128,128], index: 4, kind: input, shape index: {}]
  %s5 = inlined_call_operand.hbm [shape: f32[8,256], index: 5, kind: input, shape index: {}]
  %s6 = inlined_call_operand.vmem [shape: f32[8,128], index: 6, kind: output, shape index: {}]
  %s7 = sld [smem:[#allocation0]]
  $region50: #{net_forward.1} parent=0
    _
  %s9 = ssub.s32 1, %s7
  %s10 = scalar_select 0, %s9, %s7
  $region1: #{net_forward.1} parent=0
    #allocation4 [shape = 'u8[1310720]{0}', space=vmem, size = 0x140000, scoped, tag = 'input window, operand 2, single buffered']
    #allocation5 [shape = 's32[1]{0}', space=sflag, size = 0x4, scoped, tag = 'scoped memory for net_forward.1']
    #allocation6 [shape = 'u8[655360]{0}', space=vmem, size = 0xa0000, scoped, tag = 'input window, operand 3, single buffered']
    #allocation7 [shape = 's32[1]{0}', space=sflag, size = 0x4, scoped, tag = 'scoped memory for net_forward.1']
    #allocation8 [shape = 'u8[131072]{0}', space=vmem, size = 0x20000, scoped, tag = 'input window, operand 4, single buffered']
    #allocation9 [shape = 'u8[8192]{0}', space=vmem, size = 0x2000, scoped, tag = 'input window, operand 5, single buffered']
    #allocation10 [shape = 's32[1]{0}', space=sflag, size = 0x4, scoped, tag = 'scoped memory for net_forward.1']
    %11 = vsyncpa [#allocation5], 0
    %12 = vsyncpa [#allocation7], 0
    %13 = vsyncpa [#allocation10], 0
    // Predicated region
    $region2: #{net_forward.1} parent=1 // pred_check
      _
    $region3: #{net_forward.1} parent=1 // pred_check_branch
      %15 = sbr.rel (0) target = $region5
    $region4: #{net_forward.1} parent=1 // pred_region
      _
    $region5: #{net_forward.1} parent=1 // pred_fallthru
      _
    // Predicated region
    $region6: #{net_forward.1} parent=1 // pred_check
      _
    $region7: #{net_forward.1} parent=1 // pred_check_branch
      %17 = sbr.rel (0) target = $region9
    $region8: #{net_forward.1} parent=1 // pred_region
      _
    $region9: #{net_forward.1} parent=1 // pred_fallthru
      _
    // Predicated region
    $region10: #{net_forward.1} parent=1 // pred_check
      _
    $region11: #{net_forward.1} parent=1 // pred_check_branch
      %19 = sbr.rel (0) target = $region13
    $region12: #{net_forward.1} parent=1 // pred_region
      %21 = vsyncadd [#allocation5], 0
      %s22 = sshll.u32 %s2, 4
      %s23 = int_to_ptr.hbm [resolvable:$true] %s22
      %s24 = sshll.u32 [#allocation4], 4
      %s25 = int_to_ptr.vmem [resolvable:$true] %s24
      %30 = dma.hbm_to_vmem [thread:$0]  %s23, 40960, %s25, [#allocation5], 256, 256, 16
    $region13: #{net_forward.1} parent=1 // pred_fallthru
      _
    // Predicated region
    $region14: #{net_forward.1} parent=1 // pred_check
      _
    $region15: #{net_forward.1} parent=1 // pred_check_branch
      %32 = sbr.rel (0) target = $region17
    $region16: #{net_forward.1} parent=1 // pred_region
      %34 = vsyncadd [#allocation7], 0
      %s35 = sshll.u32 %s3, 4
      %s36 = int_to_ptr.hbm [resolvable:$true] %s35
      %s37 = sshll.u32 [#allocation6], 4
      %s38 = int_to_ptr.vmem [resolvable:$true] %s37
      %43 = dma.hbm_to_vmem [thread:$0]  %s36, 20480, %s38, [#allocation7], 128, 128, 8
    $region17: #{net_forward.1} parent=1 // pred_fallthru
      _
    // Predicated region
    $region18: #{net_forward.1} parent=1 // pred_check
      _
    $region19: #{net_forward.1} parent=1 // pred_check_branch
      %45 = sbr.rel (0) target = $region21
    $region20: #{net_forward.1} parent=1 // pred_region
      %47 = vsyncadd [#allocation7], 0
      %s48 = sshll.u32 %s4, 4
      %s49 = int_to_ptr.hbm [resolvable:$true] %s48
      %s50 = sshll.u32 [#allocation8], 4
      %s51 = int_to_ptr.vmem [resolvable:$true] %s50
      %56 = dma.hbm_to_vmem [thread:$0]  %s49, 4096, %s51, [#allocation7], 128, 128, 8
    $region21: #{net_forward.1} parent=1 // pred_fallthru
      _
    // Predicated region
    $region22: #{net_forward.1} parent=1 // pred_check
      _
    $region23: #{net_forward.1} parent=1 // pred_check_branch
      %58 = sbr.rel (0) target = $region25
    $region24: #{net_forward.1} parent=1 // pred_region
      %60 = vsyncadd [#allocation10], 0
      %s62 = sshll.u32 %s5, 4
      %s63 = int_to_ptr.hbm [resolvable:$true] %s62
      %s64 = sshll.u32 [#allocation9], 4
      %s65 = int_to_ptr.vmem [resolvable:$true] %s64
      %67 = dma.hbm_to_vmem [thread:$0]  %s63, 256, %s65, [#allocation10]
    $region25: #{net_forward.1} parent=1 // pred_fallthru
      _
    // Predicated region
    $region26: #{net_forward.1} parent=1 // pred_check
      _
    $region27: #{net_forward.1} parent=1 // pred_check_branch
      %69 = sbr.rel (0) target = $region29
    $region28: #{net_forward.1} parent=1 // pred_region
      %71 = dma.done [#allocation5], 40960
    $region29: #{net_forward.1} parent=1 // pred_fallthru
      _
    // Predicated region
    $region30: #{net_forward.1} parent=1 // pred_check
      _
    $region31: #{net_forward.1} parent=1 // pred_check_branch
      %73 = sbr.rel (0) target = $region33
    $region32: #{net_forward.1} parent=1 // pred_region
      %75 = dma.done [#allocation7], 20480
    $region33: #{net_forward.1} parent=1 // pred_fallthru
      _
    // Predicated region
    $region34: #{net_forward.1} parent=1 // pred_check
      _
    $region35: #{net_forward.1} parent=1 // pred_check_branch
      %77 = sbr.rel (0) target = $region37
    $region36: #{net_forward.1} parent=1 // pred_region
      %79 = dma.done [#allocation7], 4096
    $region37: #{net_forward.1} parent=1 // pred_fallthru
      _
    // Predicated region
    $region38: #{net_forward.1} parent=1 // pred_check
      _
    $region39: #{net_forward.1} parent=1 // pred_check_branch
      %81 = sbr.rel (0) target = $region41
    $region40: #{net_forward.1} parent=1 // pred_region
      %83 = dma.done [#allocation10], 256
    $region41: #{net_forward.1} parent=1 // pred_fallthru
      _
    %v84 = vld [vmem:[%s0] sm:$0xff]
    %v85 = vld [vmem:[%s0 + $0x8] sm:$0xff]
    %v86 = vld [vmem:[%s0 + $0x10] sm:$0xff]
    %v87 = vld [vmem:[%s0 + $0x18] sm:$0xff]
    %v88 = vld [vmem:[%s0 + $0x20] sm:$0xff]
    %v89 = vld [vmem:[%s0 + $0x28] sm:$0xff]
    %v90 = vld [vmem:[%s0 + $0x30] sm:$0xff]
    %v91 = vld [vmem:[%s0 + $0x38] sm:$0xff]
    %v92 = vld [vmem:[%s0 + $0x40] sm:$0xff]
    %v93 = vld [vmem:[%s0 + $0x48] sm:$0xff]
    %v94 = vld [vmem:[%s0 + $0x50] sm:$0xff]
    %v95 = vld [vmem:[%s1] sm:$0xff]
    %v96 = vld [vmem:[%s1 + $0x8] sm:$0xff]
    %v97 = vld [vmem:[%s1 + $0x10] sm:$0xff]
    %v98 = vld [vmem:[%s1 + $0x18] sm:$0xff]
    %v99 = vld [vmem:[%s1 + $0x20] sm:$0xff]
    %v100 = vld [vmem:[%s1 + $0x28] sm:$0xff]
    %v101 = vld [vmem:[%s1 + $0x30] sm:$0xff]
    %v102 = vld [vmem:[%s1 + $0x38] sm:$0xff]
    %v103 = vld [vmem:[%s1 + $0x40] sm:$0xff]
    %v104 = vld [vmem:[%s1 + $0x48] sm:$0xff]
    %v105 = vld [vmem:[%s1 + $0x50] sm:$0xff]
    %v106 = vld [vmem:[%s1 + $0x58] sm:$0xff]
    %v107 = vld [vmem:[%s1 + $0x60] sm:$0xff]
    %v108 = vld [vmem:[%s1 + $0x68] sm:$0xff]
    %v109 = vld [vmem:[%s1 + $0x70] sm:$0xff]
    %v110 = vld [vmem:[%s1 + $0x78] sm:$0xff]
    %v111 = vld [vmem:[%s1 + $0x80] sm:$0xff]
    %v112 = vld [vmem:[%s1 + $0x88] sm:$0xff]
    %v113 = vld [vmem:[%s1 + $0x90] sm:$0xff]
    %v114 = vld [vmem:[%s1 + $0x98] sm:$0xff]
    %v115 = vld [vmem:[%s1 + $0xa0] sm:$0xff]
    %v116 = vld [vmem:[%s1 + $0xa8] sm:$0xff]
    %v117 = vld [vmem:[%s1 + $0xb0] sm:$0xff]
    %v118 = vld [vmem:[%s1 + $0xb8] sm:$0xff]
    %v119 = vld [vmem:[%s1 + $0xc0] sm:$0xff]
    %v120 = vld [vmem:[%s1 + $0xc8] sm:$0xff]
    %v121 = vld [vmem:[%s1 + $0xd0] sm:$0xff]
    %v122 = vld [vmem:[%s1 + $0xd8] sm:$0xff]
    %v123 = vld [vmem:[%s1 + $0xe0] sm:$0xff]
    %v124 = vld [vmem:[%s1 + $0xe8] sm:$0xff]
    %v125 = vld [vmem:[%s1 + $0xf0] sm:$0xff]
    %v126 = vld [vmem:[%s1 + $0xf8] sm:$0xff]
    %v127 = vld [vmem:[%s0 + $0x1] sm:$0xff]
    %v128 = vld [vmem:[%s0 + $0x9] sm:$0xff]
    %v129 = vld [vmem:[%s0 + $0x11] sm:$0xff]
    %v130 = vld [vmem:[%s0 + $0x19] sm:$0xff]
    %v131 = vld [vmem:[%s0 + $0x21] sm:$0xff]
    %v132 = vld [vmem:[%s0 + $0x29] sm:$0xff]
    %v133 = vld [vmem:[%s0 + $0x31] sm:$0xff]
    %v134 = vld [vmem:[%s0 + $0x39] sm:$0xff]
    %v135 = vld [vmem:[%s0 + $0x41] sm:$0xff]
    %v136 = vld [vmem:[%s0 + $0x49] sm:$0xff]
    %v137 = vld [vmem:[%s0 + $0x51] sm:$0xff]
    %s138 = scalar_lea.vmem %s1, 256
    %v139 = vld [vmem:[%s138] sm:$0xff]
    %v140 = vld [vmem:[%s138 + $0x8] sm:$0xff]
    %v141 = vld [vmem:[%s138 + $0x10] sm:$0xff]
    %v142 = vld [vmem:[%s138 + $0x18] sm:$0xff]
    %v143 = vld [vmem:[%s138 + $0x20] sm:$0xff]
    %v144 = vld [vmem:[%s138 + $0x28] sm:$0xff]
    %v145 = vld [vmem:[%s138 + $0x30] sm:$0xff]
    %v146 = vld [vmem:[%s138 + $0x38] sm:$0xff]
    %v147 = vld [vmem:[%s138 + $0x40] sm:$0xff]
    %v148 = vld [vmem:[%s138 + $0x48] sm:$0xff]
    %v149 = vld [vmem:[%s138 + $0x50] sm:$0xff]
    %v150 = vld [vmem:[%s138 + $0x58] sm:$0xff]
    %v151 = vld [vmem:[%s138 + $0x60] sm:$0xff]
    %v152 = vld [vmem:[%s138 + $0x68] sm:$0xff]
    %v153 = vld [vmem:[%s138 + $0x70] sm:$0xff]
    %v154 = vld [vmem:[%s138 + $0x78] sm:$0xff]
    %v155 = vld [vmem:[%s138 + $0x80] sm:$0xff]
    %v156 = vld [vmem:[%s138 + $0x88] sm:$0xff]
    %v157 = vld [vmem:[%s138 + $0x90] sm:$0xff]
    %v158 = vld [vmem:[%s138 + $0x98] sm:$0xff]
    %v159 = vld [vmem:[%s138 + $0xa0] sm:$0xff]
    %v160 = vld [vmem:[%s138 + $0xa8] sm:$0xff]
    %v161 = vld [vmem:[%s138 + $0xb0] sm:$0xff]
    %v162 = vld [vmem:[%s138 + $0xb8] sm:$0xff]
    %v163 = vld [vmem:[%s138 + $0xc0] sm:$0xff]
    %v164 = vld [vmem:[%s138 + $0xc8] sm:$0xff]
    %v165 = vld [vmem:[%s138 + $0xd0] sm:$0xff]
    %v166 = vld [vmem:[%s138 + $0xd8] sm:$0xff]
    %v167 = vld [vmem:[%s138 + $0xe0] sm:$0xff]
    %v168 = vld [vmem:[%s138 + $0xe8] sm:$0xff]
    %v169 = vld [vmem:[%s138 + $0xf0] sm:$0xff]
    %v170 = vld [vmem:[%s138 + $0xf8] sm:$0xff]
    %171 = vmatpush.msra.mxu0 %v169
    %172 = vmatpush.msra.mxu0 %v167
    %173 = vmatpush.msra.mxu0 %v165
    %174 = vmatpush.msra.mxu0 %v163
    %175 = vmatpush.msra.mxu0 %v161
    %176 = vmatpush.msra.mxu0 %v159
    %177 = vmatpush.msra.mxu0 %v157
    %178 = vmatpush.msra.mxu0 %v155
    %179 = vmatpush.msra.mxu0 %v153
    %180 = vmatpush.msra.mxu0 %v151
    %181 = vmatpush.msra.mxu0 %v149
    %182 = vmatpush.msra.mxu0 %v147
    %183 = vmatpush.msra.mxu0 %v145
    %184 = vmatpush.msra.mxu0 %v143
    %185 = vmatpush.msra.mxu0 %v141
    %186 = vmatpush.msra.mxu0 %v139
    %187 = vmatmul.f32.gmra.mxu0 %v127
    %v188 = vpop.f32.mrf.mxu0
    %v189 = vadd.f32 0.0, %v188
    %190 = vmatmul.f32.gmra.mxu0 %v128
    %v191 = vpop.f32.mrf.mxu0
    %v192 = vadd.f32 0.0, %v191
    %193 = vmatmul.f32.gmra.mxu0 %v129
    %v194 = vpop.f32.mrf.mxu0
    %v195 = vadd.f32 0.0, %v194
    %196 = vmatmul.f32.gmra.mxu0 %v130
    %v197 = vpop.f32.mrf.mxu0
    %v198 = vadd.f32 0.0, %v197
    %199 = vmatmul.f32.gmra.mxu0 %v131
    %v200 = vpop.f32.mrf.mxu0
    %v201 = vadd.f32 0.0, %v200
    %202 = vmatmul.f32.gmra.mxu0 %v132
    %v203 = vpop.f32.mrf.mxu0
    %v204 = vadd.f32 0.0, %v203
    %205 = vmatmul.f32.gmra.mxu0 %v133
    %v206 = vpop.f32.mrf.mxu0
    %v207 = vadd.f32 0.0, %v206
    %208 = vmatmul.f32.gmra.mxu0 %v134
    %v209 = vpop.f32.mrf.mxu0
    %v210 = vadd.f32 0.0, %v209
    %211 = vmatmul.f32.gmra.mxu0 %v135
    %v212 = vpop.f32.mrf.mxu0
    %v213 = vadd.f32 0.0, %v212
    %214 = vmatmul.f32.gmra.mxu0 %v136
    %v215 = vpop.f32.mrf.mxu0
    %v216 = vadd.f32 0.0, %v215
    %217 = vmatmul.f32.gmra.mxu0 %v137
    %v218 = vpop.f32.mrf.mxu0
    %v219 = vadd.f32 0.0, %v218
    %220 = vdwg.mxu0
    %221 = vmatpush.msra.mxu0 %v170
    %222 = vmatpush.msra.mxu0 %v168
    %223 = vmatpush.msra.mxu0 %v166
    %224 = vmatpush.msra.mxu0 %v164
    %225 = vmatpush.msra.mxu0 %v162
    %226 = vmatpush.msra.mxu0 %v160
    %227 = vmatpush.msra.mxu0 %v158
    %228 = vmatpush.msra.mxu0 %v156
    %229 = vmatpush.msra.mxu0 %v154
    %230 = vmatpush.msra.mxu0 %v152
    %231 = vmatpush.msra.mxu0 %v150
    %232 = vmatpush.msra.mxu0 %v148
    %233 = vmatpush.msra.mxu0 %v146
    %234 = vmatpush.msra.mxu0 %v144
    %235 = vmatpush.msra.mxu0 %v142
    %236 = vmatpush.msra.mxu0 %v140
    %237 = vmatmul.f32.gmra.mxu0 %v127
    %v238 = vpop.f32.mrf.mxu0
    %v239 = vadd.f32 0.0, %v238
    %240 = vmatmul.f32.gmra.mxu0 %v128
    %v241 = vpop.f32.mrf.mxu0
    %v242 = vadd.f32 0.0, %v241
    %243 = vmatmul.f32.gmra.mxu0 %v129
    %v244 = vpop.f32.mrf.mxu0
    %v245 = vadd.f32 0.0, %v244
    %246 = vmatmul.f32.gmra.mxu0 %v130
    %v247 = vpop.f32.mrf.mxu0
    %v248 = vadd.f32 0.0, %v247
    %249 = vmatmul.f32.gmra.mxu0 %v131
    %v250 = vpop.f32.mrf.mxu0
    %v251 = vadd.f32 0.0, %v250
    %252 = vmatmul.f32.gmra.mxu0 %v132
    %v253 = vpop.f32.mrf.mxu0
    %v254 = vadd.f32 0.0, %v253
    %255 = vmatmul.f32.gmra.mxu0 %v133
    %v256 = vpop.f32.mrf.mxu0
    %v257 = vadd.f32 0.0, %v256
    %258 = vmatmul.f32.gmra.mxu0 %v134
    %v259 = vpop.f32.mrf.mxu0
    %v260 = vadd.f32 0.0, %v259
    %261 = vmatmul.f32.gmra.mxu0 %v135
    %v262 = vpop.f32.mrf.mxu0
    %v263 = vadd.f32 0.0, %v262
    %264 = vmatmul.f32.gmra.mxu0 %v136
    %v265 = vpop.f32.mrf.mxu0
    %v266 = vadd.f32 0.0, %v265
    %267 = vmatmul.f32.gmra.mxu0 %v137
    %v268 = vpop.f32.mrf.mxu0
    %v269 = vadd.f32 0.0, %v268
    %270 = vdwg.mxu0
    %271 = vmatpush.msra.mxu0 %v125
    %272 = vmatpush.msra.mxu0 %v123
    %273 = vmatpush.msra.mxu0 %v121
    %274 = vmatpush.msra.mxu0 %v119
    %275 = vmatpush.msra.mxu0 %v117
    %276 = vmatpush.msra.mxu0 %v115
    %277 = vmatpush.msra.mxu0 %v113
    %278 = vmatpush.msra.mxu0 %v111
    %279 = vmatpush.msra.mxu0 %v109
    %280 = vmatpush.msra.mxu0 %v107
    %281 = vmatpush.msra.mxu0 %v105
    %282 = vmatpush.msra.mxu0 %v103
    %283 = vmatpush.msra.mxu0 %v101
    %284 = vmatpush.msra.mxu0 %v99
    %285 = vmatpush.msra.mxu0 %v97
    %286 = vmatpush.msra.mxu0 %v95
    %287 = vmatmul.f32.gmra.mxu0 %v84
    %v288 = vpop.f32.mrf.mxu0
    %v289 = vadd.f32 %v189, %v288
    %290 = vmatmul.f32.gmra.mxu0 %v85
    %v291 = vpop.f32.mrf.mxu0
    %v292 = vadd.f32 %v192, %v291
    %293 = vmatmul.f32.gmra.mxu0 %v86
    %v294 = vpop.f32.mrf.mxu0
    %v295 = vadd.f32 %v195, %v294
    %296 = vmatmul.f32.gmra.mxu0 %v87
    %v297 = vpop.f32.mrf.mxu0
    %v298 = vadd.f32 %v198, %v297
    %299 = vmatmul.f32.gmra.mxu0 %v88
    %v300 = vpop.f32.mrf.mxu0
    %v301 = vadd.f32 %v201, %v300
    %302 = vmatmul.f32.gmra.mxu0 %v89
    %v303 = vpop.f32.mrf.mxu0
    %v304 = vadd.f32 %v204, %v303
    %305 = vmatmul.f32.gmra.mxu0 %v90
    %v306 = vpop.f32.mrf.mxu0
    %v307 = vadd.f32 %v207, %v306
    %308 = vmatmul.f32.gmra.mxu0 %v91
    %v309 = vpop.f32.mrf.mxu0
    %v310 = vadd.f32 %v210, %v309
    %311 = vmatmul.f32.gmra.mxu0 %v92
    %v312 = vpop.f32.mrf.mxu0
    %v313 = vadd.f32 %v213, %v312
    %314 = vmatmul.f32.gmra.mxu0 %v93
    %v315 = vpop.f32.mrf.mxu0
    %v316 = vadd.f32 %v216, %v315
    %317 = vmatmul.f32.gmra.mxu0 %v94
    %v318 = vpop.f32.mrf.mxu0
    %v319 = vadd.f32 %v219, %v318
    %320 = vdwg.mxu0
    %321 = vmatpush.msra.mxu0 %v126
    %322 = vmatpush.msra.mxu0 %v124
    %323 = vmatpush.msra.mxu0 %v122
    %324 = vmatpush.msra.mxu0 %v120
    %325 = vmatpush.msra.mxu0 %v118
    %326 = vmatpush.msra.mxu0 %v116
    %327 = vmatpush.msra.mxu0 %v114
    %328 = vmatpush.msra.mxu0 %v112
    %329 = vmatpush.msra.mxu0 %v110
    %330 = vmatpush.msra.mxu0 %v108
    %331 = vmatpush.msra.mxu0 %v106
    %332 = vmatpush.msra.mxu0 %v104
    %333 = vmatpush.msra.mxu0 %v102
    %334 = vmatpush.msra.mxu0 %v100
    %335 = vmatpush.msra.mxu0 %v98
    %336 = vmatpush.msra.mxu0 %v96
    %337 = vmatmul.f32.gmra.mxu0 %v84
    %v338 = vpop.f32.mrf.mxu0
    %v339 = vadd.f32 %v239, %v338
    %340 = vmatmul.f32.gmra.mxu0 %v85
    %v341 = vpop.f32.mrf.mxu0
    %v342 = vadd.f32 %v242, %v341
    %343 = vmatmul.f32.gmra.mxu0 %v86
    %v344 = vpop.f32.mrf.mxu0
    %v345 = vadd.f32 %v245, %v344
    %346 = vmatmul.f32.gmra.mxu0 %v87
    %v347 = vpop.f32.mrf.mxu0
    %v348 = vadd.f32 %v248, %v347
    %349 = vmatmul.f32.gmra.mxu0 %v88
    %v350 = vpop.f32.mrf.mxu0
    %v351 = vadd.f32 %v251, %v350
    %352 = vmatmul.f32.gmra.mxu0 %v89
    %v353 = vpop.f32.mrf.mxu0
    %v354 = vadd.f32 %v254, %v353
    %355 = vmatmul.f32.gmra.mxu0 %v90
    %v356 = vpop.f32.mrf.mxu0
    %v357 = vadd.f32 %v257, %v356
    %358 = vmatmul.f32.gmra.mxu0 %v91
    %v359 = vpop.f32.mrf.mxu0
    %v360 = vadd.f32 %v260, %v359
    %361 = vmatmul.f32.gmra.mxu0 %v92
    %v362 = vpop.f32.mrf.mxu0
    %v363 = vadd.f32 %v263, %v362
    %364 = vmatmul.f32.gmra.mxu0 %v93
    %v365 = vpop.f32.mrf.mxu0
    %v366 = vadd.f32 %v266, %v365
    %367 = vmatmul.f32.gmra.mxu0 %v94
    %v368 = vpop.f32.mrf.mxu0
    %v369 = vadd.f32 %v269, %v368
    %370 = vdwg.mxu0
    %v371 = vld [vmem:[%s0 + $0x2] sm:$0xff]
    %v372 = vld [vmem:[%s0 + $0xa] sm:$0xff]
    %v373 = vld [vmem:[%s0 + $0x12] sm:$0xff]
    %v374 = vld [vmem:[%s0 + $0x1a] sm:$0xff]
    %v375 = vld [vmem:[%s0 + $0x22] sm:$0xff]
    %v376 = vld [vmem:[%s0 + $0x2a] sm:$0xff]
    %v377 = vld [vmem:[%s0 + $0x32] sm:$0xff]
    %v378 = vld [vmem:[%s0 + $0x3a] sm:$0xff]
    %v379 = vld [vmem:[%s0 + $0x42] sm:$0xff]
    %v380 = vld [vmem:[%s0 + $0x4a] sm:$0xff]
    %v381 = vld [vmem:[%s0 + $0x52] sm:$0xff]
    %s382 = scalar_lea.vmem %s1, 512
    %v383 = vld [vmem:[%s382] sm:$0xff]
    %v384 = vld [vmem:[%s382 + $0x8] sm:$0xff]
    %v385 = vld [vmem:[%s382 + $0x10] sm:$0xff]
    %v386 = vld [vmem:[%s382 + $0x18] sm:$0xff]
    %v387 = vld [vmem:[%s382 + $0x20] sm:$0xff]
    %v388 = vld [vmem:[%s382 + $0x28] sm:$0xff]
    %v389 = vld [vmem:[%s382 + $0x30] sm:$0xff]
    %v390 = vld [vmem:[%s382 + $0x38] sm:$0xff]
    %v391 = vld [vmem:[%s382 + $0x40] sm:$0xff]
    %v392 = vld [vmem:[%s382 + $0x48] sm:$0xff]
    %v393 = vld [vmem:[%s382 + $0x50] sm:$0xff]
    %v394 = vld [vmem:[%s382 + $0x58] sm:$0xff]
    %v395 = vld [vmem:[%s382 + $0x60] sm:$0xff]
    %v396 = vld [vmem:[%s382 + $0x68] sm:$0xff]
    %v397 = vld [vmem:[%s382 + $0x70] sm:$0xff]
    %v398 = vld [vmem:[%s382 + $0x78] sm:$0xff]
    %v399 = vld [vmem:[%s382 + $0x80] sm:$0xff]
    %v400 = vld [vmem:[%s382 + $0x88] sm:$0xff]
    %v401 = vld [vmem:[%s382 + $0x90] sm:$0xff]
    %v402 = vld [vmem:[%s382 + $0x98] sm:$0xff]
    %v403 = vld [vmem:[%s382 + $0xa0] sm:$0xff]
    %v404 = vld [vmem:[%s382 + $0xa8] sm:$0xff]
    %v405 = vld [vmem:[%s382 + $0xb0] sm:$0xff]
    %v406 = vld [vmem:[%s382 + $0xb8] sm:$0xff]
    %v407 = vld [vmem:[%s382 + $0xc0] sm:$0xff]
    %v408 = vld [vmem:[%s382 + $0xc8] sm:$0xff]
    %v409 = vld [vmem:[%s382 + $0xd0] sm:$0xff]
    %v410 = vld [vmem:[%s382 + $0xd8] sm:$0xff]
    %v411 = vld [vmem:[%s382 + $0xe0] sm:$0xff]
    %v412 = vld [vmem:[%s382 + $0xe8] sm:$0xff]
    %v413 = vld [vmem:[%s382 + $0xf0] sm:$0xff]
    %v414 = vld [vmem:[%s382 + $0xf8] sm:$0xff]
    %415 = vmatpush.msra.mxu0 %v413
    %416 = vmatpush.msra.mxu0 %v411
    %417 = vmatpush.msra.mxu0 %v409
    %418 = vmatpush.msra.mxu0 %v407
    %419 = vmatpush.msra.mxu0 %v405
    %420 = vmatpush.msra.mxu0 %v403
    %421 = vmatpush.msra.mxu0 %v401
    %422 = vmatpush.msra.mxu0 %v399
    %423 = vmatpush.msra.mxu0 %v397
    %424 = vmatpush.msra.mxu0 %v395
    %425 = vmatpush.msra.mxu0 %v393
    %426 = vmatpush.msra.mxu0 %v391
    %427 = vmatpush.msra.mxu0 %v389
    %428 = vmatpush.msra.mxu0 %v387
    %429 = vmatpush.msra.mxu0 %v385
    %430 = vmatpush.msra.mxu0 %v383
    %431 = vmatmul.f32.gmra.mxu0 %v371
    %v432 = vpop.f32.mrf.mxu0
    %v433 = vadd.f32 0.0, %v432
    %434 = vmatmul.f32.gmra.mxu0 %v372
    %v435 = vpop.f32.mrf.mxu0
    %v436 = vadd.f32 0.0, %v435
    %437 = vmatmul.f32.gmra.mxu0 %v373
    %v438 = vpop.f32.mrf.mxu0
    %v439 = vadd.f32 0.0, %v438
    %440 = vmatmul.f32.gmra.mxu0 %v374
    %v441 = vpop.f32.mrf.mxu0
    %v442 = vadd.f32 0.0, %v441
    %443 = vmatmul.f32.gmra.mxu0 %v375
    %v444 = vpop.f32.mrf.mxu0
    %v445 = vadd.f32 0.0, %v444
    %446 = vmatmul.f32.gmra.mxu0 %v376
    %v447 = vpop.f32.mrf.mxu0
    %v448 = vadd.f32 0.0, %v447
    %449 = vmatmul.f32.gmra.mxu0 %v377
    %v450 = vpop.f32.mrf.mxu0
    %v451 = vadd.f32 0.0, %v450
    %452 = vmatmul.f32.gmra.mxu0 %v378
    %v453 = vpop.f32.mrf.mxu0
    %v454 = vadd.f32 0.0, %v453
    %455 = vmatmul.f32.gmra.mxu0 %v379
    %v456 = vpop.f32.mrf.mxu0
    %v457 = vadd.f32 0.0, %v456
    %458 = vmatmul.f32.gmra.mxu0 %v380
    %v459 = vpop.f32.mrf.mxu0
    %v460 = vadd.f32 0.0, %v459
    %461 = vmatmul.f32.gmra.mxu0 %v381
    %v462 = vpop.f32.mrf.mxu0
    %v463 = vadd.f32 0.0, %v462
    %464 = vdwg.mxu0
    %465 = vmatpush.msra.mxu0 %v414
    %466 = vmatpush.msra.mxu0 %v412
    %467 = vmatpush.msra.mxu0 %v410
    %468 = vmatpush.msra.mxu0 %v408
    %469 = vmatpush.msra.mxu0 %v406
    %470 = vmatpush.msra.mxu0 %v404
    %471 = vmatpush.msra.mxu0 %v402
    %472 = vmatpush.msra.mxu0 %v400
    %473 = vmatpush.msra.mxu0 %v398
    %474 = vmatpush.msra.mxu0 %v396
    %475 = vmatpush.msra.mxu0 %v394
    %476 = vmatpush.msra.mxu0 %v392
    %477 = vmatpush.msra.mxu0 %v390
    %478 = vmatpush.msra.mxu0 %v388
    %479 = vmatpush.msra.mxu0 %v386
    %480 = vmatpush.msra.mxu0 %v384
    %481 = vmatmul.f32.gmra.mxu0 %v371
    %v482 = vpop.f32.mrf.mxu0
    %v483 = vadd.f32 0.0, %v482
    %484 = vmatmul.f32.gmra.mxu0 %v372
    %v485 = vpop.f32.mrf.mxu0
    %v486 = vadd.f32 0.0, %v485
    %487 = vmatmul.f32.gmra.mxu0 %v373
    %v488 = vpop.f32.mrf.mxu0
    %v489 = vadd.f32 0.0, %v488
    %490 = vmatmul.f32.gmra.mxu0 %v374
    %v491 = vpop.f32.mrf.mxu0
    %v492 = vadd.f32 0.0, %v491
    %493 = vmatmul.f32.gmra.mxu0 %v375
    %v494 = vpop.f32.mrf.mxu0
    %v495 = vadd.f32 0.0, %v494
    %496 = vmatmul.f32.gmra.mxu0 %v376
    %v497 = vpop.f32.mrf.mxu0
    %v498 = vadd.f32 0.0, %v497
    %499 = vmatmul.f32.gmra.mxu0 %v377
    %v500 = vpop.f32.mrf.mxu0
    %v501 = vadd.f32 0.0, %v500
    %502 = vmatmul.f32.gmra.mxu0 %v378
    %v503 = vpop.f32.mrf.mxu0
    %v504 = vadd.f32 0.0, %v503
    %505 = vmatmul.f32.gmra.mxu0 %v379
    %v506 = vpop.f32.mrf.mxu0
    %v507 = vadd.f32 0.0, %v506
    %508 = vmatmul.f32.gmra.mxu0 %v380
    %v509 = vpop.f32.mrf.mxu0
    %v510 = vadd.f32 0.0, %v509
    %511 = vmatmul.f32.gmra.mxu0 %v381
    %v512 = vpop.f32.mrf.mxu0
    %v513 = vadd.f32 0.0, %v512
    %514 = vdwg.mxu0
    %v515 = vadd.f32 %v289, %v433
    %v516 = vadd.f32 %v339, %v483
    %v517 = vadd.f32 %v292, %v436
    %v518 = vadd.f32 %v342, %v486
    %v519 = vadd.f32 %v295, %v439
    %v520 = vadd.f32 %v345, %v489
    %v521 = vadd.f32 %v298, %v442
    %v522 = vadd.f32 %v348, %v492
    %v523 = vadd.f32 %v301, %v445
    %v524 = vadd.f32 %v351, %v495
    %v525 = vadd.f32 %v304, %v448
    %v526 = vadd.f32 %v354, %v498
    %v527 = vadd.f32 %v307, %v451
    %v528 = vadd.f32 %v357, %v501
    %v529 = vadd.f32 %v310, %v454
    %v530 = vadd.f32 %v360, %v504
    %v531 = vadd.f32 %v313, %v457
    %v532 = vadd.f32 %v363, %v507
    %v533 = vadd.f32 %v316, %v460
    %v534 = vadd.f32 %v366, %v510
    %v535 = vadd.f32 %v319, %v463
    %v536 = vadd.f32 %v369, %v513
    %v537 = vld [vmem:[%s0 + $0x3] sm:$0xff]
    %v538 = vld [vmem:[%s0 + $0xb] sm:$0xff]
    %v539 = vld [vmem:[%s0 + $0x13] sm:$0xff]
    %v540 = vld [vmem:[%s0 + $0x1b] sm:$0xff]
    %v541 = vld [vmem:[%s0 + $0x23] sm:$0xff]
    %v542 = vld [vmem:[%s0 + $0x2b] sm:$0xff]
    %v543 = vld [vmem:[%s0 + $0x33] sm:$0xff]
    %v544 = vld [vmem:[%s0 + $0x3b] sm:$0xff]
    %v545 = vld [vmem:[%s0 + $0x43] sm:$0xff]
    %v546 = vld [vmem:[%s0 + $0x4b] sm:$0xff]
    %v547 = vld [vmem:[%s0 + $0x53] sm:$0xff]
    %s548 = scalar_lea.vmem %s1, 768
    %v549 = vld [vmem:[%s548] sm:$0xff]
    %v550 = vld [vmem:[%s548 + $0x8] sm:$0xff]
    %v551 = vld [vmem:[%s548 + $0x10] sm:$0xff]
    %v552 = vld [vmem:[%s548 + $0x18] sm:$0xff]
    %v553 = vld [vmem:[%s548 + $0x20] sm:$0xff]
    %v554 = vld [vmem:[%s548 + $0x28] sm:$0xff]
    %v555 = vld [vmem:[%s548 + $0x30] sm:$0xff]
    %v556 = vld [vmem:[%s548 + $0x38] sm:$0xff]
    %v557 = vld [vmem:[%s548 + $0x40] sm:$0xff]
    %v558 = vld [vmem:[%s548 + $0x48] sm:$0xff]
    %v559 = vld [vmem:[%s548 + $0x50] sm:$0xff]
    %v560 = vld [vmem:[%s548 + $0x58] sm:$0xff]
    %v561 = vld [vmem:[%s548 + $0x60] sm:$0xff]
    %v562 = vld [vmem:[%s548 + $0x68] sm:$0xff]
    %v563 = vld [vmem:[%s548 + $0x70] sm:$0xff]
    %v564 = vld [vmem:[%s548 + $0x78] sm:$0xff]
    %v565 = vld [vmem:[%s548 + $0x80] sm:$0xff]
    %v566 = vld [vmem:[%s548 + $0x88] sm:$0xff]
    %v567 = vld [vmem:[%s548 + $0x90] sm:$0xff]
    %v568 = vld [vmem:[%s548 + $0x98] sm:$0xff]
    %v569 = vld [vmem:[%s548 + $0xa0] sm:$0xff]
    %v570 = vld [vmem:[%s548 + $0xa8] sm:$0xff]
    %v571 = vld [vmem:[%s548 + $0xb0] sm:$0xff]
    %v572 = vld [vmem:[%s548 + $0xb8] sm:$0xff]
    %v573 = vld [vmem:[%s548 + $0xc0] sm:$0xff]
    %v574 = vld [vmem:[%s548 + $0xc8] sm:$0xff]
    %v575 = vld [vmem:[%s548 + $0xd0] sm:$0xff]
    %v576 = vld [vmem:[%s548 + $0xd8] sm:$0xff]
    %v577 = vld [vmem:[%s548 + $0xe0] sm:$0xff]
    %v578 = vld [vmem:[%s548 + $0xe8] sm:$0xff]
    %v579 = vld [vmem:[%s548 + $0xf0] sm:$0xff]
    %v580 = vld [vmem:[%s548 + $0xf8] sm:$0xff]
    %581 = vmatpush.msra.mxu0 %v579
    %582 = vmatpush.msra.mxu0 %v577
    %583 = vmatpush.msra.mxu0 %v575
    %584 = vmatpush.msra.mxu0 %v573
    %585 = vmatpush.msra.mxu0 %v571
    %586 = vmatpush.msra.mxu0 %v569
    %587 = vmatpush.msra.mxu0 %v567
    %588 = vmatpush.msra.mxu0 %v565
    %589 = vmatpush.msra.mxu0 %v563
    %590 = vmatpush.msra.mxu0 %v561
    %591 = vmatpush.msra.mxu0 %v559
    %592 = vmatpush.msra.mxu0 %v557
    %593 = vmatpush.msra.mxu0 %v555
    %594 = vmatpush.msra.mxu0 %v553
    %595 = vmatpush.msra.mxu0 %v551
    %596 = vmatpush.msra.mxu0 %v549
    %597 = vmatmul.f32.gmra.mxu0 %v537
    %v598 = vpop.f32.mrf.mxu0
    %v599 = vadd.f32 0.0, %v598
    %600 = vmatmul.f32.gmra.mxu0 %v538
    %v601 = vpop.f32.mrf.mxu0
    %v602 = vadd.f32 0.0, %v601
    %603 = vmatmul.f32.gmra.mxu0 %v539
    %v604 = vpop.f32.mrf.mxu0
    %v605 = vadd.f32 0.0, %v604
    %606 = vmatmul.f32.gmra.mxu0 %v540
    %v607 = vpop.f32.mrf.mxu0
    %v608 = vadd.f32 0.0, %v607
    %609 = vmatmul.f32.gmra.mxu0 %v541
    %v610 = vpop.f32.mrf.mxu0
    %v611 = vadd.f32 0.0, %v610
    %612 = vmatmul.f32.gmra.mxu0 %v542
    %v613 = vpop.f32.mrf.mxu0
    %v614 = vadd.f32 0.0, %v613
    %615 = vmatmul.f32.gmra.mxu0 %v543
    %v616 = vpop.f32.mrf.mxu0
    %v617 = vadd.f32 0.0, %v616
    %618 = vmatmul.f32.gmra.mxu0 %v544
    %v619 = vpop.f32.mrf.mxu0
    %v620 = vadd.f32 0.0, %v619
    %621 = vmatmul.f32.gmra.mxu0 %v545
    %v622 = vpop.f32.mrf.mxu0
    %v623 = vadd.f32 0.0, %v622
    %624 = vmatmul.f32.gmra.mxu0 %v546
    %v625 = vpop.f32.mrf.mxu0
    %v626 = vadd.f32 0.0, %v625
    %627 = vmatmul.f32.gmra.mxu0 %v547
    %v628 = vpop.f32.mrf.mxu0
    %v629 = vadd.f32 0.0, %v628
    %630 = vdwg.mxu0
    %631 = vmatpush.msra.mxu0 %v580
    %632 = vmatpush.msra.mxu0 %v578
    %633 = vmatpush.msra.mxu0 %v576
    %634 = vmatpush.msra.mxu0 %v574
    %635 = vmatpush.msra.mxu0 %v572
    %636 = vmatpush.msra.mxu0 %v570
    %637 = vmatpush.msra.mxu0 %v568
    %638 = vmatpush.msra.mxu0 %v566
    %639 = vmatpush.msra.mxu0 %v564
    %640 = vmatpush.msra.mxu0 %v562
    %641 = vmatpush.msra.mxu0 %v560
    %642 = vmatpush.msra.mxu0 %v558
    %643 = vmatpush.msra.mxu0 %v556
    %644 = vmatpush.msra.mxu0 %v554
    %645 = vmatpush.msra.mxu0 %v552
    %646 = vmatpush.msra.mxu0 %v550
    %647 = vmatmul.f32.gmra.mxu0 %v537
    %v648 = vpop.f32.mrf.mxu0
    %v649 = vadd.f32 0.0, %v648
    %650 = vmatmul.f32.gmra.mxu0 %v538
    %v651 = vpop.f32.mrf.mxu0
    %v652 = vadd.f32 0.0, %v651
    %653 = vmatmul.f32.gmra.mxu0 %v539
    %v654 = vpop.f32.mrf.mxu0
    %v655 = vadd.f32 0.0, %v654
    %656 = vmatmul.f32.gmra.mxu0 %v540
    %v657 = vpop.f32.mrf.mxu0
    %v658 = vadd.f32 0.0, %v657
    %659 = vmatmul.f32.gmra.mxu0 %v541
    %v660 = vpop.f32.mrf.mxu0
    %v661 = vadd.f32 0.0, %v660
    %662 = vmatmul.f32.gmra.mxu0 %v542
    %v663 = vpop.f32.mrf.mxu0
    %v664 = vadd.f32 0.0, %v663
    %665 = vmatmul.f32.gmra.mxu0 %v543
    %v666 = vpop.f32.mrf.mxu0
    %v667 = vadd.f32 0.0, %v666
    %668 = vmatmul.f32.gmra.mxu0 %v544
    %v669 = vpop.f32.mrf.mxu0
    %v670 = vadd.f32 0.0, %v669
    %671 = vmatmul.f32.gmra.mxu0 %v545
    %v672 = vpop.f32.mrf.mxu0
    %v673 = vadd.f32 0.0, %v672
    %674 = vmatmul.f32.gmra.mxu0 %v546
    %v675 = vpop.f32.mrf.mxu0
    %v676 = vadd.f32 0.0, %v675
    %677 = vmatmul.f32.gmra.mxu0 %v547
    %v678 = vpop.f32.mrf.mxu0
    %v679 = vadd.f32 0.0, %v678
    %680 = vdwg.mxu0
    %v681 = vadd.f32 %v515, %v599
    %v682 = vadd.f32 %v516, %v649
    %v683 = vadd.f32 %v517, %v602
    %v684 = vadd.f32 %v518, %v652
    %v685 = vadd.f32 %v519, %v605
    %v686 = vadd.f32 %v520, %v655
    %v687 = vadd.f32 %v521, %v608
    %v688 = vadd.f32 %v522, %v658
    %v689 = vadd.f32 %v523, %v611
    %v690 = vadd.f32 %v524, %v661
    %v691 = vadd.f32 %v525, %v614
    %v692 = vadd.f32 %v526, %v664
    %v693 = vadd.f32 %v527, %v617
    %v694 = vadd.f32 %v528, %v667
    %v695 = vadd.f32 %v529, %v620
    %v696 = vadd.f32 %v530, %v670
    %v697 = vadd.f32 %v531, %v623
    %v698 = vadd.f32 %v532, %v673
    %v699 = vadd.f32 %v533, %v626
    %v700 = vadd.f32 %v534, %v676
    %v701 = vadd.f32 %v535, %v629
    %v702 = vadd.f32 %v536, %v679
    %v703 = vld [vmem:[%s0 + $0x4] sm:$0xff]
    %v704 = vld [vmem:[%s0 + $0xc] sm:$0xff]
    %v705 = vld [vmem:[%s0 + $0x14] sm:$0xff]
    %v706 = vld [vmem:[%s0 + $0x1c] sm:$0xff]
    %v707 = vld [vmem:[%s0 + $0x24] sm:$0xff]
    %v708 = vld [vmem:[%s0 + $0x2c] sm:$0xff]
    %v709 = vld [vmem:[%s0 + $0x34] sm:$0xff]
    %v710 = vld [vmem:[%s0 + $0x3c] sm:$0xff]
    %v711 = vld [vmem:[%s0 + $0x44] sm:$0xff]
    %v712 = vld [vmem:[%s0 + $0x4c] sm:$0xff]
    %v713 = vld [vmem:[%s0 + $0x54] sm:$0xff]
    %s714 = scalar_lea.vmem %s1, 1024
    %v715 = vld [vmem:[%s714] sm:$0xff]
    %v716 = vld [vmem:[%s714 + $0x8] sm:$0xff]
    %v717 = vld [vmem:[%s714 + $0x10] sm:$0xff]
    %v718 = vld [vmem:[%s714 + $0x18] sm:$0xff]
    %v719 = vld [vmem:[%s714 + $0x20] sm:$0xff]
    %v720 = vld [vmem:[%s714 + $0x28] sm:$0xff]
    %v721 = vld [vmem:[%s714 + $0x30] sm:$0xff]
    %v722 = vld [vmem:[%s714 + $0x38] sm:$0xff]
    %v723 = vld [vmem:[%s714 + $0x40] sm:$0xff]
    %v724 = vld [vmem:[%s714 + $0x48] sm:$0xff]
    %v725 = vld [vmem:[%s714 + $0x50] sm:$0xff]
    %v726 = vld [vmem:[%s714 + $0x58] sm:$0xff]
    %v727 = vld [vmem:[%s714 + $0x60] sm:$0xff]
    %v728 = vld [vmem:[%s714 + $0x68] sm:$0xff]
    %v729 = vld [vmem:[%s714 + $0x70] sm:$0xff]
    %v730 = vld [vmem:[%s714 + $0x78] sm:$0xff]
    %v731 = vld [vmem:[%s714 + $0x80] sm:$0xff]
    %v732 = vld [vmem:[%s714 + $0x88] sm:$0xff]
    %v733 = vld [vmem:[%s714 + $0x90] sm:$0xff]
    %v734 = vld [vmem:[%s714 + $0x98] sm:$0xff]
    %v735 = vld [vmem:[%s714 + $0xa0] sm:$0xff]
    %v736 = vld [vmem:[%s714 + $0xa8] sm:$0xff]
    %v737 = vld [vmem:[%s714 + $0xb0] sm:$0xff]
    %v738 = vld [vmem:[%s714 + $0xb8] sm:$0xff]
    %v739 = vld [vmem:[%s714 + $0xc0] sm:$0xff]
    %v740 = vld [vmem:[%s714 + $0xc8] sm:$0xff]
    %v741 = vld [vmem:[%s714 + $0xd0] sm:$0xff]
    %v742 = vld [vmem:[%s714 + $0xd8] sm:$0xff]
    %v743 = vld [vmem:[%s714 + $0xe0] sm:$0xff]
    %v744 = vld [vmem:[%s714 + $0xe8] sm:$0xff]
    %v745 = vld [vmem:[%s714 + $0xf0] sm:$0xff]
    %v746 = vld [vmem:[%s714 + $0xf8] sm:$0xff]
    %747 = vmatpush.msra.mxu0 %v745
    %748 = vmatpush.msra.mxu0 %v743
    %749 = vmatpush.msra.mxu0 %v741
    %750 = vmatpush.msra.mxu0 %v739
    %751 = vmatpush.msra.mxu0 %v737
    %752 = vmatpush.msra.mxu0 %v735
    %753 = vmatpush.msra.mxu0 %v733
    %754 = vmatpush.msra.mxu0 %v731
    %755 = vmatpush.msra.mxu0 %v729
    %756 = vmatpush.msra.mxu0 %v727
    %757 = vmatpush.msra.mxu0 %v725
    %758 = vmatpush.msra.mxu0 %v723
    %759 = vmatpush.msra.mxu0 %v721
    %760 = vmatpush.msra.mxu0 %v719
    %761 = vmatpush.msra.mxu0 %v717
    %762 = vmatpush.msra.mxu0 %v715
    %763 = vmatmul.f32.gmra.mxu0 %v703
    %v764 = vpop.f32.mrf.mxu0
    %v765 = vadd.f32 0.0, %v764
    %766 = vmatmul.f32.gmra.mxu0 %v704
    %v767 = vpop.f32.mrf.mxu0
    %v768 = vadd.f32 0.0, %v767
    %769 = vmatmul.f32.gmra.mxu0 %v705
    %v770 = vpop.f32.mrf.mxu0
    %v771 = vadd.f32 0.0, %v770
    %772 = vmatmul.f32.gmra.mxu0 %v706
    %v773 = vpop.f32.mrf.mxu0
    %v774 = vadd.f32 0.0, %v773
    %775 = vmatmul.f32.gmra.mxu0 %v707
    %v776 = vpop.f32.mrf.mxu0
    %v777 = vadd.f32 0.0, %v776
    %778 = vmatmul.f32.gmra.mxu0 %v708
    %v779 = vpop.f32.mrf.mxu0
    %v780 = vadd.f32 0.0, %v779
    %781 = vmatmul.f32.gmra.mxu0 %v709
    %v782 = vpop.f32.mrf.mxu0
    %v783 = vadd.f32 0.0, %v782
    %784 = vmatmul.f32.gmra.mxu0 %v710
    %v785 = vpop.f32.mrf.mxu0
    %v786 = vadd.f32 0.0, %v785
    %787 = vmatmul.f32.gmra.mxu0 %v711
    %v788 = vpop.f32.mrf.mxu0
    %v789 = vadd.f32 0.0, %v788
    %790 = vmatmul.f32.gmra.mxu0 %v712
    %v791 = vpop.f32.mrf.mxu0
    %v792 = vadd.f32 0.0, %v791
    %793 = vmatmul.f32.gmra.mxu0 %v713
    %v794 = vpop.f32.mrf.mxu0
    %v795 = vadd.f32 0.0, %v794
    %796 = vdwg.mxu0
    %797 = vmatpush.msra.mxu0 %v746
    %798 = vmatpush.msra.mxu0 %v744
    %799 = vmatpush.msra.mxu0 %v742
    %800 = vmatpush.msra.mxu0 %v740
    %801 = vmatpush.msra.mxu0 %v738
    %802 = vmatpush.msra.mxu0 %v736
    %803 = vmatpush.msra.mxu0 %v734
    %804 = vmatpush.msra.mxu0 %v732
    %805 = vmatpush.msra.mxu0 %v730
    %806 = vmatpush.msra.mxu0 %v728
    %807 = vmatpush.msra.mxu0 %v726
    %808 = vmatpush.msra.mxu0 %v724
    %809 = vmatpush.msra.mxu0 %v722
    %810 = vmatpush.msra.mxu0 %v720
    %811 = vmatpush.msra.mxu0 %v718
    %812 = vmatpush.msra.mxu0 %v716
    %813 = vmatmul.f32.gmra.mxu0 %v703
    %v814 = vpop.f32.mrf.mxu0
    %v815 = vadd.f32 0.0, %v814
    %816 = vmatmul.f32.gmra.mxu0 %v704
    %v817 = vpop.f32.mrf.mxu0
    %v818 = vadd.f32 0.0, %v817
    %819 = vmatmul.f32.gmra.mxu0 %v705
    %v820 = vpop.f32.mrf.mxu0
    %v821 = vadd.f32 0.0, %v820
    %822 = vmatmul.f32.gmra.mxu0 %v706
    %v823 = vpop.f32.mrf.mxu0
    %v824 = vadd.f32 0.0, %v823
    %825 = vmatmul.f32.gmra.mxu0 %v707
    %v826 = vpop.f32.mrf.mxu0
    %v827 = vadd.f32 0.0, %v826
    %828 = vmatmul.f32.gmra.mxu0 %v708
    %v829 = vpop.f32.mrf.mxu0
    %v830 = vadd.f32 0.0, %v829
    %831 = vmatmul.f32.gmra.mxu0 %v709
    %v832 = vpop.f32.mrf.mxu0
    %v833 = vadd.f32 0.0, %v832
    %834 = vmatmul.f32.gmra.mxu0 %v710
    %v835 = vpop.f32.mrf.mxu0
    %v836 = vadd.f32 0.0, %v835
    %837 = vmatmul.f32.gmra.mxu0 %v711
    %v838 = vpop.f32.mrf.mxu0
    %v839 = vadd.f32 0.0, %v838
    %840 = vmatmul.f32.gmra.mxu0 %v712
    %v841 = vpop.f32.mrf.mxu0
    %v842 = vadd.f32 0.0, %v841
    %843 = vmatmul.f32.gmra.mxu0 %v713
    %v844 = vpop.f32.mrf.mxu0
    %v845 = vadd.f32 0.0, %v844
    %846 = vdwg.mxu0
    %v847 = vadd.f32 %v681, %v765
    %v848 = vadd.f32 %v682, %v815
    %v849 = vadd.f32 %v683, %v768
    %v850 = vadd.f32 %v684, %v818
    %v851 = vadd.f32 %v685, %v771
    %v852 = vadd.f32 %v686, %v821
    %v853 = vadd.f32 %v687, %v774
    %v854 = vadd.f32 %v688, %v824
    %v855 = vadd.f32 %v689, %v777
    %v856 = vadd.f32 %v690, %v827
    %v857 = vadd.f32 %v691, %v780
    %v858 = vadd.f32 %v692, %v830
    %v859 = vadd.f32 %v693, %v783
    %v860 = vadd.f32 %v694, %v833
    %v861 = vadd.f32 %v695, %v786
    %v862 = vadd.f32 %v696, %v836
    %v863 = vadd.f32 %v697, %v789
    %v864 = vadd.f32 %v698, %v839
    %v865 = vadd.f32 %v699, %v792
    %v866 = vadd.f32 %v700, %v842
    %v867 = vadd.f32 %v701, %v795
    %v868 = vadd.f32 %v702, %v845
    %v869 = vld [vmem:[#allocation9] ss:$8 sm:$0x3]
    %v871 = vperm.slane %v869, 0
    %v872 = vperm.slane %v869, 1
    %v875 = vadd.f32 %v847, %v871
    %v876 = vadd.f32 %v848, %v872
    %v877 = vadd.f32 %v849, %v871
    %v878 = vadd.f32 %v850, %v872
    %v879 = vadd.f32 %v851, %v871
    %v880 = vadd.f32 %v852, %v872
    %v881 = vadd.f32 %v853, %v871
    %v882 = vadd.f32 %v854, %v872
    %v883 = vadd.f32 %v855, %v871
    %v884 = vadd.f32 %v856, %v872
    %v885 = vadd.f32 %v857, %v871
    %v886 = vadd.f32 %v858, %v872
    %v887 = vadd.f32 %v859, %v871
    %v888 = vadd.f32 %v860, %v872
    %v889 = vadd.f32 %v861, %v871
    %v890 = vadd.f32 %v862, %v872
    %v891 = vadd.f32 %v863, %v871
    %v892 = vadd.f32 %v864, %v872
    %v893 = vadd.f32 %v865, %v871
    %v894 = vadd.f32 %v866, %v872
    %v895 = vadd.f32 %v867, %v871
    %v896 = vadd.f32 %v868, %v872
    %v897 = vmax.f32 %v875, 0.0
    %v898 = vmax.f32 %v876, 0.0
    %v899 = vmax.f32 %v877, 0.0
    %v900 = vmax.f32 %v878, 0.0
    %v901 = vmax.f32 %v879, 0.0
    %v902 = vmax.f32 %v880, 0.0
    %v903 = vmax.f32 %v881, 0.0
    %v904 = vmax.f32 %v882, 0.0
    %v905 = vmax.f32 %v883, 0.0
    %v906 = vmax.f32 %v884, 0.0
    %v907 = vmax.f32 %v885, 0.0
    %v908 = vmax.f32 %v886, 0.0
    %v909 = vmax.f32 %v887, 0.0
    %v910 = vmax.f32 %v888, 0.0
    %v911 = vmax.f32 %v889, 0.0
    %v912 = vmax.f32 %v890, 0.0
    %v913 = vmax.f32 %v891, 0.0
    %v914 = vmax.f32 %v892, 0.0
    %v915 = vmax.f32 %v893, 0.0
    %v916 = vmax.f32 %v894, 0.0
    %v917 = vmax.f32 %v895, 0.0
    %v918 = vmax.f32 %v896, 0.0
    %919 = vst [vmem:[#allocation2] sm:$0xff] %v897
    %920 = vst [vmem:[#allocation2 + $0x8] sm:$0xff] %v898
    %921 = vst [vmem:[#allocation2 + $0x10] sm:$0xff] %v899
    %922 = vst [vmem:[#allocation2 + $0x18] sm:$0xff] %v900
    %923 = vst [vmem:[#allocation2 + $0x20] sm:$0xff] %v901
    %924 = vst [vmem:[#allocation2 + $0x28] sm:$0xff] %v902
    %925 = vst [vmem:[#allocation2 + $0x30] sm:$0xff] %v903
    %926 = vst [vmem:[#allocation2 + $0x38] sm:$0xff] %v904
    %927 = vst [vmem:[#allocation2 + $0x40] sm:$0xff] %v905
    %928 = vst [vmem:[#allocation2 + $0x48] sm:$0xff] %v906
    %929 = vst [vmem:[#allocation2 + $0x50] sm:$0xff] %v907
    %930 = vst [vmem:[#allocation2 + $0x58] sm:$0xff] %v908
    %931 = vst [vmem:[#allocation2 + $0x60] sm:$0xff] %v909
    %932 = vst [vmem:[#allocation2 + $0x68] sm:$0xff] %v910
    %933 = vst [vmem:[#allocation2 + $0x70] sm:$0xff] %v911
    %934 = vst [vmem:[#allocation2 + $0x78] sm:$0xff] %v912
    %935 = vst [vmem:[#allocation2 + $0x80] sm:$0xff] %v913
    %936 = vst [vmem:[#allocation2 + $0x88] sm:$0xff] %v914
    %937 = vst [vmem:[#allocation2 + $0x90] sm:$0xff] %v915
    %938 = vst [vmem:[#allocation2 + $0x98] sm:$0xff] %v916
    %939 = vst [vmem:[#allocation2 + $0xa0] sm:$0xff] %v917
    %940 = vst [vmem:[#allocation2 + $0xa8] sm:$0xff] %v918
    %v941 = vld [vmem:[#allocation2] sm:$0xff]
    %v942 = vld [vmem:[#allocation2 + $0x8] sm:$0xff]
    %v943 = vld [vmem:[#allocation2 + $0x10] sm:$0xff]
    %v944 = vld [vmem:[#allocation2 + $0x18] sm:$0xff]
    %v945 = vld [vmem:[#allocation2 + $0x20] sm:$0xff]
    %v946 = vld [vmem:[#allocation2 + $0x28] sm:$0xff]
    %v947 = vld [vmem:[#allocation2 + $0x30] sm:$0xff]
    %v948 = vld [vmem:[#allocation2 + $0x38] sm:$0xff]
    %v949 = vld [vmem:[#allocation2 + $0x40] sm:$0xff]
    %v950 = vld [vmem:[#allocation2 + $0x48] sm:$0xff]
    %v951 = vld [vmem:[#allocation2 + $0x50] sm:$0xff]
    %v952 = vld [vmem:[#allocation2 + $0x58] sm:$0xff]
    %v953 = vld [vmem:[#allocation2 + $0x60] sm:$0xff]
    %v954 = vld [vmem:[#allocation2 + $0x68] sm:$0xff]
    %v955 = vld [vmem:[#allocation2 + $0x70] sm:$0xff]
    %v956 = vld [vmem:[#allocation2 + $0x78] sm:$0xff]
    %v957 = vld [vmem:[#allocation2 + $0x80] sm:$0xff]
    %v958 = vld [vmem:[#allocation2 + $0x88] sm:$0xff]
    %v959 = vld [vmem:[#allocation2 + $0x90] sm:$0xff]
    %v960 = vld [vmem:[#allocation2 + $0x98] sm:$0xff]
    %v961 = vld [vmem:[#allocation2] sm:$0xfe]
    %v962 = vld [vmem:[#allocation2 + $0x8] sm:$0xfe]
    %v963 = vld [vmem:[#allocation2 + $0x10] sm:$0xff]
    %v964 = vld [vmem:[#allocation2 + $0x18] sm:$0xff]
    %v965 = vld [vmem:[#allocation2 + $0x20] sm:$0xff]
    %v966 = vld [vmem:[#allocation2 + $0x28] sm:$0xff]
    %v967 = vld [vmem:[#allocation2 + $0x30] sm:$0xff]
    %v968 = vld [vmem:[#allocation2 + $0x38] sm:$0xff]
    %v969 = vld [vmem:[#allocation2 + $0x40] sm:$0xff]
    %v970 = vld [vmem:[#allocation2 + $0x48] sm:$0xff]
    %v971 = vld [vmem:[#allocation2 + $0x50] sm:$0xff]
    %v972 = vld [vmem:[#allocation2 + $0x58] sm:$0xff]
    %v973 = vld [vmem:[#allocation2 + $0x60] sm:$0xff]
    %v974 = vld [vmem:[#allocation2 + $0x68] sm:$0xff]
    %v975 = vld [vmem:[#allocation2 + $0x70] sm:$0xff]
    %v976 = vld [vmem:[#allocation2 + $0x78] sm:$0xff]
    %v977 = vld [vmem:[#allocation2 + $0x80] sm:$0xff]
    %v978 = vld [vmem:[#allocation2 + $0x88] sm:$0xff]
    %v979 = vld [vmem:[#allocation2 + $0x90] sm:$0xff]
    %v980 = vld [vmem:[#allocation2 + $0x98] sm:$0xff]
    %v981 = vld [vmem:[#allocation2 + $0xa0] sm:$0x1]
    %v982 = vld [vmem:[#allocation2 + $0xa8] sm:$0x1]
    %vm1005 = vcmask 1046528
    %v1006 = vrot.slane %v961, 1
    %v1007 = vrot.slane %v963, 1
    %v1008 = vsel %vm1005, %v1006, %v1007
    %v1009 = vrot.slane %v962, 1
    %v1010 = vrot.slane %v964, 1
    %v1011 = vsel %vm1005, %v1009, %v1010
    %v1012 = vrot.slane %v965, 1
    %v1013 = vsel %vm1005, %v1007, %v1012
    %v1014 = vrot.slane %v966, 1
    %v1015 = vsel %vm1005, %v1010, %v1014
    %v1016 = vrot.slane %v967, 1
    %v1017 = vsel %vm1005, %v1012, %v1016
    %v1018 = vrot.slane %v968, 1
    %v1019 = vsel %vm1005, %v1014, %v1018
    %v1020 = vrot.slane %v969, 1
    %v1021 = vsel %vm1005, %v1016, %v1020
    %v1022 = vrot.slane %v970, 1
    %v1023 = vsel %vm1005, %v1018, %v1022
    %v1024 = vrot.slane %v971, 1
    %v1025 = vsel %vm1005, %v1020, %v1024
    %v1026 = vrot.slane %v972, 1
    %v1027 = vsel %vm1005, %v1022, %v1026
    %v1028 = vrot.slane %v973, 1
    %v1029 = vsel %vm1005, %v1024, %v1028
    %v1030 = vrot.slane %v974, 1
    %v1031 = vsel %vm1005, %v1026, %v1030
    %v1032 = vrot.slane %v975, 1
    %v1033 = vsel %vm1005, %v1028, %v1032
    %v1034 = vrot.slane %v976, 1
    %v1035 = vsel %vm1005, %v1030, %v1034
    %v1036 = vrot.slane %v977, 1
    %v1037 = vsel %vm1005, %v1032, %v1036
    %v1038 = vrot.slane %v978, 1
    %v1039 = vsel %vm1005, %v1034, %v1038
    %v1040 = vrot.slane %v979, 1
    %v1041 = vsel %vm1005, %v1036, %v1040
    %v1042 = vrot.slane %v980, 1
    %v1043 = vsel %vm1005, %v1038, %v1042
    %v1044 = vrot.slane %v981, 1
    %v1045 = vsel %vm1005, %v1040, %v1044
    %v1046 = vrot.slane %v982, 1
    %v1047 = vsel %vm1005, %v1042, %v1046
    %v1068 = vmax.f32 %v941, %v1008
    %v1069 = vmax.f32 %v942, %v1011
    %v1070 = vmax.f32 %v943, %v1013
    %v1071 = vmax.f32 %v944, %v1015
    %v1072 = vmax.f32 %v945, %v1017
    %v1073 = vmax.f32 %v946, %v1019
    %v1074 = vmax.f32 %v947, %v1021
    %v1075 = vmax.f32 %v948, %v1023
    %v1076 = vmax.f32 %v949, %v1025
    %v1077 = vmax.f32 %v950, %v1027
    %v1078 = vmax.f32 %v951, %v1029
    %v1079 = vmax.f32 %v952, %v1031
    %v1080 = vmax.f32 %v953, %v1033
    %v1081 = vmax.f32 %v954, %v1035
    %v1082 = vmax.f32 %v955, %v1037
    %v1083 = vmax.f32 %v956, %v1039
    %v1084 = vmax.f32 %v957, %v1041
    %v1085 = vmax.f32 %v958, %v1043
    %v1086 = vmax.f32 %v959, %v1045
    %v1087 = vmax.f32 %v960, %v1047
    %1088 = vrot.lane.b32.xlu0 %v1068, 120
    %v1089 = vpop.permute.xlu0 %1088
    %1090 = vrot.lane.b32.xlu0 %v1070, 120
    %v1091 = vpop.permute.xlu0 %1090
    %1092 = vrot.lane.b32.xlu0 %v1072, 120
    %v1093 = vpop.permute.xlu0 %1092
    %1094 = vrot.lane.b32.xlu0 %v1074, 120
    %v1095 = vpop.permute.xlu0 %1094
    %1096 = vrot.lane.b32.xlu0 %v1076, 120
    %v1097 = vpop.permute.xlu0 %1096
    %1098 = vrot.lane.b32.xlu0 %v1078, 120
    %v1099 = vpop.permute.xlu0 %1098
    %1100 = vrot.lane.b32.xlu0 %v1080, 120
    %v1101 = vpop.permute.xlu0 %1100
    %1102 = vrot.lane.b32.xlu0 %v1082, 120
    %v1103 = vpop.permute.xlu0 %1102
    %1104 = vrot.lane.b32.xlu0 %v1084, 120
    %v1105 = vpop.permute.xlu0 %1104
    %1106 = vrot.lane.b32.xlu0 %v1086, 120
    %v1107 = vpop.permute.xlu0 %1106
    %1108 = vrot.lane.b32.xlu0 %v1069, 120
    %v1109 = vpop.permute.xlu0 %1108
    %1110 = vrot.lane.b32.xlu0 %v1071, 120
    %v1111 = vpop.permute.xlu0 %1110
    %1112 = vrot.lane.b32.xlu0 %v1073, 120
    %v1113 = vpop.permute.xlu0 %1112
    %1114 = vrot.lane.b32.xlu0 %v1075, 120
    %v1115 = vpop.permute.xlu0 %1114
    %1116 = vrot.lane.b32.xlu0 %v1077, 120
    %v1117 = vpop.permute.xlu0 %1116
    %1118 = vrot.lane.b32.xlu0 %v1079, 120
    %v1119 = vpop.permute.xlu0 %1118
    %1120 = vrot.lane.b32.xlu0 %v1081, 120
    %v1121 = vpop.permute.xlu0 %1120
    %1122 = vrot.lane.b32.xlu0 %v1083, 120
    %v1123 = vpop.permute.xlu0 %1122
    %1124 = vrot.lane.b32.xlu0 %v1085, 120
    %v1125 = vpop.permute.xlu0 %1124
    %1126 = vrot.lane.b32.xlu0 %v1087, 120
    %v1127 = vpop.permute.xlu0 %1126
    %v1128 = vlaneseq
    %v1129 = vand.u32 %v1128, 127
    %vm1130 = vcmp.lt.s32.totalorder %v1129, 120
    %v1131 = vsel %vm1130, %v1089, %v1109
    %v1132 = vsel %vm1130, %v1091, %v1111
    %v1133 = vsel %vm1130, %v1093, %v1113
    %v1134 = vsel %vm1130, %v1095, %v1115
    %v1135 = vsel %vm1130, %v1097, %v1117
    %v1136 = vsel %vm1130, %v1099, %v1119
    %v1137 = vsel %vm1130, %v1101, %v1121
    %v1138 = vsel %vm1130, %v1103, %v1123
    %v1139 = vsel %vm1130, %v1105, %v1125
    %v1140 = vsel %vm1130, %v1107, %v1127
    %v1141 = vsel %vm1130, %v1109, %v1089
    %v1142 = vsel %vm1130, %v1111, %v1091
    %v1143 = vsel %vm1130, %v1113, %v1093
    %v1144 = vsel %vm1130, %v1115, %v1095
    %v1145 = vsel %vm1130, %v1117, %v1097
    %v1146 = vsel %vm1130, %v1119, %v1099
    %v1147 = vsel %vm1130, %v1121, %v1101
    %v1148 = vsel %vm1130, %v1123, %v1103
    %v1149 = vsel %vm1130, %v1125, %v1105
    %v1150 = vsel %vm1130, %v1127, %v1107
    %v1151 = vmax.f32 %v1068, %v1131
    %v1152 = vmax.f32 %v1069, %v1141
    %v1153 = vmax.f32 %v1070, %v1132
    %v1154 = vmax.f32 %v1071, %v1142
    %v1155 = vmax.f32 %v1072, %v1133
    %v1156 = vmax.f32 %v1073, %v1143
    %v1157 = vmax.f32 %v1074, %v1134
    %v1158 = vmax.f32 %v1075, %v1144
    %v1159 = vmax.f32 %v1076, %v1135
    %v1160 = vmax.f32 %v1077, %v1145
    %v1161 = vmax.f32 %v1078, %v1136
    %v1162 = vmax.f32 %v1079, %v1146
    %v1163 = vmax.f32 %v1080, %v1137
    %v1164 = vmax.f32 %v1081, %v1147
    %v1165 = vmax.f32 %v1082, %v1138
    %v1166 = vmax.f32 %v1083, %v1148
    %v1167 = vmax.f32 %v1084, %v1139
    %v1168 = vmax.f32 %v1085, %v1149
    %v1169 = vmax.f32 %v1086, %v1140
    %v1170 = vmax.f32 %v1087, %v1150
    %1171 = vst [vmem:[#allocation3] sm:$0xff] %v1151
    %1172 = vst [vmem:[#allocation3 + $0x8] sm:$0xff] %v1152
    %1173 = vst [vmem:[#allocation3 + $0x10] sm:$0xff] %v1153
    %1174 = vst [vmem:[#allocation3 + $0x18] sm:$0xff] %v1154
    %1175 = vst [vmem:[#allocation3 + $0x20] sm:$0xff] %v1155
    %1176 = vst [vmem:[#allocation3 + $0x28] sm:$0xff] %v1156
    %1177 = vst [vmem:[#allocation3 + $0x30] sm:$0xff] %v1157
    %1178 = vst [vmem:[#allocation3 + $0x38] sm:$0xff] %v1158
    %1179 = vst [vmem:[#allocation3 + $0x40] sm:$0xff] %v1159
    %1180 = vst [vmem:[#allocation3 + $0x48] sm:$0xff] %v1160
    %1181 = vst [vmem:[#allocation3 + $0x50] sm:$0xff] %v1161
    %1182 = vst [vmem:[#allocation3 + $0x58] sm:$0xff] %v1162
    %1183 = vst [vmem:[#allocation3 + $0x60] sm:$0xff] %v1163
    %1184 = vst [vmem:[#allocation3 + $0x68] sm:$0xff] %v1164
    %1185 = vst [vmem:[#allocation3 + $0x70] sm:$0xff] %v1165
    %1186 = vst [vmem:[#allocation3 + $0x78] sm:$0xff] %v1166
    %1187 = vst [vmem:[#allocation3 + $0x80] sm:$0xff] %v1167
    %1188 = vst [vmem:[#allocation3 + $0x88] sm:$0xff] %v1168
    %1189 = vst [vmem:[#allocation3 + $0x90] sm:$0xff] %v1169
    %1190 = vst [vmem:[#allocation3 + $0x98] sm:$0xff] %v1170
    %v1191 = vld [vmem:[#allocation3] sm:$0xff]
    %v1192 = vld [vmem:[#allocation3 + $0x8] sm:$0xff]
    %v1193 = vld [vmem:[#allocation3 + $0x10] sm:$0xff]
    %v1194 = vld [vmem:[#allocation3 + $0x18] sm:$0xff]
    %v1195 = vld [vmem:[#allocation3 + $0x20] sm:$0xff]
    %v1196 = vld [vmem:[#allocation3 + $0x28] sm:$0xff]
    %v1197 = vld [vmem:[#allocation3 + $0x30] sm:$0xff]
    %v1198 = vld [vmem:[#allocation3 + $0x38] sm:$0xff]
    %v1199 = vld [vmem:[#allocation3 + $0x40] sm:$0xff]
    %v1200 = vld [vmem:[#allocation3 + $0x48] sm:$0xff]
    %v1201 = vld [vmem:[#allocation3 + $0x50] sm:$0xff]
    %v1202 = vld [vmem:[#allocation3 + $0x58] sm:$0xff]
    %v1203 = vld [vmem:[#allocation3 + $0x60] sm:$0xff]
    %v1204 = vld [vmem:[#allocation3 + $0x68] sm:$0xff]
    %v1205 = vld [vmem:[#allocation3 + $0x70] sm:$0xff]
    %v1206 = vld [vmem:[#allocation3 + $0x78] sm:$0xff]
    %v1207 = vld [vmem:[#allocation3 + $0x80] sm:$0xff]
    %v1208 = vld [vmem:[#allocation3 + $0x88] sm:$0xff]
    %v1209 = vld [vmem:[#allocation4] sm:$0xff]
    %v1210 = vld [vmem:[#allocation4 + $0x8] sm:$0xff]
    %v1211 = vld [vmem:[#allocation4 + $0x10] sm:$0xff]
    %v1212 = vld [vmem:[#allocation4 + $0x18] sm:$0xff]
    %v1213 = vld [vmem:[#allocation4 + $0x20] sm:$0xff]
    %v1214 = vld [vmem:[#allocation4 + $0x28] sm:$0xff]
    %v1215 = vld [vmem:[#allocation4 + $0x30] sm:$0xff]
    %v1216 = vld [vmem:[#allocation4 + $0x38] sm:$0xff]
    %v1217 = vld [vmem:[#allocation4 + $0x40] sm:$0xff]
    %v1218 = vld [vmem:[#allocation4 + $0x48] sm:$0xff]
    %v1219 = vld [vmem:[#allocation4 + $0x50] sm:$0xff]
    %v1220 = vld [vmem:[#allocation4 + $0x58] sm:$0xff]
    %v1221 = vld [vmem:[#allocation4 + $0x60] sm:$0xff]
    %v1222 = vld [vmem:[#allocation4 + $0x68] sm:$0xff]
    %v1223 = vld [vmem:[#allocation4 + $0x70] sm:$0xff]
    %v1224 = vld [vmem:[#allocation4 + $0x78] sm:$0xff]
    %v1225 = vld [vmem:[#allocation4 + $0x80] sm:$0xff]
    %v1226 = vld [vmem:[#allocation4 + $0x88] sm:$0xff]
    %v1227 = vld [vmem:[#allocation4 + $0x90] sm:$0xff]
    %v1228 = vld [vmem:[#allocation4 + $0x98] sm:$0xff]
    %v1229 = vld [vmem:[#allocation4 + $0xa0] sm:$0xff]
    %v1230 = vld [vmem:[#allocation4 + $0xa8] sm:$0xff]
    %v1231 = vld [vmem:[#allocation4 + $0xb0] sm:$0xff]
    %v1232 = vld [vmem:[#allocation4 + $0xb8] sm:$0xff]
    %v1233 = vld [vmem:[#allocation4 + $0xc0] sm:$0xff]
    %v1234 = vld [vmem:[#allocation4 + $0xc8] sm:$0xff]
    %v1235 = vld [vmem:[#allocation4 + $0xd0] sm:$0xff]
    %v1236 = vld [vmem:[#allocation4 + $0xd8] sm:$0xff]
    %v1237 = vld [vmem:[#allocation4 + $0xe0] sm:$0xff]
    %v1238 = vld [vmem:[#allocation4 + $0xe8] sm:$0xff]
    %v1239 = vld [vmem:[#allocation4 + $0xf0] sm:$0xff]
    %v1240 = vld [vmem:[#allocation4 + $0xf8] sm:$0xff]
    %v1241 = vld [vmem:[#allocation4 + $0x100] sm:$0xff]
    %v1242 = vld [vmem:[#allocation4 + $0x108] sm:$0xff]
    %v1243 = vld [vmem:[#allocation4 + $0x110] sm:$0xff]
    %v1244 = vld [vmem:[#allocation4 + $0x118] sm:$0xff]
    %v1245 = vld [vmem:[#allocation4 + $0x120] sm:$0xff]
    %v1246 = vld [vmem:[#allocation4 + $0x128] sm:$0xff]
    %v1247 = vld [vmem:[#allocation4 + $0x130] sm:$0xff]
    %v1248 = vld [vmem:[#allocation4 + $0x138] sm:$0xff]
    %v1249 = vld [vmem:[#allocation4 + $0x140] sm:$0xff]
    %v1250 = vld [vmem:[#allocation4 + $0x148] sm:$0xff]
    %v1251 = vld [vmem:[#allocation4 + $0x150] sm:$0xff]
    %v1252 = vld [vmem:[#allocation4 + $0x158] sm:$0xff]
    %v1253 = vld [vmem:[#allocation4 + $0x160] sm:$0xff]
    %v1254 = vld [vmem:[#allocation4 + $0x168] sm:$0xff]
    %v1255 = vld [vmem:[#allocation4 + $0x170] sm:$0xff]
    %v1256 = vld [vmem:[#allocation4 + $0x178] sm:$0xff]
    %v1257 = vld [vmem:[#allocation4 + $0x180] sm:$0xff]
    %v1258 = vld [vmem:[#allocation4 + $0x188] sm:$0xff]
    %v1259 = vld [vmem:[#allocation4 + $0x190] sm:$0xff]
    %v1260 = vld [vmem:[#allocation4 + $0x198] sm:$0xff]
    %v1261 = vld [vmem:[#allocation4 + $0x1a0] sm:$0xff]
    %v1262 = vld [vmem:[#allocation4 + $0x1a8] sm:$0xff]
    %v1263 = vld [vmem:[#allocation4 + $0x1b0] sm:$0xff]
    %v1264 = vld [vmem:[#allocation4 + $0x1b8] sm:$0xff]
    %v1265 = vld [vmem:[#allocation4 + $0x1c0] sm:$0xff]
    %v1266 = vld [vmem:[#allocation4 + $0x1c8] sm:$0xff]
    %v1267 = vld [vmem:[#allocation4 + $0x1d0] sm:$0xff]
    %v1268 = vld [vmem:[#allocation4 + $0x1d8] sm:$0xff]
    %v1269 = vld [vmem:[#allocation4 + $0x1e0] sm:$0xff]
    %v1270 = vld [vmem:[#allocation4 + $0x1e8] sm:$0xff]
    %v1271 = vld [vmem:[#allocation4 + $0x1f0] sm:$0xff]
    %v1272 = vld [vmem:[#allocation4 + $0x1f8] sm:$0xff]
    %v1273 = vld [vmem:[#allocation3] sm:$0xfc]
    %v1274 = vld [vmem:[#allocation3 + $0x8] sm:$0xfc]
    %v1275 = vld [vmem:[#allocation3 + $0x10] sm:$0xff]
    %v1276 = vld [vmem:[#allocation3 + $0x18] sm:$0xff]
    %v1277 = vld [vmem:[#allocation3 + $0x20] sm:$0xff]
    %v1278 = vld [vmem:[#allocation3 + $0x28] sm:$0xff]
    %v1279 = vld [vmem:[#allocation3 + $0x30] sm:$0xff]
    %v1280 = vld [vmem:[#allocation3 + $0x38] sm:$0xff]
    %v1281 = vld [vmem:[#allocation3 + $0x40] sm:$0xff]
    %v1282 = vld [vmem:[#allocation3 + $0x48] sm:$0xff]
    %v1283 = vld [vmem:[#allocation3 + $0x50] sm:$0xff]
    %v1284 = vld [vmem:[#allocation3 + $0x58] sm:$0xff]
    %v1285 = vld [vmem:[#allocation3 + $0x60] sm:$0xff]
    %v1286 = vld [vmem:[#allocation3 + $0x68] sm:$0xff]
    %v1287 = vld [vmem:[#allocation3 + $0x70] sm:$0xff]
    %v1288 = vld [vmem:[#allocation3 + $0x78] sm:$0xff]
    %v1289 = vld [vmem:[#allocation3 + $0x80] sm:$0xff]
    %v1290 = vld [vmem:[#allocation3 + $0x88] sm:$0xff]
    %v1291 = vld [vmem:[#allocation3 + $0x90] sm:$0x3]
    %v1292 = vld [vmem:[#allocation3 + $0x98] sm:$0x3]
    %s1293 = scalar_lea.vmem [#allocation4], 512
    %v1294 = vld [vmem:[%s1293] sm:$0xff]
    %v1295 = vld [vmem:[%s1293 + $0x8] sm:$0xff]
    %v1296 = vld [vmem:[%s1293 + $0x10] sm:$0xff]
    %v1297 = vld [vmem:[%s1293 + $0x18] sm:$0xff]
    %v1298 = vld [vmem:[%s1293 + $0x20] sm:$0xff]
    %v1299 = vld [vmem:[%s1293 + $0x28] sm:$0xff]
    %v1300 = vld [vmem:[%s1293 + $0x30] sm:$0xff]
    %v1301 = vld [vmem:[%s1293 + $0x38] sm:$0xff]
    %v1302 = vld [vmem:[%s1293 + $0x40] sm:$0xff]
    %v1303 = vld [vmem:[%s1293 + $0x48] sm:$0xff]
    %v1304 = vld [vmem:[%s1293 + $0x50] sm:$0xff]
    %v1305 = vld [vmem:[%s1293 + $0x58] sm:$0xff]
    %v1306 = vld [vmem:[%s1293 + $0x60] sm:$0xff]
    %v1307 = vld [vmem:[%s1293 + $0x68] sm:$0xff]
    %v1308 = vld [vmem:[%s1293 + $0x70] sm:$0xff]
    %v1309 = vld [vmem:[%s1293 + $0x78] sm:$0xff]
    %v1310 = vld [vmem:[%s1293 + $0x80] sm:$0xff]
    %v1311 = vld [vmem:[%s1293 + $0x88] sm:$0xff]
    %v1312 = vld [vmem:[%s1293 + $0x90] sm:$0xff]
    %v1313 = vld [vmem:[%s1293 + $0x98] sm:$0xff]
    %v1314 = vld [vmem:[%s1293 + $0xa0] sm:$0xff]
    %v1315 = vld [vmem:[%s1293 + $0xa8] sm:$0xff]
    %v1316 = vld [vmem:[%s1293 + $0xb0] sm:$0xff]
    %v1317 = vld [vmem:[%s1293 + $0xb8] sm:$0xff]
    %v1318 = vld [vmem:[%s1293 + $0xc0] sm:$0xff]
    %v1319 = vld [vmem:[%s1293 + $0xc8] sm:$0xff]
    %v1320 = vld [vmem:[%s1293 + $0xd0] sm:$0xff]
    %v1321 = vld [vmem:[%s1293 + $0xd8] sm:$0xff]
    %v1322 = vld [vmem:[%s1293 + $0xe0] sm:$0xff]
    %v1323 = vld [vmem:[%s1293 + $0xe8] sm:$0xff]
    %v1324 = vld [vmem:[%s1293 + $0xf0] sm:$0xff]
    %v1325 = vld [vmem:[%s1293 + $0xf8] sm:$0xff]
    %v1326 = vld [vmem:[%s1293 + $0x100] sm:$0xff]
    %v1327 = vld [vmem:[%s1293 + $0x108] sm:$0xff]
    %v1328 = vld [vmem:[%s1293 + $0x110] sm:$0xff]
    %v1329 = vld [vmem:[%s1293 + $0x118] sm:$0xff]
    %v1330 = vld [vmem:[%s1293 + $0x120] sm:$0xff]
    %v1331 = vld [vmem:[%s1293 + $0x128] sm:$0xff]
    %v1332 = vld [vmem:[%s1293 + $0x130] sm:$0xff]
    %v1333 = vld [vmem:[%s1293 + $0x138] sm:$0xff]
    %v1334 = vld [vmem:[%s1293 + $0x140] sm:$0xff]
    %v1335 = vld [vmem:[%s1293 + $0x148] sm:$0xff]
    %v1336 = vld [vmem:[%s1293 + $0x150] sm:$0xff]
    %v1337 = vld [vmem:[%s1293 + $0x158] sm:$0xff]
    %v1338 = vld [vmem:[%s1293 + $0x160] sm:$0xff]
    %v1339 = vld [vmem:[%s1293 + $0x168] sm:$0xff]
    %v1340 = vld [vmem:[%s1293 + $0x170] sm:$0xff]
    %v1341 = vld [vmem:[%s1293 + $0x178] sm:$0xff]
    %v1342 = vld [vmem:[%s1293 + $0x180] sm:$0xff]
    %v1343 = vld [vmem:[%s1293 + $0x188] sm:$0xff]
    %v1344 = vld [vmem:[%s1293 + $0x190] sm:$0xff]
    %v1345 = vld [vmem:[%s1293 + $0x198] sm:$0xff]
    %v1346 = vld [vmem:[%s1293 + $0x1a0] sm:$0xff]
    %v1347 = vld [vmem:[%s1293 + $0x1a8] sm:$0xff]
    %v1348 = vld [vmem:[%s1293 + $0x1b0] sm:$0xff]
    %v1349 = vld [vmem:[%s1293 + $0x1b8] sm:$0xff]
    %v1350 = vld [vmem:[%s1293 + $0x1c0] sm:$0xff]
    %v1351 = vld [vmem:[%s1293 + $0x1c8] sm:$0xff]
    %v1352 = vld [vmem:[%s1293 + $0x1d0] sm:$0xff]
    %v1353 = vld [vmem:[%s1293 + $0x1d8] sm:$0xff]
    %v1354 = vld [vmem:[%s1293 + $0x1e0] sm:$0xff]
    %v1355 = vld [vmem:[%s1293 + $0x1e8] sm:$0xff]
    %v1356 = vld [vmem:[%s1293 + $0x1f0] sm:$0xff]
    %v1357 = vld [vmem:[%s1293 + $0x1f8] sm:$0xff]
    %vm1378 = vcmask 1045504
    %v1379 = vrot.slane %v1273, 2
    %v1380 = vrot.slane %v1275, 2
    %v1381 = vsel %vm1378, %v1379, %v1380
    %v1382 = vrot.slane %v1274, 2
    %v1383 = vrot.slane %v1276, 2
    %v1384 = vsel %vm1378, %v1382, %v1383
    %v1385 = vrot.slane %v1277, 2
    %v1386 = vsel %vm1378, %v1380, %v1385
    %v1387 = vrot.slane %v1278, 2
    %v1388 = vsel %vm1378, %v1383, %v1387
    %v1389 = vrot.slane %v1279, 2
    %v1390 = vsel %vm1378, %v1385, %v1389
    %v1391 = vrot.slane %v1280, 2
    %v1392 = vsel %vm1378, %v1387, %v1391
    %v1393 = vrot.slane %v1281, 2
    %v1394 = vsel %vm1378, %v1389, %v1393
    %v1395 = vrot.slane %v1282, 2
    %v1396 = vsel %vm1378, %v1391, %v1395
    %v1397 = vrot.slane %v1283, 2
    %v1398 = vsel %vm1378, %v1393, %v1397
    %v1399 = vrot.slane %v1284, 2
    %v1400 = vsel %vm1378, %v1395, %v1399
    %v1401 = vrot.slane %v1285, 2
    %v1402 = vsel %vm1378, %v1397, %v1401
    %v1403 = vrot.slane %v1286, 2
    %v1404 = vsel %vm1378, %v1399, %v1403
    %v1405 = vrot.slane %v1287, 2
    %v1406 = vsel %vm1378, %v1401, %v1405
    %v1407 = vrot.slane %v1288, 2
    %v1408 = vsel %vm1378, %v1403, %v1407
    %v1409 = vrot.slane %v1289, 2
    %v1410 = vsel %vm1378, %v1405, %v1409
    %v1411 = vrot.slane %v1290, 2
    %v1412 = vsel %vm1378, %v1407, %v1411
    %v1413 = vrot.slane %v1291, 2
    %v1414 = vsel %vm1378, %v1409, %v1413
    %v1415 = vrot.slane %v1292, 2
    %v1416 = vsel %vm1378, %v1411, %v1415
    %1435 = vmatpush.msra.mxu0 %v1324
    %1436 = vmatpush.msra.mxu0 %v1322
    %1437 = vmatpush.msra.mxu0 %v1320
    %1438 = vmatpush.msra.mxu0 %v1318
    %1439 = vmatpush.msra.mxu0 %v1316
    %1440 = vmatpush.msra.mxu0 %v1314
    %1441 = vmatpush.msra.mxu0 %v1312
    %1442 = vmatpush.msra.mxu0 %v1310
    %1443 = vmatpush.msra.mxu0 %v1308
    %1444 = vmatpush.msra.mxu0 %v1306
    %1445 = vmatpush.msra.mxu0 %v1304
    %1446 = vmatpush.msra.mxu0 %v1302
    %1447 = vmatpush.msra.mxu0 %v1300
    %1448 = vmatpush.msra.mxu0 %v1298
    %1449 = vmatpush.msra.mxu0 %v1296
    %1450 = vmatpush.msra.mxu0 %v1294
    %1451 = vmatmul.f32.gmra.mxu0 %v1381
    %v1452 = vpop.f32.mrf.mxu0
    %v1453 = vadd.f32 0.0, %v1452
    %1454 = vmatmul.f32.gmra.mxu0 %v1386
    %v1455 = vpop.f32.mrf.mxu0
    %v1456 = vadd.f32 0.0, %v1455
    %1457 = vmatmul.f32.gmra.mxu0 %v1390
    %v1458 = vpop.f32.mrf.mxu0
    %v1459 = vadd.f32 0.0, %v1458
    %1460 = vmatmul.f32.gmra.mxu0 %v1394
    %v1461 = vpop.f32.mrf.mxu0
    %v1462 = vadd.f32 0.0, %v1461
    %1463 = vmatmul.f32.gmra.mxu0 %v1398
    %v1464 = vpop.f32.mrf.mxu0
    %v1465 = vadd.f32 0.0, %v1464
    %1466 = vmatmul.f32.gmra.mxu0 %v1402
    %v1467 = vpop.f32.mrf.mxu0
    %v1468 = vadd.f32 0.0, %v1467
    %1469 = vmatmul.f32.gmra.mxu0 %v1406
    %v1470 = vpop.f32.mrf.mxu0
    %v1471 = vadd.f32 0.0, %v1470
    %1472 = vmatmul.f32.gmra.mxu0 %v1410
    %v1473 = vpop.f32.mrf.mxu0
    %v1474 = vadd.f32 0.0, %v1473
    %1475 = vmatmul.f32.gmra.mxu0 %v1414
    %v1476 = vpop.f32.mrf.mxu0
    %v1477 = vadd.f32 0.0, %v1476
    %1478 = vdwg.mxu0
    %1479 = vmatpush.msra.mxu0 %v1356
    %1480 = vmatpush.msra.mxu0 %v1354
    %1481 = vmatpush.msra.mxu0 %v1352
    %1482 = vmatpush.msra.mxu0 %v1350
    %1483 = vmatpush.msra.mxu0 %v1348
    %1484 = vmatpush.msra.mxu0 %v1346
    %1485 = vmatpush.msra.mxu0 %v1344
    %1486 = vmatpush.msra.mxu0 %v1342
    %1487 = vmatpush.msra.mxu0 %v1340
    %1488 = vmatpush.msra.mxu0 %v1338
    %1489 = vmatpush.msra.mxu0 %v1336
    %1490 = vmatpush.msra.mxu0 %v1334
    %1491 = vmatpush.msra.mxu0 %v1332
    %1492 = vmatpush.msra.mxu0 %v1330
    %1493 = vmatpush.msra.mxu0 %v1328
    %1494 = vmatpush.msra.mxu0 %v1326
    %1495 = vmatmul.f32.gmra.mxu0 %v1384
    %v1496 = vpop.f32.mrf.mxu0
    %v1497 = vadd.f32 %v1453, %v1496
    %1498 = vmatmul.f32.gmra.mxu0 %v1388
    %v1499 = vpop.f32.mrf.mxu0
    %v1500 = vadd.f32 %v1456, %v1499
    %1501 = vmatmul.f32.gmra.mxu0 %v1392
    %v1502 = vpop.f32.mrf.mxu0
    %v1503 = vadd.f32 %v1459, %v1502
    %1504 = vmatmul.f32.gmra.mxu0 %v1396
    %v1505 = vpop.f32.mrf.mxu0
    %v1506 = vadd.f32 %v1462, %v1505
    %1507 = vmatmul.f32.gmra.mxu0 %v1400
    %v1508 = vpop.f32.mrf.mxu0
    %v1509 = vadd.f32 %v1465, %v1508
    %1510 = vmatmul.f32.gmra.mxu0 %v1404
    %v1511 = vpop.f32.mrf.mxu0
    %v1512 = vadd.f32 %v1468, %v1511
    %1513 = vmatmul.f32.gmra.mxu0 %v1408
    %v1514 = vpop.f32.mrf.mxu0
    %v1515 = vadd.f32 %v1471, %v1514
    %1516 = vmatmul.f32.gmra.mxu0 %v1412
    %v1517 = vpop.f32.mrf.mxu0
    %v1518 = vadd.f32 %v1474, %v1517
    %1519 = vmatmul.f32.gmra.mxu0 %v1416
    %v1520 = vpop.f32.mrf.mxu0
    %v1521 = vadd.f32 %v1477, %v1520
    %1522 = vdwg.mxu0
    %1523 = vmatpush.msra.mxu0 %v1325
    %1524 = vmatpush.msra.mxu0 %v1323
    %1525 = vmatpush.msra.mxu0 %v1321
    %1526 = vmatpush.msra.mxu0 %v1319
    %1527 = vmatpush.msra.mxu0 %v1317
    %1528 = vmatpush.msra.mxu0 %v1315
    %1529 = vmatpush.msra.mxu0 %v1313
    %1530 = vmatpush.msra.mxu0 %v1311
    %1531 = vmatpush.msra.mxu0 %v1309
    %1532 = vmatpush.msra.mxu0 %v1307
    %1533 = vmatpush.msra.mxu0 %v1305
    %1534 = vmatpush.msra.mxu0 %v1303
    %1535 = vmatpush.msra.mxu0 %v1301
    %1536 = vmatpush.msra.mxu0 %v1299
    %1537 = vmatpush.msra.mxu0 %v1297
    %1538 = vmatpush.msra.mxu0 %v1295
    %1539 = vmatmul.f32.gmra.mxu0 %v1381
    %v1540 = vpop.f32.mrf.mxu0
    %v1541 = vadd.f32 0.0, %v1540
    %1542 = vmatmul.f32.gmra.mxu0 %v1386
    %v1543 = vpop.f32.mrf.mxu0
    %v1544 = vadd.f32 0.0, %v1543
    %1545 = vmatmul.f32.gmra.mxu0 %v1390
    %v1546 = vpop.f32.mrf.mxu0
    %v1547 = vadd.f32 0.0, %v1546
    %1548 = vmatmul.f32.gmra.mxu0 %v1394
    %v1549 = vpop.f32.mrf.mxu0
    %v1550 = vadd.f32 0.0, %v1549
    %1551 = vmatmul.f32.gmra.mxu0 %v1398
    %v1552 = vpop.f32.mrf.mxu0
    %v1553 = vadd.f32 0.0, %v1552
    %1554 = vmatmul.f32.gmra.mxu0 %v1402
    %v1555 = vpop.f32.mrf.mxu0
    %v1556 = vadd.f32 0.0, %v1555
    %1557 = vmatmul.f32.gmra.mxu0 %v1406
    %v1558 = vpop.f32.mrf.mxu0
    %v1559 = vadd.f32 0.0, %v1558
    %1560 = vmatmul.f32.gmra.mxu0 %v1410
    %v1561 = vpop.f32.mrf.mxu0
    %v1562 = vadd.f32 0.0, %v1561
    %1563 = vmatmul.f32.gmra.mxu0 %v1414
    %v1564 = vpop.f32.mrf.mxu0
    %v1565 = vadd.f32 0.0, %v1564
    %1566 = vdwg.mxu0
    %1567 = vmatpush.msra.mxu0 %v1357
    %1568 = vmatpush.msra.mxu0 %v1355
    %1569 = vmatpush.msra.mxu0 %v1353
    %1570 = vmatpush.msra.mxu0 %v1351
    %1571 = vmatpush.msra.mxu0 %v1349
    %1572 = vmatpush.msra.mxu0 %v1347
    %1573 = vmatpush.msra.mxu0 %v1345
    %1574 = vmatpush.msra.mxu0 %v1343
    %1575 = vmatpush.msra.mxu0 %v1341
    %1576 = vmatpush.msra.mxu0 %v1339
    %1577 = vmatpush.msra.mxu0 %v1337
    %1578 = vmatpush.msra.mxu0 %v1335
    %1579 = vmatpush.msra.mxu0 %v1333
    %1580 = vmatpush.msra.mxu0 %v1331
    %1581 = vmatpush.msra.mxu0 %v1329
    %1582 = vmatpush.msra.mxu0 %v1327
    %1583 = vmatmul.f32.gmra.mxu0 %v1384
    %v1584 = vpop.f32.mrf.mxu0
    %v1585 = vadd.f32 %v1541, %v1584
    %1586 = vmatmul.f32.gmra.mxu0 %v1388
    %v1587 = vpop.f32.mrf.mxu0
    %v1588 = vadd.f32 %v1544, %v1587
    %1589 = vmatmul.f32.gmra.mxu0 %v1392
    %v1590 = vpop.f32.mrf.mxu0
    %v1591 = vadd.f32 %v1547, %v1590
    %1592 = vmatmul.f32.gmra.mxu0 %v1396
    %v1593 = vpop.f32.mrf.mxu0
    %v1594 = vadd.f32 %v1550, %v1593
    %1595 = vmatmul.f32.gmra.mxu0 %v1400
    %v1596 = vpop.f32.mrf.mxu0
    %v1597 = vadd.f32 %v1553, %v1596
    %1598 = vmatmul.f32.gmra.mxu0 %v1404
    %v1599 = vpop.f32.mrf.mxu0
    %v1600 = vadd.f32 %v1556, %v1599
    %1601 = vmatmul.f32.gmra.mxu0 %v1408
    %v1602 = vpop.f32.mrf.mxu0
    %v1603 = vadd.f32 %v1559, %v1602
    %1604 = vmatmul.f32.gmra.mxu0 %v1412
    %v1605 = vpop.f32.mrf.mxu0
    %v1606 = vadd.f32 %v1562, %v1605
    %1607 = vmatmul.f32.gmra.mxu0 %v1416
    %v1608 = vpop.f32.mrf.mxu0
    %v1609 = vadd.f32 %v1565, %v1608
    %1610 = vdwg.mxu0
    %1611 = vmatpush.msra.mxu0 %v1239
    %1612 = vmatpush.msra.mxu0 %v1237
    %1613 = vmatpush.msra.mxu0 %v1235
    %1614 = vmatpush.msra.mxu0 %v1233
    %1615 = vmatpush.msra.mxu0 %v1231
    %1616 = vmatpush.msra.mxu0 %v1229
    %1617 = vmatpush.msra.mxu0 %v1227
    %1618 = vmatpush.msra.mxu0 %v1225
    %1619 = vmatpush.msra.mxu0 %v1223
    %1620 = vmatpush.msra.mxu0 %v1221
    %1621 = vmatpush.msra.mxu0 %v1219
    %1622 = vmatpush.msra.mxu0 %v1217
    %1623 = vmatpush.msra.mxu0 %v1215
    %1624 = vmatpush.msra.mxu0 %v1213
    %1625 = vmatpush.msra.mxu0 %v1211
    %1626 = vmatpush.msra.mxu0 %v1209
    %1627 = vmatmul.f32.gmra.mxu0 %v1191
    %v1628 = vpop.f32.mrf.mxu0
    %v1629 = vadd.f32 %v1497, %v1628
    %1630 = vmatmul.f32.gmra.mxu0 %v1193
    %v1631 = vpop.f32.mrf.mxu0
    %v1632 = vadd.f32 %v1500, %v1631
    %1633 = vmatmul.f32.gmra.mxu0 %v1195
    %v1634 = vpop.f32.mrf.mxu0
    %v1635 = vadd.f32 %v1503, %v1634
    %1636 = vmatmul.f32.gmra.mxu0 %v1197
    %v1637 = vpop.f32.mrf.mxu0
    %v1638 = vadd.f32 %v1506, %v1637
    %1639 = vmatmul.f32.gmra.mxu0 %v1199
    %v1640 = vpop.f32.mrf.mxu0
    %v1641 = vadd.f32 %v1509, %v1640
    %1642 = vmatmul.f32.gmra.mxu0 %v1201
    %v1643 = vpop.f32.mrf.mxu0
    %v1644 = vadd.f32 %v1512, %v1643
    %1645 = vmatmul.f32.gmra.mxu0 %v1203
    %v1646 = vpop.f32.mrf.mxu0
    %v1647 = vadd.f32 %v1515, %v1646
    %1648 = vmatmul.f32.gmra.mxu0 %v1205
    %v1649 = vpop.f32.mrf.mxu0
    %v1650 = vadd.f32 %v1518, %v1649
    %1651 = vmatmul.f32.gmra.mxu0 %v1207
    %v1652 = vpop.f32.mrf.mxu0
    %v1653 = vadd.f32 %v1521, %v1652
    %1654 = vdwg.mxu0
    %1655 = vmatpush.msra.mxu0 %v1271
    %1656 = vmatpush.msra.mxu0 %v1269
    %1657 = vmatpush.msra.mxu0 %v1267
    %1658 = vmatpush.msra.mxu0 %v1265
    %1659 = vmatpush.msra.mxu0 %v1263
    %1660 = vmatpush.msra.mxu0 %v1261
    %1661 = vmatpush.msra.mxu0 %v1259
    %1662 = vmatpush.msra.mxu0 %v1257
    %1663 = vmatpush.msra.mxu0 %v1255
    %1664 = vmatpush.msra.mxu0 %v1253
    %1665 = vmatpush.msra.mxu0 %v1251
    %1666 = vmatpush.msra.mxu0 %v1249
    %1667 = vmatpush.msra.mxu0 %v1247
    %1668 = vmatpush.msra.mxu0 %v1245
    %1669 = vmatpush.msra.mxu0 %v1243
    %1670 = vmatpush.msra.mxu0 %v1241
    %1671 = vmatmul.f32.gmra.mxu0 %v1192
    %v1672 = vpop.f32.mrf.mxu0
    %v1673 = vadd.f32 %v1629, %v1672
    %1674 = vmatmul.f32.gmra.mxu0 %v1194
    %v1675 = vpop.f32.mrf.mxu0
    %v1676 = vadd.f32 %v1632, %v1675
    %1677 = vmatmul.f32.gmra.mxu0 %v1196
    %v1678 = vpop.f32.mrf.mxu0
    %v1679 = vadd.f32 %v1635, %v1678
    %1680 = vmatmul.f32.gmra.mxu0 %v1198
    %v1681 = vpop.f32.mrf.mxu0
    %v1682 = vadd.f32 %v1638, %v1681
    %1683 = vmatmul.f32.gmra.mxu0 %v1200
    %v1684 = vpop.f32.mrf.mxu0
    %v1685 = vadd.f32 %v1641, %v1684
    %1686 = vmatmul.f32.gmra.mxu0 %v1202
    %v1687 = vpop.f32.mrf.mxu0
    %v1688 = vadd.f32 %v1644, %v1687
    %1689 = vmatmul.f32.gmra.mxu0 %v1204
    %v1690 = vpop.f32.mrf.mxu0
    %v1691 = vadd.f32 %v1647, %v1690
    %1692 = vmatmul.f32.gmra.mxu0 %v1206
    %v1693 = vpop.f32.mrf.mxu0
    %v1694 = vadd.f32 %v1650, %v1693
    %1695 = vmatmul.f32.gmra.mxu0 %v1208
    %v1696 = vpop.f32.mrf.mxu0
    %v1697 = vadd.f32 %v1653, %v1696
    %1698 = vdwg.mxu0
    %1699 = vmatpush.msra.mxu0 %v1240
    %1700 = vmatpush.msra.mxu0 %v1238
    %1701 = vmatpush.msra.mxu0 %v1236
    %1702 = vmatpush.msra.mxu0 %v1234
    %1703 = vmatpush.msra.mxu0 %v1232
    %1704 = vmatpush.msra.mxu0 %v1230
    %1705 = vmatpush.msra.mxu0 %v1228
    %1706 = vmatpush.msra.mxu0 %v1226
    %1707 = vmatpush.msra.mxu0 %v1224
    %1708 = vmatpush.msra.mxu0 %v1222
    %1709 = vmatpush.msra.mxu0 %v1220
    %1710 = vmatpush.msra.mxu0 %v1218
    %1711 = vmatpush.msra.mxu0 %v1216
    %1712 = vmatpush.msra.mxu0 %v1214
    %1713 = vmatpush.msra.mxu0 %v1212
    %1714 = vmatpush.msra.mxu0 %v1210
    %1715 = vmatmul.f32.gmra.mxu0 %v1191
    %v1716 = vpop.f32.mrf.mxu0
    %v1717 = vadd.f32 %v1585, %v1716
    %1718 = vmatmul.f32.gmra.mxu0 %v1193
    %v1719 = vpop.f32.mrf.mxu0
    %v1720 = vadd.f32 %v1588, %v1719
    %1721 = vmatmul.f32.gmra.mxu0 %v1195
    %v1722 = vpop.f32.mrf.mxu0
    %v1723 = vadd.f32 %v1591, %v1722
    %1724 = vmatmul.f32.gmra.mxu0 %v1197
    %v1725 = vpop.f32.mrf.mxu0
    %v1726 = vadd.f32 %v1594, %v1725
    %1727 = vmatmul.f32.gmra.mxu0 %v1199
    %v1728 = vpop.f32.mrf.mxu0
    %v1729 = vadd.f32 %v1597, %v1728
    %1730 = vmatmul.f32.gmra.mxu0 %v1201
    %v1731 = vpop.f32.mrf.mxu0
    %v1732 = vadd.f32 %v1600, %v1731
    %1733 = vmatmul.f32.gmra.mxu0 %v1203
    %v1734 = vpop.f32.mrf.mxu0
    %v1735 = vadd.f32 %v1603, %v1734
    %1736 = vmatmul.f32.gmra.mxu0 %v1205
    %v1737 = vpop.f32.mrf.mxu0
    %v1738 = vadd.f32 %v1606, %v1737
    %1739 = vmatmul.f32.gmra.mxu0 %v1207
    %v1740 = vpop.f32.mrf.mxu0
    %v1741 = vadd.f32 %v1609, %v1740
    %1742 = vdwg.mxu0
    %1743 = vmatpush.msra.mxu0 %v1272
    %1744 = vmatpush.msra.mxu0 %v1270
    %1745 = vmatpush.msra.mxu0 %v1268
    %1746 = vmatpush.msra.mxu0 %v1266
    %1747 = vmatpush.msra.mxu0 %v1264
    %1748 = vmatpush.msra.mxu0 %v1262
    %1749 = vmatpush.msra.mxu0 %v1260
    %1750 = vmatpush.msra.mxu0 %v1258
    %1751 = vmatpush.msra.mxu0 %v1256
    %1752 = vmatpush.msra.mxu0 %v1254
    %1753 = vmatpush.msra.mxu0 %v1252
    %1754 = vmatpush.msra.mxu0 %v1250
    %1755 = vmatpush.msra.mxu0 %v1248
    %1756 = vmatpush.msra.mxu0 %v1246
    %1757 = vmatpush.msra.mxu0 %v1244
    %1758 = vmatpush.msra.mxu0 %v1242
    %1759 = vmatmul.f32.gmra.mxu0 %v1192
    %v1760 = vpop.f32.mrf.mxu0
    %v1761 = vadd.f32 %v1717, %v1760
    %1762 = vmatmul.f32.gmra.mxu0 %v1194
    %v1763 = vpop.f32.mrf.mxu0
    %v1764 = vadd.f32 %v1720, %v1763
    %1765 = vmatmul.f32.gmra.mxu0 %v1196
    %v1766 = vpop.f32.mrf.mxu0
    %v1767 = vadd.f32 %v1723, %v1766
    %1768 = vmatmul.f32.gmra.mxu0 %v1198
    %v1769 = vpop.f32.mrf.mxu0
    %v1770 = vadd.f32 %v1726, %v1769
    %1771 = vmatmul.f32.gmra.mxu0 %v1200
    %v1772 = vpop.f32.mrf.mxu0
    %v1773 = vadd.f32 %v1729, %v1772
    %1774 = vmatmul.f32.gmra.mxu0 %v1202
    %v1775 = vpop.f32.mrf.mxu0
    %v1776 = vadd.f32 %v1732, %v1775
    %1777 = vmatmul.f32.gmra.mxu0 %v1204
    %v1778 = vpop.f32.mrf.mxu0
    %v1779 = vadd.f32 %v1735, %v1778
    %1780 = vmatmul.f32.gmra.mxu0 %v1206
    %v1781 = vpop.f32.mrf.mxu0
    %v1782 = vadd.f32 %v1738, %v1781
    %1783 = vmatmul.f32.gmra.mxu0 %v1208
    %v1784 = vpop.f32.mrf.mxu0
    %v1785 = vadd.f32 %v1741, %v1784
    %1786 = vdwg.mxu0
    %v1787 = vld [vmem:[#allocation3] sm:$0xf0]
    %v1788 = vld [vmem:[#allocation3 + $0x8] sm:$0xf0]
    %v1789 = vld [vmem:[#allocation3 + $0x90] sm:$0xf]
    %v1790 = vld [vmem:[#allocation3 + $0x98] sm:$0xf]
    %s1791 = scalar_lea.vmem [#allocation4], 1024
    %v1792 = vld [vmem:[%s1791] sm:$0xff]
    %v1793 = vld [vmem:[%s1791 + $0x8] sm:$0xff]
    %v1794 = vld [vmem:[%s1791 + $0x10] sm:$0xff]
    %v1795 = vld [vmem:[%s1791 + $0x18] sm:$0xff]
    %v1796 = vld [vmem:[%s1791 + $0x20] sm:$0xff]
    %v1797 = vld [vmem:[%s1791 + $0x28] sm:$0xff]
    %v1798 = vld [vmem:[%s1791 + $0x30] sm:$0xff]
    %v1799 = vld [vmem:[%s1791 + $0x38] sm:$0xff]
    %v1800 = vld [vmem:[%s1791 + $0x40] sm:$0xff]
    %v1801 = vld [vmem:[%s1791 + $0x48] sm:$0xff]
    %v1802 = vld [vmem:[%s1791 + $0x50] sm:$0xff]
    %v1803 = vld [vmem:[%s1791 + $0x58] sm:$0xff]
    %v1804 = vld [vmem:[%s1791 + $0x60] sm:$0xff]
    %v1805 = vld [vmem:[%s1791 + $0x68] sm:$0xff]
    %v1806 = vld [vmem:[%s1791 + $0x70] sm:$0xff]
    %v1807 = vld [vmem:[%s1791 + $0x78] sm:$0xff]
    %v1808 = vld [vmem:[%s1791 + $0x80] sm:$0xff]
    %v1809 = vld [vmem:[%s1791 + $0x88] sm:$0xff]
    %v1810 = vld [vmem:[%s1791 + $0x90] sm:$0xff]
    %v1811 = vld [vmem:[%s1791 + $0x98] sm:$0xff]
    %v1812 = vld [vmem:[%s1791 + $0xa0] sm:$0xff]
    %v1813 = vld [vmem:[%s1791 + $0xa8] sm:$0xff]
    %v1814 = vld [vmem:[%s1791 + $0xb0] sm:$0xff]
    %v1815 = vld [vmem:[%s1791 + $0xb8] sm:$0xff]
    %v1816 = vld [vmem:[%s1791 + $0xc0] sm:$0xff]
    %v1817 = vld [vmem:[%s1791 + $0xc8] sm:$0xff]
    %v1818 = vld [vmem:[%s1791 + $0xd0] sm:$0xff]
    %v1819 = vld [vmem:[%s1791 + $0xd8] sm:$0xff]
    %v1820 = vld [vmem:[%s1791 + $0xe0] sm:$0xff]
    %v1821 = vld [vmem:[%s1791 + $0xe8] sm:$0xff]
    %v1822 = vld [vmem:[%s1791 + $0xf0] sm:$0xff]
    %v1823 = vld [vmem:[%s1791 + $0xf8] sm:$0xff]
    %v1824 = vld [vmem:[%s1791 + $0x100] sm:$0xff]
    %v1825 = vld [vmem:[%s1791 + $0x108] sm:$0xff]
    %v1826 = vld [vmem:[%s1791 + $0x110] sm:$0xff]
    %v1827 = vld [vmem:[%s1791 + $0x118] sm:$0xff]
    %v1828 = vld [vmem:[%s1791 + $0x120] sm:$0xff]
    %v1829 = vld [vmem:[%s1791 + $0x128] sm:$0xff]
    %v1830 = vld [vmem:[%s1791 + $0x130] sm:$0xff]
    %v1831 = vld [vmem:[%s1791 + $0x138] sm:$0xff]
    %v1832 = vld [vmem:[%s1791 + $0x140] sm:$0xff]
    %v1833 = vld [vmem:[%s1791 + $0x148] sm:$0xff]
    %v1834 = vld [vmem:[%s1791 + $0x150] sm:$0xff]
    %v1835 = vld [vmem:[%s1791 + $0x158] sm:$0xff]
    %v1836 = vld [vmem:[%s1791 + $0x160] sm:$0xff]
    %v1837 = vld [vmem:[%s1791 + $0x168] sm:$0xff]
    %v1838 = vld [vmem:[%s1791 + $0x170] sm:$0xff]
    %v1839 = vld [vmem:[%s1791 + $0x178] sm:$0xff]
    %v1840 = vld [vmem:[%s1791 + $0x180] sm:$0xff]
    %v1841 = vld [vmem:[%s1791 + $0x188] sm:$0xff]
    %v1842 = vld [vmem:[%s1791 + $0x190] sm:$0xff]
    %v1843 = vld [vmem:[%s1791 + $0x198] sm:$0xff]
    %v1844 = vld [vmem:[%s1791 + $0x1a0] sm:$0xff]
    %v1845 = vld [vmem:[%s1791 + $0x1a8] sm:$0xff]
    %v1846 = vld [vmem:[%s1791 + $0x1b0] sm:$0xff]
    %v1847 = vld [vmem:[%s1791 + $0x1b8] sm:$0xff]
    %v1848 = vld [vmem:[%s1791 + $0x1c0] sm:$0xff]
    %v1849 = vld [vmem:[%s1791 + $0x1c8] sm:$0xff]
    %v1850 = vld [vmem:[%s1791 + $0x1d0] sm:$0xff]
    %v1851 = vld [vmem:[%s1791 + $0x1d8] sm:$0xff]
    %v1852 = vld [vmem:[%s1791 + $0x1e0] sm:$0xff]
    %v1853 = vld [vmem:[%s1791 + $0x1e8] sm:$0xff]
    %v1854 = vld [vmem:[%s1791 + $0x1f0] sm:$0xff]
    %v1855 = vld [vmem:[%s1791 + $0x1f8] sm:$0xff]
    %vm1860 = vcmask 1043456
    %v1861 = vrot.slane %v1787, 4
    %v1862 = vrot.slane %v1275, 4
    %v1863 = vsel %vm1860, %v1861, %v1862
    %v1864 = vrot.slane %v1788, 4
    %v1865 = vrot.slane %v1276, 4
    %v1866 = vsel %vm1860, %v1864, %v1865
    %v1867 = vrot.slane %v1277, 4
    %v1868 = vsel %vm1860, %v1862, %v1867
    %v1869 = vrot.slane %v1278, 4
    %v1870 = vsel %vm1860, %v1865, %v1869
    %v1871 = vrot.slane %v1279, 4
    %v1872 = vsel %vm1860, %v1867, %v1871
    %v1873 = vrot.slane %v1280, 4
    %v1874 = vsel %vm1860, %v1869, %v1873
    %v1875 = vrot.slane %v1281, 4
    %v1876 = vsel %vm1860, %v1871, %v1875
    %v1877 = vrot.slane %v1282, 4
    %v1878 = vsel %vm1860, %v1873, %v1877
    %v1879 = vrot.slane %v1283, 4
    %v1880 = vsel %vm1860, %v1875, %v1879
    %v1881 = vrot.slane %v1284, 4
    %v1882 = vsel %vm1860, %v1877, %v1881
    %v1883 = vrot.slane %v1285, 4
    %v1884 = vsel %vm1860, %v1879, %v1883
    %v1885 = vrot.slane %v1286, 4
    %v1886 = vsel %vm1860, %v1881, %v1885
    %v1887 = vrot.slane %v1287, 4
    %v1888 = vsel %vm1860, %v1883, %v1887
    %v1889 = vrot.slane %v1288, 4
    %v1890 = vsel %vm1860, %v1885, %v1889
    %v1891 = vrot.slane %v1289, 4
    %v1892 = vsel %vm1860, %v1887, %v1891
    %v1893 = vrot.slane %v1290, 4
    %v1894 = vsel %vm1860, %v1889, %v1893
    %v1895 = vrot.slane %v1789, 4
    %v1896 = vsel %vm1860, %v1891, %v1895
    %v1897 = vrot.slane %v1790, 4
    %v1898 = vsel %vm1860, %v1893, %v1897
    %1917 = vmatpush.msra.mxu0 %v1822
    %1918 = vmatpush.msra.mxu0 %v1820
    %1919 = vmatpush.msra.mxu0 %v1818
    %1920 = vmatpush.msra.mxu0 %v1816
    %1921 = vmatpush.msra.mxu0 %v1814
    %1922 = vmatpush.msra.mxu0 %v1812
    %1923 = vmatpush.msra.mxu0 %v1810
    %1924 = vmatpush.msra.mxu0 %v1808
    %1925 = vmatpush.msra.mxu0 %v1806
    %1926 = vmatpush.msra.mxu0 %v1804
    %1927 = vmatpush.msra.mxu0 %v1802
    %1928 = vmatpush.msra.mxu0 %v1800
    %1929 = vmatpush.msra.mxu0 %v1798
    %1930 = vmatpush.msra.mxu0 %v1796
    %1931 = vmatpush.msra.mxu0 %v1794
    %1932 = vmatpush.msra.mxu0 %v1792
    %1933 = vmatmul.f32.gmra.mxu0 %v1863
    %v1934 = vpop.f32.mrf.mxu0
    %v1935 = vadd.f32 0.0, %v1934
    %1936 = vmatmul.f32.gmra.mxu0 %v1868
    %v1937 = vpop.f32.mrf.mxu0
    %v1938 = vadd.f32 0.0, %v1937
    %1939 = vmatmul.f32.gmra.mxu0 %v1872
    %v1940 = vpop.f32.mrf.mxu0
    %v1941 = vadd.f32 0.0, %v1940
    %1942 = vmatmul.f32.gmra.mxu0 %v1876
    %v1943 = vpop.f32.mrf.mxu0
    %v1944 = vadd.f32 0.0, %v1943
    %1945 = vmatmul.f32.gmra.mxu0 %v1880
    %v1946 = vpop.f32.mrf.mxu0
    %v1947 = vadd.f32 0.0, %v1946
    %1948 = vmatmul.f32.gmra.mxu0 %v1884
    %v1949 = vpop.f32.mrf.mxu0
    %v1950 = vadd.f32 0.0, %v1949
    %1951 = vmatmul.f32.gmra.mxu0 %v1888
    %v1952 = vpop.f32.mrf.mxu0
    %v1953 = vadd.f32 0.0, %v1952
    %1954 = vmatmul.f32.gmra.mxu0 %v1892
    %v1955 = vpop.f32.mrf.mxu0
    %v1956 = vadd.f32 0.0, %v1955
    %1957 = vmatmul.f32.gmra.mxu0 %v1896
    %v1958 = vpop.f32.mrf.mxu0
    %v1959 = vadd.f32 0.0, %v1958
    %1960 = vdwg.mxu0
    %1961 = vmatpush.msra.mxu0 %v1854
    %1962 = vmatpush.msra.mxu0 %v1852
    %1963 = vmatpush.msra.mxu0 %v1850
    %1964 = vmatpush.msra.mxu0 %v1848
    %1965 = vmatpush.msra.mxu0 %v1846
    %1966 = vmatpush.msra.mxu0 %v1844
    %1967 = vmatpush.msra.mxu0 %v1842
    %1968 = vmatpush.msra.mxu0 %v1840
    %1969 = vmatpush.msra.mxu0 %v1838
    %1970 = vmatpush.msra.mxu0 %v1836
    %1971 = vmatpush.msra.mxu0 %v1834
    %1972 = vmatpush.msra.mxu0 %v1832
    %1973 = vmatpush.msra.mxu0 %v1830
    %1974 = vmatpush.msra.mxu0 %v1828
    %1975 = vmatpush.msra.mxu0 %v1826
    %1976 = vmatpush.msra.mxu0 %v1824
    %1977 = vmatmul.f32.gmra.mxu0 %v1866
    %v1978 = vpop.f32.mrf.mxu0
    %v1979 = vadd.f32 %v1935, %v1978
    %1980 = vmatmul.f32.gmra.mxu0 %v1870
    %v1981 = vpop.f32.mrf.mxu0
    %v1982 = vadd.f32 %v1938, %v1981
    %1983 = vmatmul.f32.gmra.mxu0 %v1874
    %v1984 = vpop.f32.mrf.mxu0
    %v1985 = vadd.f32 %v1941, %v1984
    %1986 = vmatmul.f32.gmra.mxu0 %v1878
    %v1987 = vpop.f32.mrf.mxu0
    %v1988 = vadd.f32 %v1944, %v1987
    %1989 = vmatmul.f32.gmra.mxu0 %v1882
    %v1990 = vpop.f32.mrf.mxu0
    %v1991 = vadd.f32 %v1947, %v1990
    %1992 = vmatmul.f32.gmra.mxu0 %v1886
    %v1993 = vpop.f32.mrf.mxu0
    %v1994 = vadd.f32 %v1950, %v1993
    %1995 = vmatmul.f32.gmra.mxu0 %v1890
    %v1996 = vpop.f32.mrf.mxu0
    %v1997 = vadd.f32 %v1953, %v1996
    %1998 = vmatmul.f32.gmra.mxu0 %v1894
    %v1999 = vpop.f32.mrf.mxu0
    %v2000 = vadd.f32 %v1956, %v1999
    %2001 = vmatmul.f32.gmra.mxu0 %v1898
    %v2002 = vpop.f32.mrf.mxu0
    %v2003 = vadd.f32 %v1959, %v2002
    %2004 = vdwg.mxu0
    %2005 = vmatpush.msra.mxu0 %v1823
    %2006 = vmatpush.msra.mxu0 %v1821
    %2007 = vmatpush.msra.mxu0 %v1819
    %2008 = vmatpush.msra.mxu0 %v1817
    %2009 = vmatpush.msra.mxu0 %v1815
    %2010 = vmatpush.msra.mxu0 %v1813
    %2011 = vmatpush.msra.mxu0 %v1811
    %2012 = vmatpush.msra.mxu0 %v1809
    %2013 = vmatpush.msra.mxu0 %v1807
    %2014 = vmatpush.msra.mxu0 %v1805
    %2015 = vmatpush.msra.mxu0 %v1803
    %2016 = vmatpush.msra.mxu0 %v1801
    %2017 = vmatpush.msra.mxu0 %v1799
    %2018 = vmatpush.msra.mxu0 %v1797
    %2019 = vmatpush.msra.mxu0 %v1795
    %2020 = vmatpush.msra.mxu0 %v1793
    %2021 = vmatmul.f32.gmra.mxu0 %v1863
    %v2022 = vpop.f32.mrf.mxu0
    %v2023 = vadd.f32 0.0, %v2022
    %2024 = vmatmul.f32.gmra.mxu0 %v1868
    %v2025 = vpop.f32.mrf.mxu0
    %v2026 = vadd.f32 0.0, %v2025
    %2027 = vmatmul.f32.gmra.mxu0 %v1872
    %v2028 = vpop.f32.mrf.mxu0
    %v2029 = vadd.f32 0.0, %v2028
    %2030 = vmatmul.f32.gmra.mxu0 %v1876
    %v2031 = vpop.f32.mrf.mxu0
    %v2032 = vadd.f32 0.0, %v2031
    %2033 = vmatmul.f32.gmra.mxu0 %v1880
    %v2034 = vpop.f32.mrf.mxu0
    %v2035 = vadd.f32 0.0, %v2034
    %2036 = vmatmul.f32.gmra.mxu0 %v1884
    %v2037 = vpop.f32.mrf.mxu0
    %v2038 = vadd.f32 0.0, %v2037
    %2039 = vmatmul.f32.gmra.mxu0 %v1888
    %v2040 = vpop.f32.mrf.mxu0
    %v2041 = vadd.f32 0.0, %v2040
    %2042 = vmatmul.f32.gmra.mxu0 %v1892
    %v2043 = vpop.f32.mrf.mxu0
    %v2044 = vadd.f32 0.0, %v2043
    %2045 = vmatmul.f32.gmra.mxu0 %v1896
    %v2046 = vpop.f32.mrf.mxu0
    %v2047 = vadd.f32 0.0, %v2046
    %2048 = vdwg.mxu0
    %2049 = vmatpush.msra.mxu0 %v1855
    %2050 = vmatpush.msra.mxu0 %v1853
    %2051 = vmatpush.msra.mxu0 %v1851
    %2052 = vmatpush.msra.mxu0 %v1849
    %2053 = vmatpush.msra.mxu0 %v1847
    %2054 = vmatpush.msra.mxu0 %v1845
    %2055 = vmatpush.msra.mxu0 %v1843
    %2056 = vmatpush.msra.mxu0 %v1841
    %2057 = vmatpush.msra.mxu0 %v1839
    %2058 = vmatpush.msra.mxu0 %v1837
    %2059 = vmatpush.msra.mxu0 %v1835
    %2060 = vmatpush.msra.mxu0 %v1833
    %2061 = vmatpush.msra.mxu0 %v1831
    %2062 = vmatpush.msra.mxu0 %v1829
    %2063 = vmatpush.msra.mxu0 %v1827
    %2064 = vmatpush.msra.mxu0 %v1825
    %2065 = vmatmul.f32.gmra.mxu0 %v1866
    %v2066 = vpop.f32.mrf.mxu0
    %v2067 = vadd.f32 %v2023, %v2066
    %2068 = vmatmul.f32.gmra.mxu0 %v1870
    %v2069 = vpop.f32.mrf.mxu0
    %v2070 = vadd.f32 %v2026, %v2069
    %2071 = vmatmul.f32.gmra.mxu0 %v1874
    %v2072 = vpop.f32.mrf.mxu0
    %v2073 = vadd.f32 %v2029, %v2072
    %2074 = vmatmul.f32.gmra.mxu0 %v1878
    %v2075 = vpop.f32.mrf.mxu0
    %v2076 = vadd.f32 %v2032, %v2075
    %2077 = vmatmul.f32.gmra.mxu0 %v1882
    %v2078 = vpop.f32.mrf.mxu0
    %v2079 = vadd.f32 %v2035, %v2078
    %2080 = vmatmul.f32.gmra.mxu0 %v1886
    %v2081 = vpop.f32.mrf.mxu0
    %v2082 = vadd.f32 %v2038, %v2081
    %2083 = vmatmul.f32.gmra.mxu0 %v1890
    %v2084 = vpop.f32.mrf.mxu0
    %v2085 = vadd.f32 %v2041, %v2084
    %2086 = vmatmul.f32.gmra.mxu0 %v1894
    %v2087 = vpop.f32.mrf.mxu0
    %v2088 = vadd.f32 %v2044, %v2087
    %2089 = vmatmul.f32.gmra.mxu0 %v1898
    %v2090 = vpop.f32.mrf.mxu0
    %v2091 = vadd.f32 %v2047, %v2090
    %2092 = vdwg.mxu0
    %v2093 = vadd.f32 %v1673, %v1979
    %v2094 = vadd.f32 %v1761, %v2067
    %v2095 = vadd.f32 %v1676, %v1982
    %v2096 = vadd.f32 %v1764, %v2070
    %v2097 = vadd.f32 %v1679, %v1985
    %v2098 = vadd.f32 %v1767, %v2073
    %v2099 = vadd.f32 %v1682, %v1988
    %v2100 = vadd.f32 %v1770, %v2076
    %v2101 = vadd.f32 %v1685, %v1991
    %v2102 = vadd.f32 %v1773, %v2079
    %v2103 = vadd.f32 %v1688, %v1994
    %v2104 = vadd.f32 %v1776, %v2082
    %v2105 = vadd.f32 %v1691, %v1997
    %v2106 = vadd.f32 %v1779, %v2085
    %v2107 = vadd.f32 %v1694, %v2000
    %v2108 = vadd.f32 %v1782, %v2088
    %v2109 = vadd.f32 %v1697, %v2003
    %v2110 = vadd.f32 %v1785, %v2091
    %v2111 = vld [vmem:[#allocation3] sm:$0xc0]
    %v2112 = vld [vmem:[#allocation3 + $0x8] sm:$0xc0]
    %v2113 = vld [vmem:[#allocation3 + $0x90] sm:$0x3f]
    %v2114 = vld [vmem:[#allocation3 + $0x98] sm:$0x3f]
    %s2115 = scalar_lea.vmem [#allocation4], 1536
    %v2116 = vld [vmem:[%s2115] sm:$0xff]
    %v2117 = vld [vmem:[%s2115 + $0x8] sm:$0xff]
    %v2118 = vld [vmem:[%s2115 + $0x10] sm:$0xff]
    %v2119 = vld [vmem:[%s2115 + $0x18] sm:$0xff]
    %v2120 = vld [vmem:[%s2115 + $0x20] sm:$0xff]
    %v2121 = vld [vmem:[%s2115 + $0x28] sm:$0xff]
    %v2122 = vld [vmem:[%s2115 + $0x30] sm:$0xff]
    %v2123 = vld [vmem:[%s2115 + $0x38] sm:$0xff]
    %v2124 = vld [vmem:[%s2115 + $0x40] sm:$0xff]
    %v2125 = vld [vmem:[%s2115 + $0x48] sm:$0xff]
    %v2126 = vld [vmem:[%s2115 + $0x50] sm:$0xff]
    %v2127 = vld [vmem:[%s2115 + $0x58] sm:$0xff]
    %v2128 = vld [vmem:[%s2115 + $0x60] sm:$0xff]
    %v2129 = vld [vmem:[%s2115 + $0x68] sm:$0xff]
    %v2130 = vld [vmem:[%s2115 + $0x70] sm:$0xff]
    %v2131 = vld [vmem:[%s2115 + $0x78] sm:$0xff]
    %v2132 = vld [vmem:[%s2115 + $0x80] sm:$0xff]
    %v2133 = vld [vmem:[%s2115 + $0x88] sm:$0xff]
    %v2134 = vld [vmem:[%s2115 + $0x90] sm:$0xff]
    %v2135 = vld [vmem:[%s2115 + $0x98] sm:$0xff]
    %v2136 = vld [vmem:[%s2115 + $0xa0] sm:$0xff]
    %v2137 = vld [vmem:[%s2115 + $0xa8] sm:$0xff]
    %v2138 = vld [vmem:[%s2115 + $0xb0] sm:$0xff]
    %v2139 = vld [vmem:[%s2115 + $0xb8] sm:$0xff]
    %v2140 = vld [vmem:[%s2115 + $0xc0] sm:$0xff]
    %v2141 = vld [vmem:[%s2115 + $0xc8] sm:$0xff]
    %v2142 = vld [vmem:[%s2115 + $0xd0] sm:$0xff]
    %v2143 = vld [vmem:[%s2115 + $0xd8] sm:$0xff]
    %v2144 = vld [vmem:[%s2115 + $0xe0] sm:$0xff]
    %v2145 = vld [vmem:[%s2115 + $0xe8] sm:$0xff]
    %v2146 = vld [vmem:[%s2115 + $0xf0] sm:$0xff]
    %v2147 = vld [vmem:[%s2115 + $0xf8] sm:$0xff]
    %v2148 = vld [vmem:[%s2115 + $0x100] sm:$0xff]
    %v2149 = vld [vmem:[%s2115 + $0x108] sm:$0xff]
    %v2150 = vld [vmem:[%s2115 + $0x110] sm:$0xff]
    %v2151 = vld [vmem:[%s2115 + $0x118] sm:$0xff]
    %v2152 = vld [vmem:[%s2115 + $0x120] sm:$0xff]
    %v2153 = vld [vmem:[%s2115 + $0x128] sm:$0xff]
    %v2154 = vld [vmem:[%s2115 + $0x130] sm:$0xff]
    %v2155 = vld [vmem:[%s2115 + $0x138] sm:$0xff]
    %v2156 = vld [vmem:[%s2115 + $0x140] sm:$0xff]
    %v2157 = vld [vmem:[%s2115 + $0x148] sm:$0xff]
    %v2158 = vld [vmem:[%s2115 + $0x150] sm:$0xff]
    %v2159 = vld [vmem:[%s2115 + $0x158] sm:$0xff]
    %v2160 = vld [vmem:[%s2115 + $0x160] sm:$0xff]
    %v2161 = vld [vmem:[%s2115 + $0x168] sm:$0xff]
    %v2162 = vld [vmem:[%s2115 + $0x170] sm:$0xff]
    %v2163 = vld [vmem:[%s2115 + $0x178] sm:$0xff]
    %v2164 = vld [vmem:[%s2115 + $0x180] sm:$0xff]
    %v2165 = vld [vmem:[%s2115 + $0x188] sm:$0xff]
    %v2166 = vld [vmem:[%s2115 + $0x190] sm:$0xff]
    %v2167 = vld [vmem:[%s2115 + $0x198] sm:$0xff]
    %v2168 = vld [vmem:[%s2115 + $0x1a0] sm:$0xff]
    %v2169 = vld [vmem:[%s2115 + $0x1a8] sm:$0xff]
    %v2170 = vld [vmem:[%s2115 + $0x1b0] sm:$0xff]
    %v2171 = vld [vmem:[%s2115 + $0x1b8] sm:$0xff]
    %v2172 = vld [vmem:[%s2115 + $0x1c0] sm:$0xff]
    %v2173 = vld [vmem:[%s2115 + $0x1c8] sm:$0xff]
    %v2174 = vld [vmem:[%s2115 + $0x1d0] sm:$0xff]
    %v2175 = vld [vmem:[%s2115 + $0x1d8] sm:$0xff]
    %v2176 = vld [vmem:[%s2115 + $0x1e0] sm:$0xff]
    %v2177 = vld [vmem:[%s2115 + $0x1e8] sm:$0xff]
    %v2178 = vld [vmem:[%s2115 + $0x1f0] sm:$0xff]
    %v2179 = vld [vmem:[%s2115 + $0x1f8] sm:$0xff]
    %vm2184 = vcmask 1041408
    %v2185 = vrot.slane %v2111, 6
    %v2186 = vrot.slane %v1275, 6
    %v2187 = vsel %vm2184, %v2185, %v2186
    %v2188 = vrot.slane %v2112, 6
    %v2189 = vrot.slane %v1276, 6
    %v2190 = vsel %vm2184, %v2188, %v2189
    %v2191 = vrot.slane %v1277, 6
    %v2192 = vsel %vm2184, %v2186, %v2191
    %v2193 = vrot.slane %v1278, 6
    %v2194 = vsel %vm2184, %v2189, %v2193
    %v2195 = vrot.slane %v1279, 6
    %v2196 = vsel %vm2184, %v2191, %v2195
    %v2197 = vrot.slane %v1280, 6
    %v2198 = vsel %vm2184, %v2193, %v2197
    %v2199 = vrot.slane %v1281, 6
    %v2200 = vsel %vm2184, %v2195, %v2199
    %v2201 = vrot.slane %v1282, 6
    %v2202 = vsel %vm2184, %v2197, %v2201
    %v2203 = vrot.slane %v1283, 6
    %v2204 = vsel %vm2184, %v2199, %v2203
    %v2205 = vrot.slane %v1284, 6
    %v2206 = vsel %vm2184, %v2201, %v2205
    %v2207 = vrot.slane %v1285, 6
    %v2208 = vsel %vm2184, %v2203, %v2207
    %v2209 = vrot.slane %v1286, 6
    %v2210 = vsel %vm2184, %v2205, %v2209
    %v2211 = vrot.slane %v1287, 6
    %v2212 = vsel %vm2184, %v2207, %v2211
    %v2213 = vrot.slane %v1288, 6
    %v2214 = vsel %vm2184, %v2209, %v2213
    %v2215 = vrot.slane %v1289, 6
    %v2216 = vsel %vm2184, %v2211, %v2215
    %v2217 = vrot.slane %v1290, 6
    %v2218 = vsel %vm2184, %v2213, %v2217
    %v2219 = vrot.slane %v2113, 6
    %v2220 = vsel %vm2184, %v2215, %v2219
    %v2221 = vrot.slane %v2114, 6
    %v2222 = vsel %vm2184, %v2217, %v2221
    %2241 = vmatpush.msra.mxu0 %v2146
    %2242 = vmatpush.msra.mxu0 %v2144
    %2243 = vmatpush.msra.mxu0 %v2142
    %2244 = vmatpush.msra.mxu0 %v2140
    %2245 = vmatpush.msra.mxu0 %v2138
    %2246 = vmatpush.msra.mxu0 %v2136
    %2247 = vmatpush.msra.mxu0 %v2134
    %2248 = vmatpush.msra.mxu0 %v2132
    %2249 = vmatpush.msra.mxu0 %v2130
    %2250 = vmatpush.msra.mxu0 %v2128
    %2251 = vmatpush.msra.mxu0 %v2126
    %2252 = vmatpush.msra.mxu0 %v2124
    %2253 = vmatpush.msra.mxu0 %v2122
    %2254 = vmatpush.msra.mxu0 %v2120
    %2255 = vmatpush.msra.mxu0 %v2118
    %2256 = vmatpush.msra.mxu0 %v2116
    %2257 = vmatmul.f32.gmra.mxu0 %v2187
    %v2258 = vpop.f32.mrf.mxu0
    %v2259 = vadd.f32 0.0, %v2258
    %2260 = vmatmul.f32.gmra.mxu0 %v2192
    %v2261 = vpop.f32.mrf.mxu0
    %v2262 = vadd.f32 0.0, %v2261
    %2263 = vmatmul.f32.gmra.mxu0 %v2196
    %v2264 = vpop.f32.mrf.mxu0
    %v2265 = vadd.f32 0.0, %v2264
    %2266 = vmatmul.f32.gmra.mxu0 %v2200
    %v2267 = vpop.f32.mrf.mxu0
    %v2268 = vadd.f32 0.0, %v2267
    %2269 = vmatmul.f32.gmra.mxu0 %v2204
    %v2270 = vpop.f32.mrf.mxu0
    %v2271 = vadd.f32 0.0, %v2270
    %2272 = vmatmul.f32.gmra.mxu0 %v2208
    %v2273 = vpop.f32.mrf.mxu0
    %v2274 = vadd.f32 0.0, %v2273
    %2275 = vmatmul.f32.gmra.mxu0 %v2212
    %v2276 = vpop.f32.mrf.mxu0
    %v2277 = vadd.f32 0.0, %v2276
    %2278 = vmatmul.f32.gmra.mxu0 %v2216
    %v2279 = vpop.f32.mrf.mxu0
    %v2280 = vadd.f32 0.0, %v2279
    %2281 = vmatmul.f32.gmra.mxu0 %v2220
    %v2282 = vpop.f32.mrf.mxu0
    %v2283 = vadd.f32 0.0, %v2282
    %2284 = vdwg.mxu0
    %2285 = vmatpush.msra.mxu0 %v2178
    %2286 = vmatpush.msra.mxu0 %v2176
    %2287 = vmatpush.msra.mxu0 %v2174
    %2288 = vmatpush.msra.mxu0 %v2172
    %2289 = vmatpush.msra.mxu0 %v2170
    %2290 = vmatpush.msra.mxu0 %v2168
    %2291 = vmatpush.msra.mxu0 %v2166
    %2292 = vmatpush.msra.mxu0 %v2164
    %2293 = vmatpush.msra.mxu0 %v2162
    %2294 = vmatpush.msra.mxu0 %v2160
    %2295 = vmatpush.msra.mxu0 %v2158
    %2296 = vmatpush.msra.mxu0 %v2156
    %2297 = vmatpush.msra.mxu0 %v2154
    %2298 = vmatpush.msra.mxu0 %v2152
    %2299 = vmatpush.msra.mxu0 %v2150
    %2300 = vmatpush.msra.mxu0 %v2148
    %2301 = vmatmul.f32.gmra.mxu0 %v2190
    %v2302 = vpop.f32.mrf.mxu0
    %v2303 = vadd.f32 %v2259, %v2302
    %2304 = vmatmul.f32.gmra.mxu0 %v2194
    %v2305 = vpop.f32.mrf.mxu0
    %v2306 = vadd.f32 %v2262, %v2305
    %2307 = vmatmul.f32.gmra.mxu0 %v2198
    %v2308 = vpop.f32.mrf.mxu0
    %v2309 = vadd.f32 %v2265, %v2308
    %2310 = vmatmul.f32.gmra.mxu0 %v2202
    %v2311 = vpop.f32.mrf.mxu0
    %v2312 = vadd.f32 %v2268, %v2311
    %2313 = vmatmul.f32.gmra.mxu0 %v2206
    %v2314 = vpop.f32.mrf.mxu0
    %v2315 = vadd.f32 %v2271, %v2314
    %2316 = vmatmul.f32.gmra.mxu0 %v2210
    %v2317 = vpop.f32.mrf.mxu0
    %v2318 = vadd.f32 %v2274, %v2317
    %2319 = vmatmul.f32.gmra.mxu0 %v2214
    %v2320 = vpop.f32.mrf.mxu0
    %v2321 = vadd.f32 %v2277, %v2320
    %2322 = vmatmul.f32.gmra.mxu0 %v2218
    %v2323 = vpop.f32.mrf.mxu0
    %v2324 = vadd.f32 %v2280, %v2323
    %2325 = vmatmul.f32.gmra.mxu0 %v2222
    %v2326 = vpop.f32.mrf.mxu0
    %v2327 = vadd.f32 %v2283, %v2326
    %2328 = vdwg.mxu0
    %2329 = vmatpush.msra.mxu0 %v2147
    %2330 = vmatpush.msra.mxu0 %v2145
    %2331 = vmatpush.msra.mxu0 %v2143
    %2332 = vmatpush.msra.mxu0 %v2141
    %2333 = vmatpush.msra.mxu0 %v2139
    %2334 = vmatpush.msra.mxu0 %v2137
    %2335 = vmatpush.msra.mxu0 %v2135
    %2336 = vmatpush.msra.mxu0 %v2133
    %2337 = vmatpush.msra.mxu0 %v2131
    %2338 = vmatpush.msra.mxu0 %v2129
    %2339 = vmatpush.msra.mxu0 %v2127
    %2340 = vmatpush.msra.mxu0 %v2125
    %2341 = vmatpush.msra.mxu0 %v2123
    %2342 = vmatpush.msra.mxu0 %v2121
    %2343 = vmatpush.msra.mxu0 %v2119
    %2344 = vmatpush.msra.mxu0 %v2117
    %2345 = vmatmul.f32.gmra.mxu0 %v2187
    %v2346 = vpop.f32.mrf.mxu0
    %v2347 = vadd.f32 0.0, %v2346
    %2348 = vmatmul.f32.gmra.mxu0 %v2192
    %v2349 = vpop.f32.mrf.mxu0
    %v2350 = vadd.f32 0.0, %v2349
    %2351 = vmatmul.f32.gmra.mxu0 %v2196
    %v2352 = vpop.f32.mrf.mxu0
    %v2353 = vadd.f32 0.0, %v2352
    %2354 = vmatmul.f32.gmra.mxu0 %v2200
    %v2355 = vpop.f32.mrf.mxu0
    %v2356 = vadd.f32 0.0, %v2355
    %2357 = vmatmul.f32.gmra.mxu0 %v2204
    %v2358 = vpop.f32.mrf.mxu0
    %v2359 = vadd.f32 0.0, %v2358
    %2360 = vmatmul.f32.gmra.mxu0 %v2208
    %v2361 = vpop.f32.mrf.mxu0
    %v2362 = vadd.f32 0.0, %v2361
    %2363 = vmatmul.f32.gmra.mxu0 %v2212
    %v2364 = vpop.f32.mrf.mxu0
    %v2365 = vadd.f32 0.0, %v2364
    %2366 = vmatmul.f32.gmra.mxu0 %v2216
    %v2367 = vpop.f32.mrf.mxu0
    %v2368 = vadd.f32 0.0, %v2367
    %2369 = vmatmul.f32.gmra.mxu0 %v2220
    %v2370 = vpop.f32.mrf.mxu0
    %v2371 = vadd.f32 0.0, %v2370
    %2372 = vdwg.mxu0
    %2373 = vmatpush.msra.mxu0 %v2179
    %2374 = vmatpush.msra.mxu0 %v2177
    %2375 = vmatpush.msra.mxu0 %v2175
    %2376 = vmatpush.msra.mxu0 %v2173
    %2377 = vmatpush.msra.mxu0 %v2171
    %2378 = vmatpush.msra.mxu0 %v2169
    %2379 = vmatpush.msra.mxu0 %v2167
    %2380 = vmatpush.msra.mxu0 %v2165
    %2381 = vmatpush.msra.mxu0 %v2163
    %2382 = vmatpush.msra.mxu0 %v2161
    %2383 = vmatpush.msra.mxu0 %v2159
    %2384 = vmatpush.msra.mxu0 %v2157
    %2385 = vmatpush.msra.mxu0 %v2155
    %2386 = vmatpush.msra.mxu0 %v2153
    %2387 = vmatpush.msra.mxu0 %v2151
    %2388 = vmatpush.msra.mxu0 %v2149
    %2389 = vmatmul.f32.gmra.mxu0 %v2190
    %v2390 = vpop.f32.mrf.mxu0
    %v2391 = vadd.f32 %v2347, %v2390
    %2392 = vmatmul.f32.gmra.mxu0 %v2194
    %v2393 = vpop.f32.mrf.mxu0
    %v2394 = vadd.f32 %v2350, %v2393
    %2395 = vmatmul.f32.gmra.mxu0 %v2198
    %v2396 = vpop.f32.mrf.mxu0
    %v2397 = vadd.f32 %v2353, %v2396
    %2398 = vmatmul.f32.gmra.mxu0 %v2202
    %v2399 = vpop.f32.mrf.mxu0
    %v2400 = vadd.f32 %v2356, %v2399
    %2401 = vmatmul.f32.gmra.mxu0 %v2206
    %v2402 = vpop.f32.mrf.mxu0
    %v2403 = vadd.f32 %v2359, %v2402
    %2404 = vmatmul.f32.gmra.mxu0 %v2210
    %v2405 = vpop.f32.mrf.mxu0
    %v2406 = vadd.f32 %v2362, %v2405
    %2407 = vmatmul.f32.gmra.mxu0 %v2214
    %v2408 = vpop.f32.mrf.mxu0
    %v2409 = vadd.f32 %v2365, %v2408
    %2410 = vmatmul.f32.gmra.mxu0 %v2218
    %v2411 = vpop.f32.mrf.mxu0
    %v2412 = vadd.f32 %v2368, %v2411
    %2413 = vmatmul.f32.gmra.mxu0 %v2222
    %v2414 = vpop.f32.mrf.mxu0
    %v2415 = vadd.f32 %v2371, %v2414
    %2416 = vdwg.mxu0
    %v2417 = vadd.f32 %v2093, %v2303
    %v2418 = vadd.f32 %v2094, %v2391
    %v2419 = vadd.f32 %v2095, %v2306
    %v2420 = vadd.f32 %v2096, %v2394
    %v2421 = vadd.f32 %v2097, %v2309
    %v2422 = vadd.f32 %v2098, %v2397
    %v2423 = vadd.f32 %v2099, %v2312
    %v2424 = vadd.f32 %v2100, %v2400
    %v2425 = vadd.f32 %v2101, %v2315
    %v2426 = vadd.f32 %v2102, %v2403
    %v2427 = vadd.f32 %v2103, %v2318
    %v2428 = vadd.f32 %v2104, %v2406
    %v2429 = vadd.f32 %v2105, %v2321
    %v2430 = vadd.f32 %v2106, %v2409
    %v2431 = vadd.f32 %v2107, %v2324
    %v2432 = vadd.f32 %v2108, %v2412
    %v2433 = vadd.f32 %v2109, %v2327
    %v2434 = vadd.f32 %v2110, %v2415
    %v2435 = vld [vmem:[#allocation3 + $0x90] sm:$0xff]
    %v2436 = vld [vmem:[#allocation3 + $0x98] sm:$0xff]
    %s2437 = scalar_lea.vmem [#allocation4], 2048
    %v2438 = vld [vmem:[%s2437] sm:$0xff]
    %v2439 = vld [vmem:[%s2437 + $0x8] sm:$0xff]
    %v2440 = vld [vmem:[%s2437 + $0x10] sm:$0xff]
    %v2441 = vld [vmem:[%s2437 + $0x18] sm:$0xff]
    %v2442 = vld [vmem:[%s2437 + $0x20] sm:$0xff]
    %v2443 = vld [vmem:[%s2437 + $0x28] sm:$0xff]
    %v2444 = vld [vmem:[%s2437 + $0x30] sm:$0xff]
    %v2445 = vld [vmem:[%s2437 + $0x38] sm:$0xff]
    %v2446 = vld [vmem:[%s2437 + $0x40] sm:$0xff]
    %v2447 = vld [vmem:[%s2437 + $0x48] sm:$0xff]
    %v2448 = vld [vmem:[%s2437 + $0x50] sm:$0xff]
    %v2449 = vld [vmem:[%s2437 + $0x58] sm:$0xff]
    %v2450 = vld [vmem:[%s2437 + $0x60] sm:$0xff]
    %v2451 = vld [vmem:[%s2437 + $0x68] sm:$0xff]
    %v2452 = vld [vmem:[%s2437 + $0x70] sm:$0xff]
    %v2453 = vld [vmem:[%s2437 + $0x78] sm:$0xff]
    %v2454 = vld [vmem:[%s2437 + $0x80] sm:$0xff]
    %v2455 = vld [vmem:[%s2437 + $0x88] sm:$0xff]
    %v2456 = vld [vmem:[%s2437 + $0x90] sm:$0xff]
    %v2457 = vld [vmem:[%s2437 + $0x98] sm:$0xff]
    %v2458 = vld [vmem:[%s2437 + $0xa0] sm:$0xff]
    %v2459 = vld [vmem:[%s2437 + $0xa8] sm:$0xff]
    %v2460 = vld [vmem:[%s2437 + $0xb0] sm:$0xff]
    %v2461 = vld [vmem:[%s2437 + $0xb8] sm:$0xff]
    %v2462 = vld [vmem:[%s2437 + $0xc0] sm:$0xff]
    %v2463 = vld [vmem:[%s2437 + $0xc8] sm:$0xff]
    %v2464 = vld [vmem:[%s2437 + $0xd0] sm:$0xff]
    %v2465 = vld [vmem:[%s2437 + $0xd8] sm:$0xff]
    %v2466 = vld [vmem:[%s2437 + $0xe0] sm:$0xff]
    %v2467 = vld [vmem:[%s2437 + $0xe8] sm:$0xff]
    %v2468 = vld [vmem:[%s2437 + $0xf0] sm:$0xff]
    %v2469 = vld [vmem:[%s2437 + $0xf8] sm:$0xff]
    %v2470 = vld [vmem:[%s2437 + $0x100] sm:$0xff]
    %v2471 = vld [vmem:[%s2437 + $0x108] sm:$0xff]
    %v2472 = vld [vmem:[%s2437 + $0x110] sm:$0xff]
    %v2473 = vld [vmem:[%s2437 + $0x118] sm:$0xff]
    %v2474 = vld [vmem:[%s2437 + $0x120] sm:$0xff]
    %v2475 = vld [vmem:[%s2437 + $0x128] sm:$0xff]
    %v2476 = vld [vmem:[%s2437 + $0x130] sm:$0xff]
    %v2477 = vld [vmem:[%s2437 + $0x138] sm:$0xff]
    %v2478 = vld [vmem:[%s2437 + $0x140] sm:$0xff]
    %v2479 = vld [vmem:[%s2437 + $0x148] sm:$0xff]
    %v2480 = vld [vmem:[%s2437 + $0x150] sm:$0xff]
    %v2481 = vld [vmem:[%s2437 + $0x158] sm:$0xff]
    %v2482 = vld [vmem:[%s2437 + $0x160] sm:$0xff]
    %v2483 = vld [vmem:[%s2437 + $0x168] sm:$0xff]
    %v2484 = vld [vmem:[%s2437 + $0x170] sm:$0xff]
    %v2485 = vld [vmem:[%s2437 + $0x178] sm:$0xff]
    %v2486 = vld [vmem:[%s2437 + $0x180] sm:$0xff]
    %v2487 = vld [vmem:[%s2437 + $0x188] sm:$0xff]
    %v2488 = vld [vmem:[%s2437 + $0x190] sm:$0xff]
    %v2489 = vld [vmem:[%s2437 + $0x198] sm:$0xff]
    %v2490 = vld [vmem:[%s2437 + $0x1a0] sm:$0xff]
    %v2491 = vld [vmem:[%s2437 + $0x1a8] sm:$0xff]
    %v2492 = vld [vmem:[%s2437 + $0x1b0] sm:$0xff]
    %v2493 = vld [vmem:[%s2437 + $0x1b8] sm:$0xff]
    %v2494 = vld [vmem:[%s2437 + $0x1c0] sm:$0xff]
    %v2495 = vld [vmem:[%s2437 + $0x1c8] sm:$0xff]
    %v2496 = vld [vmem:[%s2437 + $0x1d0] sm:$0xff]
    %v2497 = vld [vmem:[%s2437 + $0x1d8] sm:$0xff]
    %v2498 = vld [vmem:[%s2437 + $0x1e0] sm:$0xff]
    %v2499 = vld [vmem:[%s2437 + $0x1e8] sm:$0xff]
    %v2500 = vld [vmem:[%s2437 + $0x1f0] sm:$0xff]
    %v2501 = vld [vmem:[%s2437 + $0x1f8] sm:$0xff]
    %2502 = vmatpush.msra.mxu0 %v2468
    %2503 = vmatpush.msra.mxu0 %v2466
    %2504 = vmatpush.msra.mxu0 %v2464
    %2505 = vmatpush.msra.mxu0 %v2462
    %2506 = vmatpush.msra.mxu0 %v2460
    %2507 = vmatpush.msra.mxu0 %v2458
    %2508 = vmatpush.msra.mxu0 %v2456
    %2509 = vmatpush.msra.mxu0 %v2454
    %2510 = vmatpush.msra.mxu0 %v2452
    %2511 = vmatpush.msra.mxu0 %v2450
    %2512 = vmatpush.msra.mxu0 %v2448
    %2513 = vmatpush.msra.mxu0 %v2446
    %2514 = vmatpush.msra.mxu0 %v2444
    %2515 = vmatpush.msra.mxu0 %v2442
    %2516 = vmatpush.msra.mxu0 %v2440
    %2517 = vmatpush.msra.mxu0 %v2438
    %2518 = vmatmul.f32.gmra.mxu0 %v1275
    %v2519 = vpop.f32.mrf.mxu0
    %v2520 = vadd.f32 0.0, %v2519
    %2521 = vmatmul.f32.gmra.mxu0 %v1277
    %v2522 = vpop.f32.mrf.mxu0
    %v2523 = vadd.f32 0.0, %v2522
    %2524 = vmatmul.f32.gmra.mxu0 %v1279
    %v2525 = vpop.f32.mrf.mxu0
    %v2526 = vadd.f32 0.0, %v2525
    %2527 = vmatmul.f32.gmra.mxu0 %v1281
    %v2528 = vpop.f32.mrf.mxu0
    %v2529 = vadd.f32 0.0, %v2528
    %2530 = vmatmul.f32.gmra.mxu0 %v1283
    %v2531 = vpop.f32.mrf.mxu0
    %v2532 = vadd.f32 0.0, %v2531
    %2533 = vmatmul.f32.gmra.mxu0 %v1285
    %v2534 = vpop.f32.mrf.mxu0
    %v2535 = vadd.f32 0.0, %v2534
    %2536 = vmatmul.f32.gmra.mxu0 %v1287
    %v2537 = vpop.f32.mrf.mxu0
    %v2538 = vadd.f32 0.0, %v2537
    %2539 = vmatmul.f32.gmra.mxu0 %v1289
    %v2540 = vpop.f32.mrf.mxu0
    %v2541 = vadd.f32 0.0, %v2540
    %2542 = vmatmul.f32.gmra.mxu0 %v2435
    %v2543 = vpop.f32.mrf.mxu0
    %v2544 = vadd.f32 0.0, %v2543
    %2545 = vdwg.mxu0
    %2546 = vmatpush.msra.mxu0 %v2500
    %2547 = vmatpush.msra.mxu0 %v2498
    %2548 = vmatpush.msra.mxu0 %v2496
    %2549 = vmatpush.msra.mxu0 %v2494
    %2550 = vmatpush.msra.mxu0 %v2492
    %2551 = vmatpush.msra.mxu0 %v2490
    %2552 = vmatpush.msra.mxu0 %v2488
    %2553 = vmatpush.msra.mxu0 %v2486
    %2554 = vmatpush.msra.mxu0 %v2484
    %2555 = vmatpush.msra.mxu0 %v2482
    %2556 = vmatpush.msra.mxu0 %v2480
    %2557 = vmatpush.msra.mxu0 %v2478
    %2558 = vmatpush.msra.mxu0 %v2476
    %2559 = vmatpush.msra.mxu0 %v2474
    %2560 = vmatpush.msra.mxu0 %v2472
    %2561 = vmatpush.msra.mxu0 %v2470
    %2562 = vmatmul.f32.gmra.mxu0 %v1276
    %v2563 = vpop.f32.mrf.mxu0
    %v2564 = vadd.f32 %v2520, %v2563
    %2565 = vmatmul.f32.gmra.mxu0 %v1278
    %v2566 = vpop.f32.mrf.mxu0
    %v2567 = vadd.f32 %v2523, %v2566
    %2568 = vmatmul.f32.gmra.mxu0 %v1280
    %v2569 = vpop.f32.mrf.mxu0
    %v2570 = vadd.f32 %v2526, %v2569
    %2571 = vmatmul.f32.gmra.mxu0 %v1282
    %v2572 = vpop.f32.mrf.mxu0
    %v2573 = vadd.f32 %v2529, %v2572
    %2574 = vmatmul.f32.gmra.mxu0 %v1284
    %v2575 = vpop.f32.mrf.mxu0
    %v2576 = vadd.f32 %v2532, %v2575
    %2577 = vmatmul.f32.gmra.mxu0 %v1286
    %v2578 = vpop.f32.mrf.mxu0
    %v2579 = vadd.f32 %v2535, %v2578
    %2580 = vmatmul.f32.gmra.mxu0 %v1288
    %v2581 = vpop.f32.mrf.mxu0
    %v2582 = vadd.f32 %v2538, %v2581
    %2583 = vmatmul.f32.gmra.mxu0 %v1290
    %v2584 = vpop.f32.mrf.mxu0
    %v2585 = vadd.f32 %v2541, %v2584
    %2586 = vmatmul.f32.gmra.mxu0 %v2436
    %v2587 = vpop.f32.mrf.mxu0
    %v2588 = vadd.f32 %v2544, %v2587
    %2589 = vdwg.mxu0
    %2590 = vmatpush.msra.mxu0 %v2469
    %2591 = vmatpush.msra.mxu0 %v2467
    %2592 = vmatpush.msra.mxu0 %v2465
    %2593 = vmatpush.msra.mxu0 %v2463
    %2594 = vmatpush.msra.mxu0 %v2461
    %2595 = vmatpush.msra.mxu0 %v2459
    %2596 = vmatpush.msra.mxu0 %v2457
    %2597 = vmatpush.msra.mxu0 %v2455
    %2598 = vmatpush.msra.mxu0 %v2453
    %2599 = vmatpush.msra.mxu0 %v2451
    %2600 = vmatpush.msra.mxu0 %v2449
    %2601 = vmatpush.msra.mxu0 %v2447
    %2602 = vmatpush.msra.mxu0 %v2445
    %2603 = vmatpush.msra.mxu0 %v2443
    %2604 = vmatpush.msra.mxu0 %v2441
    %2605 = vmatpush.msra.mxu0 %v2439
    %2606 = vmatmul.f32.gmra.mxu0 %v1275
    %v2607 = vpop.f32.mrf.mxu0
    %v2608 = vadd.f32 0.0, %v2607
    %2609 = vmatmul.f32.gmra.mxu0 %v1277
    %v2610 = vpop.f32.mrf.mxu0
    %v2611 = vadd.f32 0.0, %v2610
    %2612 = vmatmul.f32.gmra.mxu0 %v1279
    %v2613 = vpop.f32.mrf.mxu0
    %v2614 = vadd.f32 0.0, %v2613
    %2615 = vmatmul.f32.gmra.mxu0 %v1281
    %v2616 = vpop.f32.mrf.mxu0
    %v2617 = vadd.f32 0.0, %v2616
    %2618 = vmatmul.f32.gmra.mxu0 %v1283
    %v2619 = vpop.f32.mrf.mxu0
    %v2620 = vadd.f32 0.0, %v2619
    %2621 = vmatmul.f32.gmra.mxu0 %v1285
    %v2622 = vpop.f32.mrf.mxu0
    %v2623 = vadd.f32 0.0, %v2622
    %2624 = vmatmul.f32.gmra.mxu0 %v1287
    %v2625 = vpop.f32.mrf.mxu0
    %v2626 = vadd.f32 0.0, %v2625
    %2627 = vmatmul.f32.gmra.mxu0 %v1289
    %v2628 = vpop.f32.mrf.mxu0
    %v2629 = vadd.f32 0.0, %v2628
    %2630 = vmatmul.f32.gmra.mxu0 %v2435
    %v2631 = vpop.f32.mrf.mxu0
    %v2632 = vadd.f32 0.0, %v2631
    %2633 = vdwg.mxu0
    %2634 = vmatpush.msra.mxu0 %v2501
    %2635 = vmatpush.msra.mxu0 %v2499
    %2636 = vmatpush.msra.mxu0 %v2497
    %2637 = vmatpush.msra.mxu0 %v2495
    %2638 = vmatpush.msra.mxu0 %v2493
    %2639 = vmatpush.msra.mxu0 %v2491
    %2640 = vmatpush.msra.mxu0 %v2489
    %2641 = vmatpush.msra.mxu0 %v2487
    %2642 = vmatpush.msra.mxu0 %v2485
    %2643 = vmatpush.msra.mxu0 %v2483
    %2644 = vmatpush.msra.mxu0 %v2481
    %2645 = vmatpush.msra.mxu0 %v2479
    %2646 = vmatpush.msra.mxu0 %v2477
    %2647 = vmatpush.msra.mxu0 %v2475
    %2648 = vmatpush.msra.mxu0 %v2473
    %2649 = vmatpush.msra.mxu0 %v2471
    %2650 = vmatmul.f32.gmra.mxu0 %v1276
    %v2651 = vpop.f32.mrf.mxu0
    %v2652 = vadd.f32 %v2608, %v2651
    %2653 = vmatmul.f32.gmra.mxu0 %v1278
    %v2654 = vpop.f32.mrf.mxu0
    %v2655 = vadd.f32 %v2611, %v2654
    %2656 = vmatmul.f32.gmra.mxu0 %v1280
    %v2657 = vpop.f32.mrf.mxu0
    %v2658 = vadd.f32 %v2614, %v2657
    %2659 = vmatmul.f32.gmra.mxu0 %v1282
    %v2660 = vpop.f32.mrf.mxu0
    %v2661 = vadd.f32 %v2617, %v2660
    %2662 = vmatmul.f32.gmra.mxu0 %v1284
    %v2663 = vpop.f32.mrf.mxu0
    %v2664 = vadd.f32 %v2620, %v2663
    %2665 = vmatmul.f32.gmra.mxu0 %v1286
    %v2666 = vpop.f32.mrf.mxu0
    %v2667 = vadd.f32 %v2623, %v2666
    %2668 = vmatmul.f32.gmra.mxu0 %v1288
    %v2669 = vpop.f32.mrf.mxu0
    %v2670 = vadd.f32 %v2626, %v2669
    %2671 = vmatmul.f32.gmra.mxu0 %v1290
    %v2672 = vpop.f32.mrf.mxu0
    %v2673 = vadd.f32 %v2629, %v2672
    %2674 = vmatmul.f32.gmra.mxu0 %v2436
    %v2675 = vpop.f32.mrf.mxu0
    %v2676 = vadd.f32 %v2632, %v2675
    %2677 = vdwg.mxu0
    %v2678 = vadd.f32 %v2417, %v2564
    %v2679 = vadd.f32 %v2418, %v2652
    %v2680 = vadd.f32 %v2419, %v2567
    %v2681 = vadd.f32 %v2420, %v2655
    %v2682 = vadd.f32 %v2421, %v2570
    %v2683 = vadd.f32 %v2422, %v2658
    %v2684 = vadd.f32 %v2423, %v2573
    %v2685 = vadd.f32 %v2424, %v2661
    %v2686 = vadd.f32 %v2425, %v2576
    %v2687 = vadd.f32 %v2426, %v2664
    %v2688 = vadd.f32 %v2427, %v2579
    %v2689 = vadd.f32 %v2428, %v2667
    %v2690 = vadd.f32 %v2429, %v2582
    %v2691 = vadd.f32 %v2430, %v2670
    %v2692 = vadd.f32 %v2431, %v2585
    %v2693 = vadd.f32 %v2432, %v2673
    %v2694 = vadd.f32 %v2433, %v2588
    %v2695 = vadd.f32 %v2434, %v2676
    %s2696 = scalar_lea.vmem [#allocation9], 1
    %v2697 = vld [vmem:[%s2696] ss:$8 sm:$0x3]
    %v2699 = vperm.slane %v2697, 0
    %v2700 = vperm.slane %v2697, 1
    %v2703 = vadd.f32 %v2678, %v2699
    %v2704 = vadd.f32 %v2679, %v2700
    %v2705 = vadd.f32 %v2680, %v2699
    %v2706 = vadd.f32 %v2681, %v2700
    %v2707 = vadd.f32 %v2682, %v2699
    %v2708 = vadd.f32 %v2683, %v2700
    %v2709 = vadd.f32 %v2684, %v2699
    %v2710 = vadd.f32 %v2685, %v2700
    %v2711 = vadd.f32 %v2686, %v2699
    %v2712 = vadd.f32 %v2687, %v2700
    %v2713 = vadd.f32 %v2688, %v2699
    %v2714 = vadd.f32 %v2689, %v2700
    %v2715 = vadd.f32 %v2690, %v2699
    %v2716 = vadd.f32 %v2691, %v2700
    %v2717 = vadd.f32 %v2692, %v2699
    %v2718 = vadd.f32 %v2693, %v2700
    %v2719 = vadd.f32 %v2694, %v2699
    %v2720 = vadd.f32 %v2695, %v2700
    %v2721 = vmax.f32 %v2703, 0.0
    %v2722 = vmax.f32 %v2704, 0.0
    %v2723 = vmax.f32 %v2705, 0.0
    %v2724 = vmax.f32 %v2706, 0.0
    %v2725 = vmax.f32 %v2707, 0.0
    %v2726 = vmax.f32 %v2708, 0.0
    %v2727 = vmax.f32 %v2709, 0.0
    %v2728 = vmax.f32 %v2710, 0.0
    %v2729 = vmax.f32 %v2711, 0.0
    %v2730 = vmax.f32 %v2712, 0.0
    %v2731 = vmax.f32 %v2713, 0.0
    %v2732 = vmax.f32 %v2714, 0.0
    %v2733 = vmax.f32 %v2715, 0.0
    %v2734 = vmax.f32 %v2716, 0.0
    %v2735 = vmax.f32 %v2717, 0.0
    %v2736 = vmax.f32 %v2718, 0.0
    %v2737 = vmax.f32 %v2719, 0.0
    %v2738 = vmax.f32 %v2720, 0.0
    %v2757 = vrot.slane %v2721, 2
    %v2758 = vrot.slane %v2723, 2
    %v2759 = vsel %vm1378, %v2757, %v2758
    %v2760 = vrot.slane %v2722, 2
    %v2761 = vrot.slane %v2724, 2
    %v2762 = vsel %vm1378, %v2760, %v2761
    %v2763 = vrot.slane %v2725, 2
    %v2764 = vsel %vm1378, %v2758, %v2763
    %v2765 = vrot.slane %v2726, 2
    %v2766 = vsel %vm1378, %v2761, %v2765
    %v2767 = vrot.slane %v2727, 2
    %v2768 = vsel %vm1378, %v2763, %v2767
    %v2769 = vrot.slane %v2728, 2
    %v2770 = vsel %vm1378, %v2765, %v2769
    %v2771 = vrot.slane %v2729, 2
    %v2772 = vsel %vm1378, %v2767, %v2771
    %v2773 = vrot.slane %v2730, 2
    %v2774 = vsel %vm1378, %v2769, %v2773
    %v2775 = vrot.slane %v2731, 2
    %v2776 = vsel %vm1378, %v2771, %v2775
    %v2777 = vrot.slane %v2732, 2
    %v2778 = vsel %vm1378, %v2773, %v2777
    %v2779 = vrot.slane %v2733, 2
    %v2780 = vsel %vm1378, %v2775, %v2779
    %v2781 = vrot.slane %v2734, 2
    %v2782 = vsel %vm1378, %v2777, %v2781
    %v2783 = vrot.slane %v2735, 2
    %v2784 = vsel %vm1378, %v2779, %v2783
    %v2785 = vrot.slane %v2736, 2
    %v2786 = vsel %vm1378, %v2781, %v2785
    %v2787 = vrot.slane %v2737, 2
    %v2788 = vsel %vm1378, %v2783, %v2787
    %v2789 = vrot.slane %v2738, 2
    %v2790 = vsel %vm1378, %v2785, %v2789
    %v2807 = vmax.f32 %v2721, %v2759
    %v2808 = vmax.f32 %v2722, %v2762
    %v2809 = vmax.f32 %v2723, %v2764
    %v2810 = vmax.f32 %v2724, %v2766
    %v2811 = vmax.f32 %v2725, %v2768
    %v2812 = vmax.f32 %v2726, %v2770
    %v2813 = vmax.f32 %v2727, %v2772
    %v2814 = vmax.f32 %v2728, %v2774
    %v2815 = vmax.f32 %v2729, %v2776
    %v2816 = vmax.f32 %v2730, %v2778
    %v2817 = vmax.f32 %v2731, %v2780
    %v2818 = vmax.f32 %v2732, %v2782
    %v2819 = vmax.f32 %v2733, %v2784
    %v2820 = vmax.f32 %v2734, %v2786
    %v2821 = vmax.f32 %v2735, %v2788
    %v2822 = vmax.f32 %v2736, %v2790
    %2823 = vrot.lane.b32.xlu0 %v2807, 112
    %v2824 = vpop.permute.xlu0 %2823
    %2825 = vrot.lane.b32.xlu0 %v2809, 112
    %v2826 = vpop.permute.xlu0 %2825
    %2827 = vrot.lane.b32.xlu0 %v2811, 112
    %v2828 = vpop.permute.xlu0 %2827
    %2829 = vrot.lane.b32.xlu0 %v2813, 112
    %v2830 = vpop.permute.xlu0 %2829
    %2831 = vrot.lane.b32.xlu0 %v2815, 112
    %v2832 = vpop.permute.xlu0 %2831
    %2833 = vrot.lane.b32.xlu0 %v2817, 112
    %v2834 = vpop.permute.xlu0 %2833
    %2835 = vrot.lane.b32.xlu0 %v2819, 112
    %v2836 = vpop.permute.xlu0 %2835
    %2837 = vrot.lane.b32.xlu0 %v2821, 112
    %v2838 = vpop.permute.xlu0 %2837
    %2839 = vrot.lane.b32.xlu0 %v2808, 112
    %v2840 = vpop.permute.xlu0 %2839
    %2841 = vrot.lane.b32.xlu0 %v2810, 112
    %v2842 = vpop.permute.xlu0 %2841
    %2843 = vrot.lane.b32.xlu0 %v2812, 112
    %v2844 = vpop.permute.xlu0 %2843
    %2845 = vrot.lane.b32.xlu0 %v2814, 112
    %v2846 = vpop.permute.xlu0 %2845
    %2847 = vrot.lane.b32.xlu0 %v2816, 112
    %v2848 = vpop.permute.xlu0 %2847
    %2849 = vrot.lane.b32.xlu0 %v2818, 112
    %v2850 = vpop.permute.xlu0 %2849
    %2851 = vrot.lane.b32.xlu0 %v2820, 112
    %v2852 = vpop.permute.xlu0 %2851
    %2853 = vrot.lane.b32.xlu0 %v2822, 112
    %v2854 = vpop.permute.xlu0 %2853
    %vm2855 = vcmp.lt.s32.totalorder %v1129, 112
    %v2856 = vsel %vm2855, %v2824, %v2840
    %v2857 = vsel %vm2855, %v2826, %v2842
    %v2858 = vsel %vm2855, %v2828, %v2844
    %v2859 = vsel %vm2855, %v2830, %v2846
    %v2860 = vsel %vm2855, %v2832, %v2848
    %v2861 = vsel %vm2855, %v2834, %v2850
    %v2862 = vsel %vm2855, %v2836, %v2852
    %v2863 = vsel %vm2855, %v2838, %v2854
    %v2864 = vsel %vm2855, %v2840, %v2824
    %v2865 = vsel %vm2855, %v2842, %v2826
    %v2866 = vsel %vm2855, %v2844, %v2828
    %v2867 = vsel %vm2855, %v2846, %v2830
    %v2868 = vsel %vm2855, %v2848, %v2832
    %v2869 = vsel %vm2855, %v2850, %v2834
    %v2870 = vsel %vm2855, %v2852, %v2836
    %v2871 = vsel %vm2855, %v2854, %v2838
    %v2872 = vmax.f32 %v2807, %v2856
    %v2873 = vmax.f32 %v2808, %v2864
    %v2874 = vmax.f32 %v2809, %v2857
    %v2875 = vmax.f32 %v2810, %v2865
    %v2876 = vmax.f32 %v2811, %v2858
    %v2877 = vmax.f32 %v2812, %v2866
    %v2878 = vmax.f32 %v2813, %v2859
    %v2879 = vmax.f32 %v2814, %v2867
    %v2880 = vmax.f32 %v2815, %v2860
    %v2881 = vmax.f32 %v2816, %v2868
    %v2882 = vmax.f32 %v2817, %v2861
    %v2883 = vmax.f32 %v2818, %v2869
    %v2884 = vmax.f32 %v2819, %v2862
    %v2885 = vmax.f32 %v2820, %v2870
    %v2886 = vmax.f32 %v2821, %v2863
    %v2887 = vmax.f32 %v2822, %v2871
    %v2888 = vlaneseq
    %v2889 = vshrl.u32 %v2888, 7
    %v2890 = vmul.u32 %v2889, 32
    %vm2891 = vcmp.eq.s32.totalorder %v1129, %v2890
    %v2892 = vsel %vm2891, 1, 0
    %v2893 = vcvt.s32.f32 %v2892
    %vm2894 = vcmask 523264
    %v2896 = vsel %vm2894, %v2893, 0
    %2898 = vmatpush.msra.mxu0 0.0
    %2899 = vmatpush.msra.mxu0 0.0
    %2900 = vmatpush.msra.mxu0 0.0
    %2901 = vmatpush.msra.mxu0 0.0
    %2902 = vmatpush.msra.mxu0 0.0
    %2903 = vmatpush.msra.mxu0 0.0
    %2904 = vmatpush.msra.mxu0 0.0
    %2905 = vmatpush.msra.mxu0 0.0
    %2906 = vmatpush.msra.mxu0 %v2886
    %2907 = vmatpush.msra.mxu0 %v2884
    %2908 = vmatpush.msra.mxu0 %v2882
    %2909 = vmatpush.msra.mxu0 %v2880
    %2910 = vmatpush.msra.mxu0 %v2878
    %2911 = vmatpush.msra.mxu0 %v2876
    %2912 = vmatpush.msra.mxu0 %v2874
    %2913 = vmatpush.msra.mxu0 %v2872
    %2914 = vmatmul.f32.gmra.mxu0 %v2896
    %v2915 = vpop.f32.mrf.mxu0
    %v2916 = vadd.f32 0.0, %v2915
    %2917 = vdwg.mxu0
    %2918 = vmatpush.msra.mxu0 0.0
    %2919 = vmatpush.msra.mxu0 0.0
    %2920 = vmatpush.msra.mxu0 0.0
    %2921 = vmatpush.msra.mxu0 0.0
    %2922 = vmatpush.msra.mxu0 0.0
    %2923 = vmatpush.msra.mxu0 0.0
    %2924 = vmatpush.msra.mxu0 0.0
    %2925 = vmatpush.msra.mxu0 0.0
    %2926 = vmatpush.msra.mxu0 %v2887
    %2927 = vmatpush.msra.mxu0 %v2885
    %2928 = vmatpush.msra.mxu0 %v2883
    %2929 = vmatpush.msra.mxu0 %v2881
    %2930 = vmatpush.msra.mxu0 %v2879
    %2931 = vmatpush.msra.mxu0 %v2877
    %2932 = vmatpush.msra.mxu0 %v2875
    %2933 = vmatpush.msra.mxu0 %v2873
    %2934 = vmatmul.f32.gmra.mxu0 %v2896
    %v2935 = vpop.f32.mrf.mxu0
    %v2936 = vadd.f32 0.0, %v2935
    %2937 = vdwg.mxu0
    %v2938 = vadd.s32 %v2890, 4
    %vm2939 = vcmp.eq.s32.totalorder %v1129, %v2938
    %v2940 = vsel %vm2939, 1, 0
    %v2941 = vcvt.s32.f32 %v2940
    %v2943 = vsel %vm2894, %v2941, 0
    %2945 = vmatpush.msra.mxu0 0.0
    %2946 = vmatpush.msra.mxu0 0.0
    %2947 = vmatpush.msra.mxu0 0.0
    %2948 = vmatpush.msra.mxu0 0.0
    %2949 = vmatpush.msra.mxu0 0.0
    %2950 = vmatpush.msra.mxu0 0.0
    %2951 = vmatpush.msra.mxu0 0.0
    %2952 = vmatpush.msra.mxu0 0.0
    %2953 = vmatpush.msra.mxu0 %v2886
    %2954 = vmatpush.msra.mxu0 %v2884
    %2955 = vmatpush.msra.mxu0 %v2882
    %2956 = vmatpush.msra.mxu0 %v2880
    %2957 = vmatpush.msra.mxu0 %v2878
    %2958 = vmatpush.msra.mxu0 %v2876
    %2959 = vmatpush.msra.mxu0 %v2874
    %2960 = vmatpush.msra.mxu0 %v2872
    %2961 = vmatmul.f32.gmra.mxu0 %v2943
    %v2962 = vpop.f32.mrf.mxu0
    %v2963 = vadd.f32 0.0, %v2962
    %2964 = vdwg.mxu0
    %2965 = vmatpush.msra.mxu0 0.0
    %2966 = vmatpush.msra.mxu0 0.0
    %2967 = vmatpush.msra.mxu0 0.0
    %2968 = vmatpush.msra.mxu0 0.0
    %2969 = vmatpush.msra.mxu0 0.0
    %2970 = vmatpush.msra.mxu0 0.0
    %2971 = vmatpush.msra.mxu0 0.0
    %2972 = vmatpush.msra.mxu0 0.0
    %2973 = vmatpush.msra.mxu0 %v2887
    %2974 = vmatpush.msra.mxu0 %v2885
    %2975 = vmatpush.msra.mxu0 %v2883
    %2976 = vmatpush.msra.mxu0 %v2881
    %2977 = vmatpush.msra.mxu0 %v2879
    %2978 = vmatpush.msra.mxu0 %v2877
    %2979 = vmatpush.msra.mxu0 %v2875
    %2980 = vmatpush.msra.mxu0 %v2873
    %2981 = vmatmul.f32.gmra.mxu0 %v2943
    %v2982 = vpop.f32.mrf.mxu0
    %v2983 = vadd.f32 0.0, %v2982
    %2984 = vdwg.mxu0
    %v2985 = vadd.s32 %v2890, 8
    %vm2986 = vcmp.eq.s32.totalorder %v1129, %v2985
    %v2987 = vsel %vm2986, 1, 0
    %v2988 = vcvt.s32.f32 %v2987
    %v2990 = vsel %vm2894, %v2988, 0
    %2992 = vmatpush.msra.mxu0 0.0
    %2993 = vmatpush.msra.mxu0 0.0
    %2994 = vmatpush.msra.mxu0 0.0
    %2995 = vmatpush.msra.mxu0 0.0
    %2996 = vmatpush.msra.mxu0 0.0
    %2997 = vmatpush.msra.mxu0 0.0
    %2998 = vmatpush.msra.mxu0 0.0
    %2999 = vmatpush.msra.mxu0 0.0
    %3000 = vmatpush.msra.mxu0 %v2886
    %3001 = vmatpush.msra.mxu0 %v2884
    %3002 = vmatpush.msra.mxu0 %v2882
    %3003 = vmatpush.msra.mxu0 %v2880
    %3004 = vmatpush.msra.mxu0 %v2878
    %3005 = vmatpush.msra.mxu0 %v2876
    %3006 = vmatpush.msra.mxu0 %v2874
    %3007 = vmatpush.msra.mxu0 %v2872
    %3008 = vmatmul.f32.gmra.mxu0 %v2990
    %v3009 = vpop.f32.mrf.mxu0
    %v3010 = vadd.f32 0.0, %v3009
    %3011 = vdwg.mxu0
    %3012 = vmatpush.msra.mxu0 0.0
    %3013 = vmatpush.msra.mxu0 0.0
    %3014 = vmatpush.msra.mxu0 0.0
    %3015 = vmatpush.msra.mxu0 0.0
    %3016 = vmatpush.msra.mxu0 0.0
    %3017 = vmatpush.msra.mxu0 0.0
    %3018 = vmatpush.msra.mxu0 0.0
    %3019 = vmatpush.msra.mxu0 0.0
    %3020 = vmatpush.msra.mxu0 %v2887
    %3021 = vmatpush.msra.mxu0 %v2885
    %3022 = vmatpush.msra.mxu0 %v2883
    %3023 = vmatpush.msra.mxu0 %v2881
    %3024 = vmatpush.msra.mxu0 %v2879
    %3025 = vmatpush.msra.mxu0 %v2877
    %3026 = vmatpush.msra.mxu0 %v2875
    %3027 = vmatpush.msra.mxu0 %v2873
    %3028 = vmatmul.f32.gmra.mxu0 %v2990
    %v3029 = vpop.f32.mrf.mxu0
    %v3030 = vadd.f32 0.0, %v3029
    %3031 = vdwg.mxu0
    %v3032 = vadd.s32 %v2890, 12
    %vm3033 = vcmp.eq.s32.totalorder %v1129, %v3032
    %v3034 = vsel %vm3033, 1, 0
    %v3035 = vcvt.s32.f32 %v3034
    %v3037 = vsel %vm2894, %v3035, 0
    %3039 = vmatpush.msra.mxu0 0.0
    %3040 = vmatpush.msra.mxu0 0.0
    %3041 = vmatpush.msra.mxu0 0.0
    %3042 = vmatpush.msra.mxu0 0.0
    %3043 = vmatpush.msra.mxu0 0.0
    %3044 = vmatpush.msra.mxu0 0.0
    %3045 = vmatpush.msra.mxu0 0.0
    %3046 = vmatpush.msra.mxu0 0.0
    %3047 = vmatpush.msra.mxu0 %v2886
    %3048 = vmatpush.msra.mxu0 %v2884
    %3049 = vmatpush.msra.mxu0 %v2882
    %3050 = vmatpush.msra.mxu0 %v2880
    %3051 = vmatpush.msra.mxu0 %v2878
    %3052 = vmatpush.msra.mxu0 %v2876
    %3053 = vmatpush.msra.mxu0 %v2874
    %3054 = vmatpush.msra.mxu0 %v2872
    %3055 = vmatmul.f32.gmra.mxu0 %v3037
    %v3056 = vpop.f32.mrf.mxu0
    %v3057 = vadd.f32 0.0, %v3056
    %3058 = vdwg.mxu0
    %3059 = vmatpush.msra.mxu0 0.0
    %3060 = vmatpush.msra.mxu0 0.0
    %3061 = vmatpush.msra.mxu0 0.0
    %3062 = vmatpush.msra.mxu0 0.0
    %3063 = vmatpush.msra.mxu0 0.0
    %3064 = vmatpush.msra.mxu0 0.0
    %3065 = vmatpush.msra.mxu0 0.0
    %3066 = vmatpush.msra.mxu0 0.0
    %3067 = vmatpush.msra.mxu0 %v2887
    %3068 = vmatpush.msra.mxu0 %v2885
    %3069 = vmatpush.msra.mxu0 %v2883
    %3070 = vmatpush.msra.mxu0 %v2881
    %3071 = vmatpush.msra.mxu0 %v2879
    %3072 = vmatpush.msra.mxu0 %v2877
    %3073 = vmatpush.msra.mxu0 %v2875
    %3074 = vmatpush.msra.mxu0 %v2873
    %3075 = vmatmul.f32.gmra.mxu0 %v3037
    %v3076 = vpop.f32.mrf.mxu0
    %v3077 = vadd.f32 0.0, %v3076
    %3078 = vdwg.mxu0
    %v3079 = vadd.s32 %v2890, 16
    %vm3080 = vcmp.eq.s32.totalorder %v1129, %v3079
    %v3081 = vsel %vm3080, 1, 0
    %v3082 = vcvt.s32.f32 %v3081
    %v3084 = vsel %vm2894, %v3082, 0
    %3086 = vmatpush.msra.mxu0 0.0
    %3087 = vmatpush.msra.mxu0 0.0
    %3088 = vmatpush.msra.mxu0 0.0
    %3089 = vmatpush.msra.mxu0 0.0
    %3090 = vmatpush.msra.mxu0 0.0
    %3091 = vmatpush.msra.mxu0 0.0
    %3092 = vmatpush.msra.mxu0 0.0
    %3093 = vmatpush.msra.mxu0 0.0
    %3094 = vmatpush.msra.mxu0 %v2886
    %3095 = vmatpush.msra.mxu0 %v2884
    %3096 = vmatpush.msra.mxu0 %v2882
    %3097 = vmatpush.msra.mxu0 %v2880
    %3098 = vmatpush.msra.mxu0 %v2878
    %3099 = vmatpush.msra.mxu0 %v2876
    %3100 = vmatpush.msra.mxu0 %v2874
    %3101 = vmatpush.msra.mxu0 %v2872
    %3102 = vmatmul.f32.gmra.mxu0 %v3084
    %v3103 = vpop.f32.mrf.mxu0
    %v3104 = vadd.f32 0.0, %v3103
    %3105 = vdwg.mxu0
    %3106 = vmatpush.msra.mxu0 0.0
    %3107 = vmatpush.msra.mxu0 0.0
    %3108 = vmatpush.msra.mxu0 0.0
    %3109 = vmatpush.msra.mxu0 0.0
    %3110 = vmatpush.msra.mxu0 0.0
    %3111 = vmatpush.msra.mxu0 0.0
    %3112 = vmatpush.msra.mxu0 0.0
    %3113 = vmatpush.msra.mxu0 0.0
    %3114 = vmatpush.msra.mxu0 %v2887
    %3115 = vmatpush.msra.mxu0 %v2885
    %3116 = vmatpush.msra.mxu0 %v2883
    %3117 = vmatpush.msra.mxu0 %v2881
    %3118 = vmatpush.msra.mxu0 %v2879
    %3119 = vmatpush.msra.mxu0 %v2877
    %3120 = vmatpush.msra.mxu0 %v2875
    %3121 = vmatpush.msra.mxu0 %v2873
    %3122 = vmatmul.f32.gmra.mxu0 %v3084
    %v3123 = vpop.f32.mrf.mxu0
    %v3124 = vadd.f32 0.0, %v3123
    %3125 = vdwg.mxu0
    %v3126 = vld [vmem:[#allocation6] sm:$0xff]
    %v3127 = vld [vmem:[#allocation6 + $0x8] sm:$0xff]
    %v3128 = vld [vmem:[#allocation6 + $0x10] sm:$0xff]
    %v3129 = vld [vmem:[#allocation6 + $0x18] sm:$0xff]
    %v3130 = vld [vmem:[#allocation6 + $0x20] sm:$0xff]
    %v3131 = vld [vmem:[#allocation6 + $0x28] sm:$0xff]
    %v3132 = vld [vmem:[#allocation6 + $0x30] sm:$0xff]
    %v3133 = vld [vmem:[#allocation6 + $0x38] sm:$0xff]
    %v3134 = vld [vmem:[#allocation6 + $0x40] sm:$0xff]
    %v3135 = vld [vmem:[#allocation6 + $0x48] sm:$0xff]
    %v3136 = vld [vmem:[#allocation6 + $0x50] sm:$0xff]
    %v3137 = vld [vmem:[#allocation6 + $0x58] sm:$0xff]
    %v3138 = vld [vmem:[#allocation6 + $0x60] sm:$0xff]
    %v3139 = vld [vmem:[#allocation6 + $0x68] sm:$0xff]
    %v3140 = vld [vmem:[#allocation6 + $0x70] sm:$0xff]
    %v3141 = vld [vmem:[#allocation6 + $0x78] sm:$0xff]
    %v3142 = vld [vmem:[#allocation6 + $0x80] sm:$0xff]
    %v3143 = vld [vmem:[#allocation6 + $0x88] sm:$0xff]
    %v3144 = vld [vmem:[#allocation6 + $0x90] sm:$0xff]
    %v3145 = vld [vmem:[#allocation6 + $0x98] sm:$0xff]
    %v3146 = vld [vmem:[#allocation6 + $0xa0] sm:$0xff]
    %v3147 = vld [vmem:[#allocation6 + $0xa8] sm:$0xff]
    %v3148 = vld [vmem:[#allocation6 + $0xb0] sm:$0xff]
    %v3149 = vld [vmem:[#allocation6 + $0xb8] sm:$0xff]
    %v3150 = vld [vmem:[#allocation6 + $0xc0] sm:$0xff]
    %v3151 = vld [vmem:[#allocation6 + $0xc8] sm:$0xff]
    %v3152 = vld [vmem:[#allocation6 + $0xd0] sm:$0xff]
    %v3153 = vld [vmem:[#allocation6 + $0xd8] sm:$0xff]
    %v3154 = vld [vmem:[#allocation6 + $0xe0] sm:$0xff]
    %v3155 = vld [vmem:[#allocation6 + $0xe8] sm:$0xff]
    %v3156 = vld [vmem:[#allocation6 + $0xf0] sm:$0xff]
    %v3157 = vld [vmem:[#allocation6 + $0xf8] sm:$0xff]
    %v3158 = vld [vmem:[#allocation6 + $0x100] sm:$0xff]
    %v3159 = vld [vmem:[#allocation6 + $0x108] sm:$0xff]
    %v3160 = vld [vmem:[#allocation6 + $0x110] sm:$0xff]
    %v3161 = vld [vmem:[#allocation6 + $0x118] sm:$0xff]
    %v3162 = vld [vmem:[#allocation6 + $0x120] sm:$0xff]
    %v3163 = vld [vmem:[#allocation6 + $0x128] sm:$0xff]
    %v3164 = vld [vmem:[#allocation6 + $0x130] sm:$0xff]
    %v3165 = vld [vmem:[#allocation6 + $0x138] sm:$0xff]
    %v3166 = vld [vmem:[#allocation6 + $0x140] sm:$0xff]
    %v3167 = vld [vmem:[#allocation6 + $0x148] sm:$0xff]
    %v3168 = vld [vmem:[#allocation6 + $0x150] sm:$0xff]
    %v3169 = vld [vmem:[#allocation6 + $0x158] sm:$0xff]
    %v3170 = vld [vmem:[#allocation6 + $0x160] sm:$0xff]
    %v3171 = vld [vmem:[#allocation6 + $0x168] sm:$0xff]
    %v3172 = vld [vmem:[#allocation6 + $0x170] sm:$0xff]
    %v3173 = vld [vmem:[#allocation6 + $0x178] sm:$0xff]
    %v3174 = vld [vmem:[#allocation6 + $0x180] sm:$0xff]
    %v3175 = vld [vmem:[#allocation6 + $0x188] sm:$0xff]
    %v3176 = vld [vmem:[#allocation6 + $0x190] sm:$0xff]
    %v3177 = vld [vmem:[#allocation6 + $0x198] sm:$0xff]
    %v3178 = vld [vmem:[#allocation6 + $0x1a0] sm:$0xff]
    %v3179 = vld [vmem:[#allocation6 + $0x1a8] sm:$0xff]
    %v3180 = vld [vmem:[#allocation6 + $0x1b0] sm:$0xff]
    %v3181 = vld [vmem:[#allocation6 + $0x1b8] sm:$0xff]
    %v3182 = vld [vmem:[#allocation6 + $0x1c0] sm:$0xff]
    %v3183 = vld [vmem:[#allocation6 + $0x1c8] sm:$0xff]
    %v3184 = vld [vmem:[#allocation6 + $0x1d0] sm:$0xff]
    %v3185 = vld [vmem:[#allocation6 + $0x1d8] sm:$0xff]
    %v3186 = vld [vmem:[#allocation6 + $0x1e0] sm:$0xff]
    %v3187 = vld [vmem:[#allocation6 + $0x1e8] sm:$0xff]
    %v3188 = vld [vmem:[#allocation6 + $0x1f0] sm:$0xff]
    %v3189 = vld [vmem:[#allocation6 + $0x1f8] sm:$0xff]
    %v3190 = vld [vmem:[#allocation6 + $0x200] sm:$0xff]
    %v3191 = vld [vmem:[#allocation6 + $0x208] sm:$0xff]
    %v3192 = vld [vmem:[#allocation6 + $0x210] sm:$0xff]
    %v3193 = vld [vmem:[#allocation6 + $0x218] sm:$0xff]
    %v3194 = vld [vmem:[#allocation6 + $0x220] sm:$0xff]
    %v3195 = vld [vmem:[#allocation6 + $0x228] sm:$0xff]
    %v3196 = vld [vmem:[#allocation6 + $0x230] sm:$0xff]
    %v3197 = vld [vmem:[#allocation6 + $0x238] sm:$0xff]
    %v3198 = vld [vmem:[#allocation6 + $0x240] sm:$0xff]
    %v3199 = vld [vmem:[#allocation6 + $0x248] sm:$0xff]
    %v3200 = vld [vmem:[#allocation6 + $0x250] sm:$0xff]
    %v3201 = vld [vmem:[#allocation6 + $0x258] sm:$0xff]
    %v3202 = vld [vmem:[#allocation6 + $0x260] sm:$0xff]
    %v3203 = vld [vmem:[#allocation6 + $0x268] sm:$0xff]
    %v3204 = vld [vmem:[#allocation6 + $0x270] sm:$0xff]
    %v3205 = vld [vmem:[#allocation6 + $0x278] sm:$0xff]
    %v3206 = vld [vmem:[#allocation6 + $0x280] sm:$0xff]
    %v3207 = vld [vmem:[#allocation6 + $0x288] sm:$0xff]
    %v3208 = vld [vmem:[#allocation6 + $0x290] sm:$0xff]
    %v3209 = vld [vmem:[#allocation6 + $0x298] sm:$0xff]
    %v3210 = vld [vmem:[#allocation6 + $0x2a0] sm:$0xff]
    %v3211 = vld [vmem:[#allocation6 + $0x2a8] sm:$0xff]
    %v3212 = vld [vmem:[#allocation6 + $0x2b0] sm:$0xff]
    %v3213 = vld [vmem:[#allocation6 + $0x2b8] sm:$0xff]
    %v3214 = vld [vmem:[#allocation6 + $0x2c0] sm:$0xff]
    %v3215 = vld [vmem:[#allocation6 + $0x2c8] sm:$0xff]
    %v3216 = vld [vmem:[#allocation6 + $0x2d0] sm:$0xff]
    %v3217 = vld [vmem:[#allocation6 + $0x2d8] sm:$0xff]
    %v3218 = vld [vmem:[#allocation6 + $0x2e0] sm:$0xff]
    %v3219 = vld [vmem:[#allocation6 + $0x2e8] sm:$0xff]
    %v3220 = vld [vmem:[#allocation6 + $0x2f0] sm:$0xff]
    %v3221 = vld [vmem:[#allocation6 + $0x2f8] sm:$0xff]
    %v3222 = vld [vmem:[#allocation6 + $0x300] sm:$0xff]
    %v3223 = vld [vmem:[#allocation6 + $0x308] sm:$0xff]
    %v3224 = vld [vmem:[#allocation6 + $0x310] sm:$0xff]
    %v3225 = vld [vmem:[#allocation6 + $0x318] sm:$0xff]
    %v3226 = vld [vmem:[#allocation6 + $0x320] sm:$0xff]
    %v3227 = vld [vmem:[#allocation6 + $0x328] sm:$0xff]
    %v3228 = vld [vmem:[#allocation6 + $0x330] sm:$0xff]
    %v3229 = vld [vmem:[#allocation6 + $0x338] sm:$0xff]
    %v3230 = vld [vmem:[#allocation6 + $0x340] sm:$0xff]
    %v3231 = vld [vmem:[#allocation6 + $0x348] sm:$0xff]
    %v3232 = vld [vmem:[#allocation6 + $0x350] sm:$0xff]
    %v3233 = vld [vmem:[#allocation6 + $0x358] sm:$0xff]
    %v3234 = vld [vmem:[#allocation6 + $0x360] sm:$0xff]
    %v3235 = vld [vmem:[#allocation6 + $0x368] sm:$0xff]
    %v3236 = vld [vmem:[#allocation6 + $0x370] sm:$0xff]
    %v3237 = vld [vmem:[#allocation6 + $0x378] sm:$0xff]
    %v3238 = vld [vmem:[#allocation6 + $0x380] sm:$0xff]
    %v3239 = vld [vmem:[#allocation6 + $0x388] sm:$0xff]
    %v3240 = vld [vmem:[#allocation6 + $0x390] sm:$0xff]
    %v3241 = vld [vmem:[#allocation6 + $0x398] sm:$0xff]
    %v3242 = vld [vmem:[#allocation6 + $0x3a0] sm:$0xff]
    %v3243 = vld [vmem:[#allocation6 + $0x3a8] sm:$0xff]
    %v3244 = vld [vmem:[#allocation6 + $0x3b0] sm:$0xff]
    %v3245 = vld [vmem:[#allocation6 + $0x3b8] sm:$0xff]
    %v3246 = vld [vmem:[#allocation6 + $0x3c0] sm:$0xff]
    %v3247 = vld [vmem:[#allocation6 + $0x3c8] sm:$0xff]
    %v3248 = vld [vmem:[#allocation6 + $0x3d0] sm:$0xff]
    %v3249 = vld [vmem:[#allocation6 + $0x3d8] sm:$0xff]
    %v3250 = vld [vmem:[#allocation6 + $0x3e0] sm:$0xff]
    %v3251 = vld [vmem:[#allocation6 + $0x3e8] sm:$0xff]
    %v3252 = vld [vmem:[#allocation6 + $0x3f0] sm:$0xff]
    %v3253 = vld [vmem:[#allocation6 + $0x3f8] sm:$0xff]
    %v3254 = vld [vmem:[#allocation6 + $0x400] sm:$0xff]
    %v3255 = vld [vmem:[#allocation6 + $0x408] sm:$0xff]
    %v3256 = vld [vmem:[#allocation6 + $0x410] sm:$0xff]
    %v3257 = vld [vmem:[#allocation6 + $0x418] sm:$0xff]
    %v3258 = vld [vmem:[#allocation6 + $0x420] sm:$0xff]
    %v3259 = vld [vmem:[#allocation6 + $0x428] sm:$0xff]
    %v3260 = vld [vmem:[#allocation6 + $0x430] sm:$0xff]
    %v3261 = vld [vmem:[#allocation6 + $0x438] sm:$0xff]
    %v3262 = vld [vmem:[#allocation6 + $0x440] sm:$0xff]
    %v3263 = vld [vmem:[#allocation6 + $0x448] sm:$0xff]
    %v3264 = vld [vmem:[#allocation6 + $0x450] sm:$0xff]
    %v3265 = vld [vmem:[#allocation6 + $0x458] sm:$0xff]
    %v3266 = vld [vmem:[#allocation6 + $0x460] sm:$0xff]
    %v3267 = vld [vmem:[#allocation6 + $0x468] sm:$0xff]
    %v3268 = vld [vmem:[#allocation6 + $0x470] sm:$0xff]
    %v3269 = vld [vmem:[#allocation6 + $0x478] sm:$0xff]
    %v3270 = vld [vmem:[#allocation6 + $0x480] sm:$0xff]
    %v3271 = vld [vmem:[#allocation6 + $0x488] sm:$0xff]
    %v3272 = vld [vmem:[#allocation6 + $0x490] sm:$0xff]
    %v3273 = vld [vmem:[#allocation6 + $0x498] sm:$0xff]
    %v3274 = vld [vmem:[#allocation6 + $0x4a0] sm:$0xff]
    %v3275 = vld [vmem:[#allocation6 + $0x4a8] sm:$0xff]
    %v3276 = vld [vmem:[#allocation6 + $0x4b0] sm:$0xff]
    %v3277 = vld [vmem:[#allocation6 + $0x4b8] sm:$0xff]
    %v3278 = vld [vmem:[#allocation6 + $0x4c0] sm:$0xff]
    %v3279 = vld [vmem:[#allocation6 + $0x4c8] sm:$0xff]
    %v3280 = vld [vmem:[#allocation6 + $0x4d0] sm:$0xff]
    %v3281 = vld [vmem:[#allocation6 + $0x4d8] sm:$0xff]
    %v3282 = vld [vmem:[#allocation6 + $0x4e0] sm:$0xff]
    %v3283 = vld [vmem:[#allocation6 + $0x4e8] sm:$0xff]
    %v3284 = vld [vmem:[#allocation6 + $0x4f0] sm:$0xff]
    %v3285 = vld [vmem:[#allocation6 + $0x4f8] sm:$0xff]
    %v3286 = vld [vmem:[#allocation9 + $0x2] ss:$0 sm:$0xff]
    %3287 = vmatpush.msra.mxu0 %v3141
    %3288 = vmatpush.msra.mxu0 %v3140
    %3289 = vmatpush.msra.mxu0 %v3139
    %3290 = vmatpush.msra.mxu0 %v3138
    %3291 = vmatpush.msra.mxu0 %v3137
    %3292 = vmatpush.msra.mxu0 %v3136
    %3293 = vmatpush.msra.mxu0 %v3135
    %3294 = vmatpush.msra.mxu0 %v3134
    %3295 = vmatpush.msra.mxu0 %v3133
    %3296 = vmatpush.msra.mxu0 %v3132
    %3297 = vmatpush.msra.mxu0 %v3131
    %3298 = vmatpush.msra.mxu0 %v3130
    %3299 = vmatpush.msra.mxu0 %v3129
    %3300 = vmatpush.msra.mxu0 %v3128
    %3301 = vmatpush.msra.mxu0 %v3127
    %3302 = vmatpush.msra.mxu0 %v3126
    %3303 = vmatmul.f32.gmra.mxu0 %v2916
    %v3304 = vpop.f32.mrf.mxu0
    %v3305 = vadd.f32 %v3286, %v3304
    %3306 = vdwg.mxu0
    %3307 = vmatpush.msra.mxu0 %v3157
    %3308 = vmatpush.msra.mxu0 %v3156
    %3309 = vmatpush.msra.mxu0 %v3155
    %3310 = vmatpush.msra.mxu0 %v3154
    %3311 = vmatpush.msra.mxu0 %v3153
    %3312 = vmatpush.msra.mxu0 %v3152
    %3313 = vmatpush.msra.mxu0 %v3151
    %3314 = vmatpush.msra.mxu0 %v3150
    %3315 = vmatpush.msra.mxu0 %v3149
    %3316 = vmatpush.msra.mxu0 %v3148
    %3317 = vmatpush.msra.mxu0 %v3147
    %3318 = vmatpush.msra.mxu0 %v3146
    %3319 = vmatpush.msra.mxu0 %v3145
    %3320 = vmatpush.msra.mxu0 %v3144
    %3321 = vmatpush.msra.mxu0 %v3143
    %3322 = vmatpush.msra.mxu0 %v3142
    %3323 = vmatmul.f32.gmra.mxu0 %v2936
    %v3324 = vpop.f32.mrf.mxu0
    %v3325 = vadd.f32 %v3305, %v3324
    %3326 = vdwg.mxu0
    %3327 = vmatpush.msra.mxu0 %v3173
    %3328 = vmatpush.msra.mxu0 %v3172
    %3329 = vmatpush.msra.mxu0 %v3171
    %3330 = vmatpush.msra.mxu0 %v3170
    %3331 = vmatpush.msra.mxu0 %v3169
    %3332 = vmatpush.msra.mxu0 %v3168
    %3333 = vmatpush.msra.mxu0 %v3167
    %3334 = vmatpush.msra.mxu0 %v3166
    %3335 = vmatpush.msra.mxu0 %v3165
    %3336 = vmatpush.msra.mxu0 %v3164
    %3337 = vmatpush.msra.mxu0 %v3163
    %3338 = vmatpush.msra.mxu0 %v3162
    %3339 = vmatpush.msra.mxu0 %v3161
    %3340 = vmatpush.msra.mxu0 %v3160
    %3341 = vmatpush.msra.mxu0 %v3159
    %3342 = vmatpush.msra.mxu0 %v3158
    %3343 = vmatmul.f32.gmra.mxu0 %v2963
    %v3344 = vpop.f32.mrf.mxu0
    %v3345 = vadd.f32 %v3325, %v3344
    %3346 = vdwg.mxu0
    %3347 = vmatpush.msra.mxu0 %v3189
    %3348 = vmatpush.msra.mxu0 %v3188
    %3349 = vmatpush.msra.mxu0 %v3187
    %3350 = vmatpush.msra.mxu0 %v3186
    %3351 = vmatpush.msra.mxu0 %v3185
    %3352 = vmatpush.msra.mxu0 %v3184
    %3353 = vmatpush.msra.mxu0 %v3183
    %3354 = vmatpush.msra.mxu0 %v3182
    %3355 = vmatpush.msra.mxu0 %v3181
    %3356 = vmatpush.msra.mxu0 %v3180
    %3357 = vmatpush.msra.mxu0 %v3179
    %3358 = vmatpush.msra.mxu0 %v3178
    %3359 = vmatpush.msra.mxu0 %v3177
    %3360 = vmatpush.msra.mxu0 %v3176
    %3361 = vmatpush.msra.mxu0 %v3175
    %3362 = vmatpush.msra.mxu0 %v3174
    %3363 = vmatmul.f32.gmra.mxu0 %v2983
    %v3364 = vpop.f32.mrf.mxu0
    %v3365 = vadd.f32 %v3345, %v3364
    %3366 = vdwg.mxu0
    %3367 = vmatpush.msra.mxu0 %v3205
    %3368 = vmatpush.msra.mxu0 %v3204
    %3369 = vmatpush.msra.mxu0 %v3203
    %3370 = vmatpush.msra.mxu0 %v3202
    %3371 = vmatpush.msra.mxu0 %v3201
    %3372 = vmatpush.msra.mxu0 %v3200
    %3373 = vmatpush.msra.mxu0 %v3199
    %3374 = vmatpush.msra.mxu0 %v3198
    %3375 = vmatpush.msra.mxu0 %v3197
    %3376 = vmatpush.msra.mxu0 %v3196
    %3377 = vmatpush.msra.mxu0 %v3195
    %3378 = vmatpush.msra.mxu0 %v3194
    %3379 = vmatpush.msra.mxu0 %v3193
    %3380 = vmatpush.msra.mxu0 %v3192
    %3381 = vmatpush.msra.mxu0 %v3191
    %3382 = vmatpush.msra.mxu0 %v3190
    %3383 = vmatmul.f32.gmra.mxu0 %v3010
    %v3384 = vpop.f32.mrf.mxu0
    %v3385 = vadd.f32 %v3365, %v3384
    %3386 = vdwg.mxu0
    %3387 = vmatpush.msra.mxu0 %v3221
    %3388 = vmatpush.msra.mxu0 %v3220
    %3389 = vmatpush.msra.mxu0 %v3219
    %3390 = vmatpush.msra.mxu0 %v3218
    %3391 = vmatpush.msra.mxu0 %v3217
    %3392 = vmatpush.msra.mxu0 %v3216
    %3393 = vmatpush.msra.mxu0 %v3215
    %3394 = vmatpush.msra.mxu0 %v3214
    %3395 = vmatpush.msra.mxu0 %v3213
    %3396 = vmatpush.msra.mxu0 %v3212
    %3397 = vmatpush.msra.mxu0 %v3211
    %3398 = vmatpush.msra.mxu0 %v3210
    %3399 = vmatpush.msra.mxu0 %v3209
    %3400 = vmatpush.msra.mxu0 %v3208
    %3401 = vmatpush.msra.mxu0 %v3207
    %3402 = vmatpush.msra.mxu0 %v3206
    %3403 = vmatmul.f32.gmra.mxu0 %v3030
    %v3404 = vpop.f32.mrf.mxu0
    %v3405 = vadd.f32 %v3385, %v3404
    %3406 = vdwg.mxu0
    %3407 = vmatpush.msra.mxu0 %v3237
    %3408 = vmatpush.msra.mxu0 %v3236
    %3409 = vmatpush.msra.mxu0 %v3235
    %3410 = vmatpush.msra.mxu0 %v3234
    %3411 = vmatpush.msra.mxu0 %v3233
    %3412 = vmatpush.msra.mxu0 %v3232
    %3413 = vmatpush.msra.mxu0 %v3231
    %3414 = vmatpush.msra.mxu0 %v3230
    %3415 = vmatpush.msra.mxu0 %v3229
    %3416 = vmatpush.msra.mxu0 %v3228
    %3417 = vmatpush.msra.mxu0 %v3227
    %3418 = vmatpush.msra.mxu0 %v3226
    %3419 = vmatpush.msra.mxu0 %v3225
    %3420 = vmatpush.msra.mxu0 %v3224
    %3421 = vmatpush.msra.mxu0 %v3223
    %3422 = vmatpush.msra.mxu0 %v3222
    %3423 = vmatmul.f32.gmra.mxu0 %v3057
    %v3424 = vpop.f32.mrf.mxu0
    %v3425 = vadd.f32 %v3405, %v3424
    %3426 = vdwg.mxu0
    %3427 = vmatpush.msra.mxu0 %v3253
    %3428 = vmatpush.msra.mxu0 %v3252
    %3429 = vmatpush.msra.mxu0 %v3251
    %3430 = vmatpush.msra.mxu0 %v3250
    %3431 = vmatpush.msra.mxu0 %v3249
    %3432 = vmatpush.msra.mxu0 %v3248
    %3433 = vmatpush.msra.mxu0 %v3247
    %3434 = vmatpush.msra.mxu0 %v3246
    %3435 = vmatpush.msra.mxu0 %v3245
    %3436 = vmatpush.msra.mxu0 %v3244
    %3437 = vmatpush.msra.mxu0 %v3243
    %3438 = vmatpush.msra.mxu0 %v3242
    %3439 = vmatpush.msra.mxu0 %v3241
    %3440 = vmatpush.msra.mxu0 %v3240
    %3441 = vmatpush.msra.mxu0 %v3239
    %3442 = vmatpush.msra.mxu0 %v3238
    %3443 = vmatmul.f32.gmra.mxu0 %v3077
    %v3444 = vpop.f32.mrf.mxu0
    %v3445 = vadd.f32 %v3425, %v3444
    %3446 = vdwg.mxu0
    %3447 = vmatpush.msra.mxu0 %v3269
    %3448 = vmatpush.msra.mxu0 %v3268
    %3449 = vmatpush.msra.mxu0 %v3267
    %3450 = vmatpush.msra.mxu0 %v3266
    %3451 = vmatpush.msra.mxu0 %v3265
    %3452 = vmatpush.msra.mxu0 %v3264
    %3453 = vmatpush.msra.mxu0 %v3263
    %3454 = vmatpush.msra.mxu0 %v3262
    %3455 = vmatpush.msra.mxu0 %v3261
    %3456 = vmatpush.msra.mxu0 %v3260
    %3457 = vmatpush.msra.mxu0 %v3259
    %3458 = vmatpush.msra.mxu0 %v3258
    %3459 = vmatpush.msra.mxu0 %v3257
    %3460 = vmatpush.msra.mxu0 %v3256
    %3461 = vmatpush.msra.mxu0 %v3255
    %3462 = vmatpush.msra.mxu0 %v3254
    %3463 = vmatmul.f32.gmra.mxu0 %v3104
    %v3464 = vpop.f32.mrf.mxu0
    %v3465 = vadd.f32 %v3445, %v3464
    %3466 = vdwg.mxu0
    %3467 = vmatpush.msra.mxu0 %v3285
    %3468 = vmatpush.msra.mxu0 %v3284
    %3469 = vmatpush.msra.mxu0 %v3283
    %3470 = vmatpush.msra.mxu0 %v3282
    %3471 = vmatpush.msra.mxu0 %v3281
    %3472 = vmatpush.msra.mxu0 %v3280
    %3473 = vmatpush.msra.mxu0 %v3279
    %3474 = vmatpush.msra.mxu0 %v3278
    %3475 = vmatpush.msra.mxu0 %v3277
    %3476 = vmatpush.msra.mxu0 %v3276
    %3477 = vmatpush.msra.mxu0 %v3275
    %3478 = vmatpush.msra.mxu0 %v3274
    %3479 = vmatpush.msra.mxu0 %v3273
    %3480 = vmatpush.msra.mxu0 %v3272
    %3481 = vmatpush.msra.mxu0 %v3271
    %3482 = vmatpush.msra.mxu0 %v3270
    %3483 = vmatmul.f32.gmra.mxu0 %v3124
    %v3484 = vpop.f32.mrf.mxu0
    %v3485 = vadd.f32 %v3465, %v3484
    %3486 = vdwg.mxu0
    %v3487 = vmax.f32 %v3485, 0.0
    %v3488 = vld [vmem:[#allocation8] sm:$0xff]
    %v3489 = vld [vmem:[#allocation8 + $0x8] sm:$0xff]
    %v3490 = vld [vmem:[#allocation8 + $0x10] sm:$0xff]
    %v3491 = vld [vmem:[#allocation8 + $0x18] sm:$0xff]
    %v3492 = vld [vmem:[#allocation8 + $0x20] sm:$0xff]
    %v3493 = vld [vmem:[#allocation8 + $0x28] sm:$0xff]
    %v3494 = vld [vmem:[#allocation8 + $0x30] sm:$0xff]
    %v3495 = vld [vmem:[#allocation8 + $0x38] sm:$0xff]
    %v3496 = vld [vmem:[#allocation8 + $0x40] sm:$0xff]
    %v3497 = vld [vmem:[#allocation8 + $0x48] sm:$0xff]
    %v3498 = vld [vmem:[#allocation8 + $0x50] sm:$0xff]
    %v3499 = vld [vmem:[#allocation8 + $0x58] sm:$0xff]
    %v3500 = vld [vmem:[#allocation8 + $0x60] sm:$0xff]
    %v3501 = vld [vmem:[#allocation8 + $0x68] sm:$0xff]
    %v3502 = vld [vmem:[#allocation8 + $0x70] sm:$0xff]
    %v3503 = vld [vmem:[#allocation8 + $0x78] sm:$0xff]
    %v3504 = vld [vmem:[#allocation9 + $0x3] ss:$0 sm:$0xff]
    %3505 = vmatpush.msra.mxu0 %v3503
    %3506 = vmatpush.msra.mxu0 %v3502
    %3507 = vmatpush.msra.mxu0 %v3501
    %3508 = vmatpush.msra.mxu0 %v3500
    %3509 = vmatpush.msra.mxu0 %v3499
    %3510 = vmatpush.msra.mxu0 %v3498
    %3511 = vmatpush.msra.mxu0 %v3497
    %3512 = vmatpush.msra.mxu0 %v3496
    %3513 = vmatpush.msra.mxu0 %v3495
    %3514 = vmatpush.msra.mxu0 %v3494
    %3515 = vmatpush.msra.mxu0 %v3493
    %3516 = vmatpush.msra.mxu0 %v3492
    %3517 = vmatpush.msra.mxu0 %v3491
    %3518 = vmatpush.msra.mxu0 %v3490
    %3519 = vmatpush.msra.mxu0 %v3489
    %3520 = vmatpush.msra.mxu0 %v3488
    %3521 = vmatmul.f32.gmra.mxu0 %v3487
    %v3522 = vpop.f32.mrf.mxu0
    %v3523 = vadd.f32 %v3504, %v3522
    %3524 = vdwg.mxu0
    %v3525 = vmax.f32 %v3523, 0.0
    %s3526 = scalar_lea.vmem [#allocation8], 128
    %v3527 = vld [vmem:[%s3526] sm:$0xff]
    %v3528 = vld [vmem:[%s3526 + $0x8] sm:$0xff]
    %v3529 = vld [vmem:[%s3526 + $0x10] sm:$0xff]
    %v3530 = vld [vmem:[%s3526 + $0x18] sm:$0xff]
    %v3531 = vld [vmem:[%s3526 + $0x20] sm:$0xff]
    %v3532 = vld [vmem:[%s3526 + $0x28] sm:$0xff]
    %v3533 = vld [vmem:[%s3526 + $0x30] sm:$0xff]
    %v3534 = vld [vmem:[%s3526 + $0x38] sm:$0xff]
    %v3535 = vld [vmem:[%s3526 + $0x40] sm:$0xff]
    %v3536 = vld [vmem:[%s3526 + $0x48] sm:$0xff]
    %v3537 = vld [vmem:[%s3526 + $0x50] sm:$0xff]
    %v3538 = vld [vmem:[%s3526 + $0x58] sm:$0xff]
    %v3539 = vld [vmem:[%s3526 + $0x60] sm:$0xff]
    %v3540 = vld [vmem:[%s3526 + $0x68] sm:$0xff]
    %v3541 = vld [vmem:[%s3526 + $0x70] sm:$0xff]
    %v3542 = vld [vmem:[%s3526 + $0x78] sm:$0xff]
    %v3543 = vld [vmem:[#allocation9 + $0x4] ss:$0 sm:$0xff]
    %3544 = vmatpush.msra.mxu0 %v3542
    %3545 = vmatpush.msra.mxu0 %v3541
    %3546 = vmatpush.msra.mxu0 %v3540
    %3547 = vmatpush.msra.mxu0 %v3539
    %3548 = vmatpush.msra.mxu0 %v3538
    %3549 = vmatpush.msra.mxu0 %v3537
    %3550 = vmatpush.msra.mxu0 %v3536
    %3551 = vmatpush.msra.mxu0 %v3535
    %3552 = vmatpush.msra.mxu0 %v3534
    %3553 = vmatpush.msra.mxu0 %v3533
    %3554 = vmatpush.msra.mxu0 %v3532
    %3555 = vmatpush.msra.mxu0 %v3531
    %3556 = vmatpush.msra.mxu0 %v3530
    %3557 = vmatpush.msra.mxu0 %v3529
    %3558 = vmatpush.msra.mxu0 %v3528
    %3559 = vmatpush.msra.mxu0 %v3527
    %3560 = vmatmul.f32.gmra.mxu0 %v3525
    %v3561 = vpop.f32.mrf.mxu0
    %v3562 = vadd.f32 %v3543, %v3561
    %3563 = vdwg.mxu0
    %3564 = vst [vmem:[%s6] sm:$0xff] %v3562
    // Predicated region
    $region42: #{net_forward.1} parent=1 // pred_check
      _
    $region43: #{net_forward.1} parent=1 // pred_check_branch
      %3566 = sbr.rel (0) target = $region45
    $region44: #{net_forward.1} parent=1 // pred_region
      _
    $region45: #{net_forward.1} parent=1 // pred_fallthru
      _
    // Predicated region
    $region46: #{net_forward.1} parent=1 // pred_check
      _
    $region47: #{net_forward.1} parent=1 // pred_check_branch
      %3568 = sbr.rel (0) target = $region49
    $region48: #{net_forward.1} parent=1 // pred_region
      _
    $region49: #{net_forward.1} parent=1 // pred_fallthru
      _
    %3569 = vsyncpa [#allocation5], 1
    %3570 = vsyncpa [#allocation7], 1
    %3571 = vsyncpa [#allocation10], 1

</llo_original>
